<compile_context>
chip_gen: v7x
topology: tpu7x:2x2x1
jax: 0.10.0
libtpu: 0.0.40
codegen_flags: <defaults>
</compile_context>

<pallas_src>
import functools
import math

import jax
import jax.numpy as jnp
from jax.experimental import pallas as pl
from jax.experimental.pallas import tpu as pltpu

LEAKY_SLOPE = 0.01   # nn.LeakyReLU() default (the reference module passes no slope)
EPS = 1e-5           # BatchNorm2d default eps


def _round_up(x, m):
    return (x + m - 1) // m * m


def _pick_tm(m):
    """M tile (multiple of 8, <=512) preferring exact divisors of M (no row pad)."""
    if m % 8 == 0 and m <= 512:
        return m, m
    for t in (512, 256, 128, 64, 32):
        if m % t == 0:
            return t, m
    t = 8 if m <= 64 else (128 if m <= 1024 else 512)
    return t, _round_up(m, t)


def _pick_tk(k):
    for t in (1024, 768, 640, 512, 384, 256, 128):
        if k % t == 0:
            return t
    return 128


def _pick_rows(r, cap=4096):
    """Row tile for the BN reduction: big blocks to amortize per-step overhead."""
    if r <= cap:
        return r, r                      # block dim == full dim is always legal
    for t in (4096, 2048, 1024, 512, 256, 128, 64, 32, 16, 8):
        if t <= cap and r % t == 0:
            return t, r
    return 2048, _round_up(r, 2048)


# ----------------------------- Pallas kernels --------------------------------

def _matmul_bias_leaky_kernel(a_ref, b_ref, bias_ref, o_ref, acc_ref):
    """Tiled (patches @ weight) with f32 accumulation + bias + LeakyReLU."""
    @pl.when(pl.program_id(2) == 0)
    def _init():
        acc_ref[...] = jnp.zeros_like(acc_ref)

    acc_ref[...] += jnp.dot(a_ref[...], b_ref[...],
                            preferred_element_type=jnp.float32)

    @pl.when(pl.program_id(2) == pl.num_programs(2) - 1)
    def _epilogue():
        y = acc_ref[...] + bias_ref[...]
        o_ref[...] = jnp.where(y > 0, y, LEAKY_SLOPE * y).astype(o_ref.dtype)


def _bn_stats_kernel(x_ref, sum_ref, ssq_ref):
    """Per-channel sum / sum-of-squares, accumulated over the row grid axis."""
    @pl.when(pl.program_id(1) == 0)
    def _init():
        sum_ref[...] = jnp.zeros_like(sum_ref)
        ssq_ref[...] = jnp.zeros_like(ssq_ref)

    x = x_ref[...].astype(jnp.float32)
    sum_ref[...] += jnp.sum(x, axis=0, keepdims=True)
    ssq_ref[...] += jnp.sum(x * x, axis=0, keepdims=True)


# --------------------------- pallas_call wrappers -----------------------------

def conv_matmul_leaky(patches, w2d, bias, out_dtype=jnp.bfloat16):
    """(M, K) @ (K, cout) + bias, LeakyReLU fused.  K must be a multiple of 128.

    Returns ((M, npad) out_dtype, npad) with npad = round_up(cout, 128); the
    padded output channels are exactly zero (zero weight columns + zero bias).
    """
    m, k = patches.shape
    cout = w2d.shape[1]
    assert k % 128 == 0 and w2d.shape[0] == k, (k, w2d.shape)

    npad = _round_up(cout, 128)
    tn = 256 if npad % 256 == 0 else 128
    tk = _pick_tk(k)
    tm, mpad = _pick_tm(m)

    # v7x megacore: keep >=2 tiles on a parallel axis whenever possible.
    if mpad // tm == 1 and npad // tn == 1:
        if tn > 128:
            tn = 128
        elif tm % 16 == 0:
            tm //= 2

    a = patches.astype(jnp.bfloat16)
    if mpad != m:
        a = jnp.pad(a, ((0, mpad - m), (0, 0)))
    b = jnp.pad(w2d.astype(jnp.bfloat16), ((0, 0), (0, npad - cout)))
    bias2 = jnp.pad(bias.astype(jnp.float32), (0, npad - cout)).reshape(1, npad)

    cost = pl.CostEstimate(
        flops=2 * mpad * npad * k,
        transcendentals=0,
        bytes_accessed=a.size * 2 + b.size * 2 + bias2.size * 4
                       + mpad * npad * jnp.dtype(out_dtype).itemsize,
    )

    out = pl.pallas_call(
        _matmul_bias_leaky_kernel,
        out_shape=jax.ShapeDtypeStruct((mpad, npad), out_dtype),
        grid_spec=pltpu.PrefetchScalarGridSpec(
            num_scalar_prefetch=0,
            grid=(mpad // tm, npad // tn, k // tk),
            in_specs=[
                pl.BlockSpec((tm, tk), lambda i, j, kk: (i, kk)),
                pl.BlockSpec((tk, tn), lambda i, j, kk: (kk, j)),
                pl.BlockSpec((1, tn), lambda i, j, kk: (0, j)),
            ],
            out_specs=pl.BlockSpec((tm, tn), lambda i, j, kk: (i, j)),
            scratch_shapes=[pltpu.VMEM((tm, tn), jnp.float32)],
        ),
        compiler_params=pltpu.CompilerParams(
            dimension_semantics=("parallel", "parallel", "arbitrary")),
        cost_estimate=cost,
    )(a, b, bias2)
    if mpad != m:
        out = out[:m]
    return out, npad


def batchnorm_affine(y, cout, gamma, beta):
    """Training-mode BatchNorm2d statistics of y (N,OH,OW,npad bf16).

    Returns per-channel (scale, shift) of length `cout`; the affine itself is
    folded into the consumer (the next layer's im2col), so no standalone
    read-modify-write pass over the activation is launched.
    """
    n, h, w, cpad = y.shape
    r = n * h * w
    yr = y.reshape(r, cpad)

    tr, rpad = _pick_rows(r)
    if rpad != r:
        yr = jnp.pad(yr, ((0, rpad - r), (0, 0)))   # zero rows add 0 to both sums
    nc = cpad // 128

    s, ss = pl.pallas_call(
        _bn_stats_kernel,
        out_shape=(jax.ShapeDtypeStruct((1, cpad), jnp.float32),
                   jax.ShapeDtypeStruct((1, cpad), jnp.float32)),
        grid_spec=pltpu.PrefetchScalarGridSpec(
            num_scalar_prefetch=0,
            grid=(nc, rpad // tr),          # channel blocks parallel, rows (reduction) last
            in_specs=[pl.BlockSpec((tr, 128), lambda cb, rb: (rb, cb))],
            out_specs=[pl.BlockSpec((1, 128), lambda cb, rb: (0, cb)),
                       pl.BlockSpec((1, 128), lambda cb, rb: (0, cb))],
        ),
        compiler_params=pltpu.CompilerParams(
            dimension_semantics=("parallel", "arbitrary")),
    )(yr)

    mean = (s / r)[0, :cout]
    # TODO(synk): E[x^2]-E[x]^2 cancels for large-magnitude activations; switch to a
    # two-pass / Welford reduction if these activations ever leave the ~unit range.
    var = jnp.maximum((ss / r)[0, :cout] - mean * mean, 0.0)   # biased variance (torch)
    scale = gamma.astype(jnp.float32) * jax.lax.rsqrt(var + EPS)
    shift = beta.astype(jnp.float32) - mean * scale
    return scale, shift


def batchnorm_tiny(y, gamma, beta):
    """BatchNorm2d over the tiny final 1-channel map — not worth a 128-lane Pallas pass."""
    mu = jnp.mean(y, axis=(0, 1, 2), keepdims=True)
    var = jnp.mean((y - mu) ** 2, axis=(0, 1, 2), keepdims=True)
    return (y - mu) * jax.lax.rsqrt(var + EPS) * gamma + beta


# --------------------------- layer building blocks ----------------------------

def im2col_affine(x, kh, kw, stride, pad, dil, cin, scale=None, shift=None):
    """NHWC -> bf16 (N*OH*OW, KH*KW*Cpad) patch matrix.

    * Only the first `cin` channels of x are read (lane padding from the
      producing conv is NOT carried into the contraction).
    * If scale/shift are given (the previous layer's folded BatchNorm affine),
      they are applied per channel before the gather, so affine + bf16 cast +
      spatial zero-pad + tap gather is a single XLA fusion and the expanded
      patch matrix is written to HBM exactly once.
    * Channels are zero-padded so that K = KH*KW*Cpad is a multiple of 128
      (lane-aligned K without a jnp.pad of the materialized matrix).
    """
    n, h, w, _ = x.shape
    xr = x[..., :cin].astype(jnp.float32)
    if scale is not None:
        xr = xr * scale.reshape(1, 1, 1, cin) + shift.reshape(1, 1, 1, cin)
    xr = xr.astype(jnp.bfloat16)

    g = math.gcd(kh * kw, 128)
    cpad = _round_up(cin, 128 // g)
    if cpad != cin:
        xr = jnp.pad(xr, ((0, 0), (0, 0), (0, 0), (0, cpad - cin)))

    xp = jnp.pad(xr, ((0, 0), (pad, pad), (pad, pad), (0, 0)))
    oh = (h + 2 * pad - dil * (kh - 1) - 1) // stride + 1
    ow = (w + 2 * pad - dil * (kw - 1) - 1) // stride + 1
    cols = []
    for i in range(kh):
        for j in range(kw):
            hs, ws = i * dil, j * dil
            cols.append(xp[:, hs:hs + stride * (oh - 1) + 1:stride,
                           ws:ws + stride * (ow - 1) + 1:stride, :])
    p = jnp.stack(cols, axis=3)                    # (N, OH, OW, KH*KW, Cpad)
    return p.reshape(n * oh * ow, kh * kw * cpad), (n, oh, ow), cpad


def conv2d_leaky(x, w, b, *, stride, pad, dil, in_scale=None, in_shift=None):
    """[folded input BN affine] -> Conv2d -> bias -> LeakyReLU.

    Returns ((n, oh, ow, npad) bf16, real cout); padded output channels are zero.
    """
    kh, kw, cin, cout = w.shape
    patches, (n, oh, ow), cpad = im2col_affine(
        x, kh, kw, stride, pad, dil, cin, in_scale, in_shift)
    if cpad != cin:
        w = jnp.pad(w, ((0, 0), (0, 0), (0, cpad - cin), (0, 0)))
    y, npad = conv_matmul_leaky(patches, w.reshape(kh * kw * cpad, cout), b)
    return y.reshape(n, oh, ow, npad), cout


# ------------------------------- parameters -----------------------------------

def init_conv(key, cin, cout, k=4):
    # PyTorch Conv2d default init: U(-1/sqrt(fan_in), 1/sqrt(fan_in))
    wk, bk = jax.random.split(key)
    bound = 1.0 / float((cin * k * k) ** 0.5)
    w = jax.random.uniform(wk, (k, k, cin, cout), jnp.float32, -bound, bound)
    b = jax.random.uniform(bk, (cout,), jnp.float32, -bound, bound)
    return w, b


def init_discriminator_params(key, channels=3, df=8):
    ks = jax.random.split(key, 5)
    p = {
        "c1": init_conv(ks[0], channels, df),
        "c2": init_conv(ks[1], df, df * 2),
        "c3": init_conv(ks[2], df * 2, df * 4),
        "c4": init_conv(ks[3], df * 4, df * 8),
        "c5": init_conv(ks[4], df * 8, 1),
    }
    # BatchNorm2d affine params (PyTorch default: weight=1, bias=0)
    for name, c in (("bn2", df * 2), ("bn3", df * 4), ("bn4", df * 8), ("bn5", 1)):
        p[name] = (jnp.ones((c,), jnp.float32), jnp.zeros((c,), jnp.float32))
    return p


# ------------------------------- forward pass ----------------------------------

def discriminator_forward(params, img_nchw):
    x = jnp.transpose(img_nchw, (0, 2, 3, 1)).astype(jnp.float32)   # NCHW->NHWC

    # Downsamp(channels, df, normalize=False): Conv -> LeakyReLU
    y, c = conv2d_leaky(x, *params["c1"], stride=2, pad=1, dil=1)

    # Downsamp(df,2df) / (2df,4df) / (4df,8df): Conv -> LeakyReLU -> BatchNorm2d.
    # BatchNorm scale/shift of layer i is folded into layer i+1's im2col, so the
    # normalized activation never makes its own HBM round trip.
    scale = shift = None
    for i in (2, 3, 4):
        y, c = conv2d_leaky(y, *params[f"c{i}"], stride=2, pad=1, dil=1,
                            in_scale=scale, in_shift=shift)
        scale, shift = batchnorm_affine(y, c, *params[f"bn{i}"])

    # Downsamp(8df, 1, kernel=4, stride=1, padding=3, dilation=2)
    y, c = conv2d_leaky(y, *params["c5"], stride=1, pad=3, dil=2,
                        in_scale=scale, in_shift=shift)
    y = y[..., :c].astype(jnp.float32)               # strip lane padding (c == 1)
    y = batchnorm_tiny(y, *params["bn5"])            # BN over 1 real channel
    return jnp.transpose(y, (0, 3, 1, 2))            # NHWC -> NCHW


# -------------------------- pure-JAX reference (check) -------------------------

def reference_forward(params, img_nchw):
    def conv(x, w, b, stride, pad, dil):
        y = jax.lax.conv_general_dilated(
            x.astype(jnp.bfloat16), w.astype(jnp.bfloat16),
            window_strides=(stride, stride),
            padding=((pad, pad), (pad, pad)),
            rhs_dilation=(dil, dil),
            dimension_numbers=("NHWC", "HWIO", "NHWC"),
            preferred_element_type=jnp.float32)
        return y + b

    def leaky(v):
        return jnp.where(v > 0, v, LEAKY_SLOPE * v)

    def bn(v, g, be):
        mu = jnp.mean(v, axis=(0, 1, 2), keepdims=True)
        var = jnp.mean((v - mu) ** 2, axis=(0, 1, 2), keepdims=True)
        return (v - mu) * jax.lax.rsqrt(var + EPS) * g + be

    x = jnp.transpose(img_nchw, (0, 2, 3, 1)).astype(jnp.float32)
    y = leaky(conv(x, *params["c1"], 2, 1, 1))
    for i in (2, 3, 4):
        y = bn(leaky(conv(y, *params[f"c{i}"], 2, 1, 1)), *params[f"bn{i}"])
    y = bn(leaky(conv(y, *params["c5"], 1, 3, 2)), *params["bn5"])
    return jnp.transpose(y, (0, 3, 1, 2))


# ----------------------------------- main --------------------------------------

if __name__ == "__main__":
    key = jax.random.PRNGKey(0)
    pkey, xkey = jax.random.split(key)

    channels, df = 3, 8            # small synthetic config (torch default df=64)
    params = init_discriminator_params(pkey, channels=channels, df=df)

    # NCHW input (PyTorch convention); 64x64 -> 4x4 patch map after 4 downsamples
    img = jax.random.normal(xkey, (2, channels, 64, 64), jnp.float32)

    fwd = jax.jit(functools.partial(discriminator_forward, params))
    out = fwd(img)
    jax.block_until_ready(out)

    ref = jax.jit(functools.partial(reference_forward, params))(img)
    jax.block_until_ready(ref)

    assert out.shape == (2, 1, 4, 4), out.shape
    assert bool(jnp.all(jnp.isfinite(out)))
    # bf16 inter-layer activations add a little rounding vs the f32 reference chain.
    max_err = float(jnp.max(jnp.abs(out - ref)))
    assert max_err < 1e-1, f"mismatch vs reference: {max_err}"
    print("KERNEL_OK")
</pallas_src>

<mosaic_0001>
module attributes {stable_mosaic.version = 11 : i64} {
  func.func @_matmul_bias_leaky_kernel(%arg0: i32, %arg1: i32, %arg2: i32, %arg3: memref<512x128xbf16, #tpu.memory_space<vmem>>, %arg4: memref<128x128xbf16, #tpu.memory_space<vmem>>, %arg5: memref<1x128xf32, #tpu.memory_space<vmem>>, %arg6: memref<512x128xbf16, #tpu.memory_space<vmem>>, %arg7: memref<512x128xf32, #tpu.memory_space<vmem>>) attributes {dimension_semantics = [#tpu.dimension_semantics<parallel>, #tpu.dimension_semantics<parallel>, #tpu.dimension_semantics<arbitrary>], iteration_bounds = array<i64: 4, 1, 1>, scalar_prefetch = 0 : i64, scratch_operands = 1 : i64, tpu.core_type = #tpu.core_type<tc>, window_params = [{transform_indices = @transform_0, window_bounds = array<i64: 512, 128>}, {transform_indices = @transform_1, window_bounds = array<i64: 128, 128>}, {transform_indices = @transform_2, window_bounds = array<i64: 1, 128>}, {transform_indices = @transform_3, window_bounds = array<i64: 512, 128>}]} {
    %c0_i32 = arith.constant 0 : i32
    %0 = arith.cmpi eq, %arg2, %c0_i32 : i32
    %1 = arith.extui %0 : i1 to i32
    %c0_i32_0 = arith.constant 0 : i32
    %2 = arith.cmpi ne, %1, %c0_i32_0 : i32
    scf.if %2 {
      %cst_10 = arith.constant 0.000000e+00 : f32
      %12 = vector.broadcast %cst_10 : f32 to vector<512x128xf32>
      %c0_11 = arith.constant 0 : index
      %c0_12 = arith.constant 0 : index
      %13 = vector.load %arg7[%c0_11, %c0_12] : memref<512x128xf32, #tpu.memory_space<vmem>>, vector<512x128xf32>
      tpu.vector_store %arg7[%c0_11, %c0_12], %12 {strides = array<i32>} : memref<512x128xf32, #tpu.memory_space<vmem>>, vector<512x128xf32>,
    } else {
    }
    %c0 = arith.constant 0 : index
    %c0_1 = arith.constant 0 : index
    %3 = vector.load %arg7[%c0, %c0_1] : memref<512x128xf32, #tpu.memory_space<vmem>>, vector<512x128xf32>
    %c0_2 = arith.constant 0 : index
    %c0_3 = arith.constant 0 : index
    %4 = vector.load %arg3[%c0_2, %c0_3] : memref<512x128xbf16, #tpu.memory_space<vmem>>, vector<512x128xbf16>
    %c0_4 = arith.constant 0 : index
    %c0_5 = arith.constant 0 : index
    %5 = vector.load %arg4[%c0_4, %c0_5] : memref<128x128xbf16, #tpu.memory_space<vmem>>, vector<128x128xbf16>
    %cst = arith.constant dense<0.000000e+00> : vector<512x128xf32>
    %6 = tpu.matmul %4, %5, %cst {dimension_numbers = #tpu.dot_dimension_numbers<[1], [0], [0], [1], [0, 0, 1, 1], [], []>} : vector<512x128xbf16>, vector<128x128xbf16>, vector<512x128xf32> -> vector<512x128xf32>
    %7 = arith.addf %3, %6 : vector<512x128xf32>
    %c0_6 = arith.constant 0 : index
    %c0_7 = arith.constant 0 : index
    %8 = vector.load %arg7[%c0_6, %c0_7] : memref<512x128xf32, #tpu.memory_space<vmem>>, vector<512x128xf32>
    tpu.vector_store %arg7[%c0_6, %c0_7], %7 {strides = array<i32>} : memref<512x128xf32, #tpu.memory_space<vmem>>, vector<512x128xf32>,
    %c0_i32_8 = arith.constant 0 : i32
    %9 = arith.cmpi eq, %arg2, %c0_i32_8 : i32
    %10 = arith.extui %9 : i1 to i32
    %c0_i32_9 = arith.constant 0 : i32
    %11 = arith.cmpi ne, %10, %c0_i32_9 : i32
    scf.if %11 {
      %c0_10 = arith.constant 0 : index
      %c0_11 = arith.constant 0 : index
      %12 = vector.load %arg7[%c0_10, %c0_11] : memref<512x128xf32, #tpu.memory_space<vmem>>, vector<512x128xf32>
      %c0_12 = arith.constant 0 : index
      %c0_13 = arith.constant 0 : index
      %13 = vector.load %arg5[%c0_12, %c0_13] : memref<1x128xf32, #tpu.memory_space<vmem>>, vector<1x128xf32>
      %14 = vector.broadcast %13 : vector<1x128xf32> to vector<512x128xf32>
      %15 = arith.addf %12, %14 : vector<512x128xf32>
      %cst_14 = arith.constant 0.000000e+00 : f32
      %16 = vector.broadcast %cst_14 : f32 to vector<512x128xf32>
      %17 = arith.cmpf ogt, %15, %16 : vector<512x128xf32>
      %cst_15 = arith.constant 0.00999999977 : f32
      %18 = vector.broadcast %cst_15 : f32 to vector<512x128xf32>
      %19 = arith.mulf %18, %15 : vector<512x128xf32>
      %20 = arith.select %17, %15, %19 : vector<512x128xi1>, vector<512x128xf32>
      %21 = arith.truncf %20 : vector<512x128xf32> to vector<512x128xbf16>
      %c0_16 = arith.constant 0 : index
      %c0_17 = arith.constant 0 : index
      %22 = vector.load %arg6[%c0_16, %c0_17] : memref<512x128xbf16, #tpu.memory_space<vmem>>, vector<512x128xbf16>
      tpu.vector_store %arg6[%c0_16, %c0_17], %21 {strides = array<i32>} : memref<512x128xbf16, #tpu.memory_space<vmem>>, vector<512x128xbf16>,
    } else {
    }
    return
  }
  func.func @transform_0(%arg0: i32, %arg1: i32, %arg2: i32) -> (i32, i32) {
    %c0_i32 = arith.constant 0 : i32
    return %arg0, %arg2 : i32, i32
  }
  func.func @transform_1(%arg0: i32, %arg1: i32, %arg2: i32) -> (i32, i32) {
    %c0_i32 = arith.constant 0 : i32
    return %arg2, %arg1 : i32, i32
  }
  func.func @transform_2(%arg0: i32, %arg1: i32, %arg2: i32) -> (i32, i32) {
    %c0_i32 = arith.constant 0 : i32
    %c0_i32_0 = arith.constant 0 : i32
    return %c0_i32, %arg1 : i32, i32
  }
  func.func @transform_3(%arg0: i32, %arg1: i32, %arg2: i32) -> (i32, i32) {
    %c0_i32 = arith.constant 0 : i32
    return %arg0, %arg1 : i32, i32
  }
}

module attributes {stable_mosaic.version = 11 : i64} {
  func.func @_matmul_bias_leaky_kernel(%arg0: i32, %arg1: i32, %arg2: i32, %arg3: memref<256x128xbf16, #tpu.memory_space<vmem>>, %arg4: memref<128x128xbf16, #tpu.memory_space<vmem>>, %arg5: memref<1x128xf32, #tpu.memory_space<vmem>>, %arg6: memref<256x128xbf16, #tpu.memory_space<vmem>>, %arg7: memref<256x128xf32, #tpu.memory_space<vmem>>) attributes {dimension_semantics = [#tpu.dimension_semantics<parallel>, #tpu.dimension_semantics<parallel>, #tpu.dimension_semantics<arbitrary>], iteration_bounds = array<i64: 2, 1, 1>, scalar_prefetch = 0 : i64, scratch_operands = 1 : i64, tpu.core_type = #tpu.core_type<tc>, window_params = [{transform_indices = @transform_0, window_bounds = array<i64: 256, 128>}, {transform_indices = @transform_1, window_bounds = array<i64: 128, 128>}, {transform_indices = @transform_2, window_bounds = array<i64: 1, 128>}, {transform_indices = @transform_3, window_bounds = array<i64: 256, 128>}]} {
    %c0_i32 = arith.constant 0 : i32
    %0 = arith.cmpi eq, %arg2, %c0_i32 : i32
    %1 = arith.extui %0 : i1 to i32
    %c0_i32_0 = arith.constant 0 : i32
    %2 = arith.cmpi ne, %1, %c0_i32_0 : i32
    scf.if %2 {
      %cst_10 = arith.constant 0.000000e+00 : f32
      %12 = vector.broadcast %cst_10 : f32 to vector<256x128xf32>
      %c0_11 = arith.constant 0 : index
      %c0_12 = arith.constant 0 : index
      %13 = vector.load %arg7[%c0_11, %c0_12] : memref<256x128xf32, #tpu.memory_space<vmem>>, vector<256x128xf32>
      tpu.vector_store %arg7[%c0_11, %c0_12], %12 {strides = array<i32>} : memref<256x128xf32, #tpu.memory_space<vmem>>, vector<256x128xf32>,
    } else {
    }
    %c0 = arith.constant 0 : index
    %c0_1 = arith.constant 0 : index
    %3 = vector.load %arg7[%c0, %c0_1] : memref<256x128xf32, #tpu.memory_space<vmem>>, vector<256x128xf32>
    %c0_2 = arith.constant 0 : index
    %c0_3 = arith.constant 0 : index
    %4 = vector.load %arg3[%c0_2, %c0_3] : memref<256x128xbf16, #tpu.memory_space<vmem>>, vector<256x128xbf16>
    %c0_4 = arith.constant 0 : index
    %c0_5 = arith.constant 0 : index
    %5 = vector.load %arg4[%c0_4, %c0_5] : memref<128x128xbf16, #tpu.memory_space<vmem>>, vector<128x128xbf16>
    %cst = arith.constant dense<0.000000e+00> : vector<256x128xf32>
    %6 = tpu.matmul %4, %5, %cst {dimension_numbers = #tpu.dot_dimension_numbers<[1], [0], [0], [1], [0, 0, 1, 1], [], []>} : vector<256x128xbf16>, vector<128x128xbf16>, vector<256x128xf32> -> vector<256x128xf32>
    %7 = arith.addf %3, %6 : vector<256x128xf32>
    %c0_6 = arith.constant 0 : index
    %c0_7 = arith.constant 0 : index
    %8 = vector.load %arg7[%c0_6, %c0_7] : memref<256x128xf32, #tpu.memory_space<vmem>>, vector<256x128xf32>
    tpu.vector_store %arg7[%c0_6, %c0_7], %7 {strides = array<i32>} : memref<256x128xf32, #tpu.memory_space<vmem>>, vector<256x128xf32>,
    %c0_i32_8 = arith.constant 0 : i32
    %9 = arith.cmpi eq, %arg2, %c0_i32_8 : i32
    %10 = arith.extui %9 : i1 to i32
    %c0_i32_9 = arith.constant 0 : i32
    %11 = arith.cmpi ne, %10, %c0_i32_9 : i32
    scf.if %11 {
      %c0_10 = arith.constant 0 : index
      %c0_11 = arith.constant 0 : index
      %12 = vector.load %arg7[%c0_10, %c0_11] : memref<256x128xf32, #tpu.memory_space<vmem>>, vector<256x128xf32>
      %c0_12 = arith.constant 0 : index
      %c0_13 = arith.constant 0 : index
      %13 = vector.load %arg5[%c0_12, %c0_13] : memref<1x128xf32, #tpu.memory_space<vmem>>, vector<1x128xf32>
      %14 = vector.broadcast %13 : vector<1x128xf32> to vector<256x128xf32>
      %15 = arith.addf %12, %14 : vector<256x128xf32>
      %cst_14 = arith.constant 0.000000e+00 : f32
      %16 = vector.broadcast %cst_14 : f32 to vector<256x128xf32>
      %17 = arith.cmpf ogt, %15, %16 : vector<256x128xf32>
      %cst_15 = arith.constant 0.00999999977 : f32
      %18 = vector.broadcast %cst_15 : f32 to vector<256x128xf32>
      %19 = arith.mulf %18, %15 : vector<256x128xf32>
      %20 = arith.select %17, %15, %19 : vector<256x128xi1>, vector<256x128xf32>
      %21 = arith.truncf %20 : vector<256x128xf32> to vector<256x128xbf16>
      %c0_16 = arith.constant 0 : index
      %c0_17 = arith.constant 0 : index
      %22 = vector.load %arg6[%c0_16, %c0_17] : memref<256x128xbf16, #tpu.memory_space<vmem>>, vector<256x128xbf16>
      tpu.vector_store %arg6[%c0_16, %c0_17], %21 {strides = array<i32>} : memref<256x128xbf16, #tpu.memory_space<vmem>>, vector<256x128xbf16>,
    } else {
    }
    return
  }
  func.func @transform_0(%arg0: i32, %arg1: i32, %arg2: i32) -> (i32, i32) {
    %c0_i32 = arith.constant 0 : i32
    return %arg0, %arg2 : i32, i32
  }
  func.func @transform_1(%arg0: i32, %arg1: i32, %arg2: i32) -> (i32, i32) {
    %c0_i32 = arith.constant 0 : i32
    return %arg2, %arg1 : i32, i32
  }
  func.func @transform_2(%arg0: i32, %arg1: i32, %arg2: i32) -> (i32, i32) {
    %c0_i32 = arith.constant 0 : i32
    %c0_i32_0 = arith.constant 0 : i32
    return %c0_i32, %arg1 : i32, i32
  }
  func.func @transform_3(%arg0: i32, %arg1: i32, %arg2: i32) -> (i32, i32) {
    %c0_i32 = arith.constant 0 : i32
    return %arg0, %arg1 : i32, i32
  }
}

module attributes {stable_mosaic.version = 11 : i64} {
  func.func @_bn_stats_kernel(%arg0: i32, %arg1: i32, %arg2: memref<512x128xbf16, #tpu.memory_space<vmem>>, %arg3: memref<1x128xf32, #tpu.memory_space<vmem>>, %arg4: memref<1x128xf32, #tpu.memory_space<vmem>>) attributes {dimension_semantics = [#tpu.dimension_semantics<parallel>, #tpu.dimension_semantics<arbitrary>], iteration_bounds = array<i64: 1, 1>, scalar_prefetch = 0 : i64, scratch_operands = 0 : i64, tpu.core_type = #tpu.core_type<tc>, window_params = [{transform_indices = @transform_0, window_bounds = array<i64: 512, 128>}, {transform_indices = @transform_1, window_bounds = array<i64: 1, 128>}, {transform_indices = @transform_2, window_bounds = array<i64: 1, 128>}]} {
    %c0_i32 = arith.constant 0 : i32
    %0 = arith.cmpi eq, %arg1, %c0_i32 : i32
    %1 = arith.extui %0 : i1 to i32
    %c0_i32_0 = arith.constant 0 : i32
    %2 = arith.cmpi ne, %1, %c0_i32_0 : i32
    scf.if %2 {
      %cst_11 = arith.constant 0.000000e+00 : f32
      %16 = vector.broadcast %cst_11 : f32 to vector<1x128xf32>
      %c0_12 = arith.constant 0 : index
      %c0_13 = arith.constant 0 : index
      %17 = vector.load %arg3[%c0_12, %c0_13] : memref<1x128xf32, #tpu.memory_space<vmem>>, vector<1x128xf32>
      tpu.vector_store %arg3[%c0_12, %c0_13], %16 {strides = array<i32>} : memref<1x128xf32, #tpu.memory_space<vmem>>, vector<1x128xf32>,
      %cst_14 = arith.constant 0.000000e+00 : f32
      %18 = vector.broadcast %cst_14 : f32 to vector<1x128xf32>
      %c0_15 = arith.constant 0 : index
      %c0_16 = arith.constant 0 : index
      %19 = vector.load %arg4[%c0_15, %c0_16] : memref<1x128xf32, #tpu.memory_space<vmem>>, vector<1x128xf32>
      tpu.vector_store %arg4[%c0_15, %c0_16], %18 {strides = array<i32>} : memref<1x128xf32, #tpu.memory_space<vmem>>, vector<1x128xf32>,
    } else {
    }
    %c0 = arith.constant 0 : index
    %c0_1 = arith.constant 0 : index
    %3 = vector.load %arg2[%c0, %c0_1] : memref<512x128xbf16, #tpu.memory_space<vmem>>, vector<512x128xbf16>
    %4 = arith.extf %3 : vector<512x128xbf16> to vector<512x128xf32>
    %c0_2 = arith.constant 0 : index
    %c0_3 = arith.constant 0 : index
    %5 = vector.load %arg3[%c0_2, %c0_3] : memref<1x128xf32, #tpu.memory_space<vmem>>, vector<1x128xf32>
    %cst = arith.constant dense<0.000000e+00> : vector<128xf32>
    %6 = vector.multi_reduction <add>, %4, %cst [0] : vector<512x128xf32> to vector<128xf32>
    %7 = vector.shape_cast %6 : vector<128xf32> to vector<1x128xf32>
    %8 = arith.addf %5, %7 : vector<1x128xf32>
    %c0_4 = arith.constant 0 : index
    %c0_5 = arith.constant 0 : index
    %9 = vector.load %arg3[%c0_4, %c0_5] : memref<1x128xf32, #tpu.memory_space<vmem>>, vector<1x128xf32>
    tpu.vector_store %arg3[%c0_4, %c0_5], %8 {strides = array<i32>} : memref<1x128xf32, #tpu.memory_space<vmem>>, vector<1x128xf32>,
    %c0_6 = arith.constant 0 : index
    %c0_7 = arith.constant 0 : index
    %10 = vector.load %arg4[%c0_6, %c0_7] : memref<1x128xf32, #tpu.memory_space<vmem>>, vector<1x128xf32>
    %11 = arith.mulf %4, %4 : vector<512x128xf32>
    %cst_8 = arith.constant dense<0.000000e+00> : vector<128xf32>
    %12 = vector.multi_reduction <add>, %11, %cst_8 [0] : vector<512x128xf32> to vector<128xf32>
    %13 = vector.shape_cast %12 : vector<128xf32> to vector<1x128xf32>
    %14 = arith.addf %10, %13 : vector<1x128xf32>
    %c0_9 = arith.constant 0 : index
    %c0_10 = arith.constant 0 : index
    %15 = vector.load %arg4[%c0_9, %c0_10] : memref<1x128xf32, #tpu.memory_space<vmem>>, vector<1x128xf32>
    tpu.vector_store %arg4[%c0_9, %c0_10], %14 {strides = array<i32>} : memref<1x128xf32, #tpu.memory_space<vmem>>, vector<1x128xf32>,
    return
  }
  func.func @transform_0(%arg0: i32, %arg1: i32) -> (i32, i32) {
    %c0_i32 = arith.constant 0 : i32
    return %arg1, %arg0 : i32, i32
  }
  func.func @transform_1(%arg0: i32, %arg1: i32) -> (i32, i32) {
    %c0_i32 = arith.constant 0 : i32
    %c0_i32_0 = arith.constant 0 : i32
    return %c0_i32, %arg0 : i32, i32
  }
  func.func @transform_2(%arg0: i32, %arg1: i32) -> (i32, i32) {
    %c0_i32 = arith.constant 0 : i32
    %c0_i32_0 = arith.constant 0 : i32
    return %c0_i32, %arg0 : i32, i32
  }
}

module attributes {stable_mosaic.version = 11 : i64} {
  func.func @_matmul_bias_leaky_kernel(%arg0: i32, %arg1: i32, %arg2: i32, %arg3: memref<64x256xbf16, #tpu.memory_space<vmem>>, %arg4: memref<256x128xbf16, #tpu.memory_space<vmem>>, %arg5: memref<1x128xf32, #tpu.memory_space<vmem>>, %arg6: memref<64x128xbf16, #tpu.memory_space<vmem>>, %arg7: memref<64x128xf32, #tpu.memory_space<vmem>>) attributes {dimension_semantics = [#tpu.dimension_semantics<parallel>, #tpu.dimension_semantics<parallel>, #tpu.dimension_semantics<arbitrary>], iteration_bounds = array<i64: 2, 1, 1>, scalar_prefetch = 0 : i64, scratch_operands = 1 : i64, tpu.core_type = #tpu.core_type<tc>, window_params = [{transform_indices = @transform_0, window_bounds = array<i64: 64, 256>}, {transform_indices = @transform_1, window_bounds = array<i64: 256, 128>}, {transform_indices = @transform_2, window_bounds = array<i64: 1, 128>}, {transform_indices = @transform_3, window_bounds = array<i64: 64, 128>}]} {
    %c0_i32 = arith.constant 0 : i32
    %0 = arith.cmpi eq, %arg2, %c0_i32 : i32
    %1 = arith.extui %0 : i1 to i32
    %c0_i32_0 = arith.constant 0 : i32
    %2 = arith.cmpi ne, %1, %c0_i32_0 : i32
    scf.if %2 {
      %cst_10 = arith.constant 0.000000e+00 : f32
      %12 = vector.broadcast %cst_10 : f32 to vector<64x128xf32>
      %c0_11 = arith.constant 0 : index
      %c0_12 = arith.constant 0 : index
      %13 = vector.load %arg7[%c0_11, %c0_12] : memref<64x128xf32, #tpu.memory_space<vmem>>, vector<64x128xf32>
      tpu.vector_store %arg7[%c0_11, %c0_12], %12 {strides = array<i32>} : memref<64x128xf32, #tpu.memory_space<vmem>>, vector<64x128xf32>,
    } else {
    }
    %c0 = arith.constant 0 : index
    %c0_1 = arith.constant 0 : index
    %3 = vector.load %arg7[%c0, %c0_1] : memref<64x128xf32, #tpu.memory_space<vmem>>, vector<64x128xf32>
    %c0_2 = arith.constant 0 : index
    %c0_3 = arith.constant 0 : index
    %4 = vector.load %arg3[%c0_2, %c0_3] : memref<64x256xbf16, #tpu.memory_space<vmem>>, vector<64x256xbf16>
    %c0_4 = arith.constant 0 : index
    %c0_5 = arith.constant 0 : index
    %5 = vector.load %arg4[%c0_4, %c0_5] : memref<256x128xbf16, #tpu.memory_space<vmem>>, vector<256x128xbf16>
    %cst = arith.constant dense<0.000000e+00> : vector<64x128xf32>
    %6 = tpu.matmul %4, %5, %cst {dimension_numbers = #tpu.dot_dimension_numbers<[1], [0], [0], [1], [0, 0, 1, 1], [], []>} : vector<64x256xbf16>, vector<256x128xbf16>, vector<64x128xf32> -> vector<64x128xf32>
    %7 = arith.addf %3, %6 : vector<64x128xf32>
    %c0_6 = arith.constant 0 : index
    %c0_7 = arith.constant 0 : index
    %8 = vector.load %arg7[%c0_6, %c0_7] : memref<64x128xf32, #tpu.memory_space<vmem>>, vector<64x128xf32>
    tpu.vector_store %arg7[%c0_6, %c0_7], %7 {strides = array<i32>} : memref<64x128xf32, #tpu.memory_space<vmem>>, vector<64x128xf32>,
    %c0_i32_8 = arith.constant 0 : i32
    %9 = arith.cmpi eq, %arg2, %c0_i32_8 : i32
    %10 = arith.extui %9 : i1 to i32
    %c0_i32_9 = arith.constant 0 : i32
    %11 = arith.cmpi ne, %10, %c0_i32_9 : i32
    scf.if %11 {
      %c0_10 = arith.constant 0 : index
      %c0_11 = arith.constant 0 : index
      %12 = vector.load %arg7[%c0_10, %c0_11] : memref<64x128xf32, #tpu.memory_space<vmem>>, vector<64x128xf32>
      %c0_12 = arith.constant 0 : index
      %c0_13 = arith.constant 0 : index
      %13 = vector.load %arg5[%c0_12, %c0_13] : memref<1x128xf32, #tpu.memory_space<vmem>>, vector<1x128xf32>
      %14 = vector.broadcast %13 : vector<1x128xf32> to vector<64x128xf32>
      %15 = arith.addf %12, %14 : vector<64x128xf32>
      %cst_14 = arith.constant 0.000000e+00 : f32
      %16 = vector.broadcast %cst_14 : f32 to vector<64x128xf32>
      %17 = arith.cmpf ogt, %15, %16 : vector<64x128xf32>
      %cst_15 = arith.constant 0.00999999977 : f32
      %18 = vector.broadcast %cst_15 : f32 to vector<64x128xf32>
      %19 = arith.mulf %18, %15 : vector<64x128xf32>
      %20 = arith.select %17, %15, %19 : vector<64x128xi1>, vector<64x128xf32>
      %21 = arith.truncf %20 : vector<64x128xf32> to vector<64x128xbf16>
      %c0_16 = arith.constant 0 : index
      %c0_17 = arith.constant 0 : index
      %22 = vector.load %arg6[%c0_16, %c0_17] : memref<64x128xbf16, #tpu.memory_space<vmem>>, vector<64x128xbf16>
      tpu.vector_store %arg6[%c0_16, %c0_17], %21 {strides = array<i32>} : memref<64x128xbf16, #tpu.memory_space<vmem>>, vector<64x128xbf16>,
    } else {
    }
    return
  }
  func.func @transform_0(%arg0: i32, %arg1: i32, %arg2: i32) -> (i32, i32) {
    %c0_i32 = arith.constant 0 : i32
    return %arg0, %arg2 : i32, i32
  }
  func.func @transform_1(%arg0: i32, %arg1: i32, %arg2: i32) -> (i32, i32) {
    %c0_i32 = arith.constant 0 : i32
    return %arg2, %arg1 : i32, i32
  }
  func.func @transform_2(%arg0: i32, %arg1: i32, %arg2: i32) -> (i32, i32) {
    %c0_i32 = arith.constant 0 : i32
    %c0_i32_0 = arith.constant 0 : i32
    return %c0_i32, %arg1 : i32, i32
  }
  func.func @transform_3(%arg0: i32, %arg1: i32, %arg2: i32) -> (i32, i32) {
    %c0_i32 = arith.constant 0 : i32
    return %arg0, %arg1 : i32, i32
  }
}

module attributes {stable_mosaic.version = 11 : i64} {
  func.func @_bn_stats_kernel(%arg0: i32, %arg1: i32, %arg2: memref<128x128xbf16, #tpu.memory_space<vmem>>, %arg3: memref<1x128xf32, #tpu.memory_space<vmem>>, %arg4: memref<1x128xf32, #tpu.memory_space<vmem>>) attributes {dimension_semantics = [#tpu.dimension_semantics<parallel>, #tpu.dimension_semantics<arbitrary>], iteration_bounds = array<i64: 1, 1>, scalar_prefetch = 0 : i64, scratch_operands = 0 : i64, tpu.core_type = #tpu.core_type<tc>, window_params = [{transform_indices = @transform_0, window_bounds = array<i64: 128, 128>}, {transform_indices = @transform_1, window_bounds = array<i64: 1, 128>}, {transform_indices = @transform_2, window_bounds = array<i64: 1, 128>}]} {
    %c0_i32 = arith.constant 0 : i32
    %0 = arith.cmpi eq, %arg1, %c0_i32 : i32
    %1 = arith.extui %0 : i1 to i32
    %c0_i32_0 = arith.constant 0 : i32
    %2 = arith.cmpi ne, %1, %c0_i32_0 : i32
    scf.if %2 {
      %cst_11 = arith.constant 0.000000e+00 : f32
      %16 = vector.broadcast %cst_11 : f32 to vector<1x128xf32>
      %c0_12 = arith.constant 0 : index
      %c0_13 = arith.constant 0 : index
      %17 = vector.load %arg3[%c0_12, %c0_13] : memref<1x128xf32, #tpu.memory_space<vmem>>, vector<1x128xf32>
      tpu.vector_store %arg3[%c0_12, %c0_13], %16 {strides = array<i32>} : memref<1x128xf32, #tpu.memory_space<vmem>>, vector<1x128xf32>,
      %cst_14 = arith.constant 0.000000e+00 : f32
      %18 = vector.broadcast %cst_14 : f32 to vector<1x128xf32>
      %c0_15 = arith.constant 0 : index
      %c0_16 = arith.constant 0 : index
      %19 = vector.load %arg4[%c0_15, %c0_16] : memref<1x128xf32, #tpu.memory_space<vmem>>, vector<1x128xf32>
      tpu.vector_store %arg4[%c0_15, %c0_16], %18 {strides = array<i32>} : memref<1x128xf32, #tpu.memory_space<vmem>>, vector<1x128xf32>,
    } else {
    }
    %c0 = arith.constant 0 : index
    %c0_1 = arith.constant 0 : index
    %3 = vector.load %arg2[%c0, %c0_1] : memref<128x128xbf16, #tpu.memory_space<vmem>>, vector<128x128xbf16>
    %4 = arith.extf %3 : vector<128x128xbf16> to vector<128x128xf32>
    %c0_2 = arith.constant 0 : index
    %c0_3 = arith.constant 0 : index
    %5 = vector.load %arg3[%c0_2, %c0_3] : memref<1x128xf32, #tpu.memory_space<vmem>>, vector<1x128xf32>
    %cst = arith.constant dense<0.000000e+00> : vector<128xf32>
    %6 = vector.multi_reduction <add>, %4, %cst [0] : vector<128x128xf32> to vector<128xf32>
    %7 = vector.shape_cast %6 : vector<128xf32> to vector<1x128xf32>
    %8 = arith.addf %5, %7 : vector<1x128xf32>
    %c0_4 = arith.constant 0 : index
    %c0_5 = arith.constant 0 : index
    %9 = vector.load %arg3[%c0_4, %c0_5] : memref<1x128xf32, #tpu.memory_space<vmem>>, vector<1x128xf32>
    tpu.vector_store %arg3[%c0_4, %c0_5], %8 {strides = array<i32>} : memref<1x128xf32, #tpu.memory_space<vmem>>, vector<1x128xf32>,
    %c0_6 = arith.constant 0 : index
    %c0_7 = arith.constant 0 : index
    %10 = vector.load %arg4[%c0_6, %c0_7] : memref<1x128xf32, #tpu.memory_space<vmem>>, vector<1x128xf32>
    %11 = arith.mulf %4, %4 : vector<128x128xf32>
    %cst_8 = arith.constant dense<0.000000e+00> : vector<128xf32>
    %12 = vector.multi_reduction <add>, %11, %cst_8 [0] : vector<128x128xf32> to vector<128xf32>
    %13 = vector.shape_cast %12 : vector<128xf32> to vector<1x128xf32>
    %14 = arith.addf %10, %13 : vector<1x128xf32>
    %c0_9 = arith.constant 0 : index
    %c0_10 = arith.constant 0 : index
    %15 = vector.load %arg4[%c0_9, %c0_10] : memref<1x128xf32, #tpu.memory_space<vmem>>, vector<1x128xf32>
    tpu.vector_store %arg4[%c0_9, %c0_10], %14 {strides = array<i32>} : memref<1x128xf32, #tpu.memory_space<vmem>>, vector<1x128xf32>,
    return
  }
  func.func @transform_0(%arg0: i32, %arg1: i32) -> (i32, i32) {
    %c0_i32 = arith.constant 0 : i32
    return %arg1, %arg0 : i32, i32
  }
  func.func @transform_1(%arg0: i32, %arg1: i32) -> (i32, i32) {
    %c0_i32 = arith.constant 0 : i32
    %c0_i32_0 = arith.constant 0 : i32
    return %c0_i32, %arg0 : i32, i32
  }
  func.func @transform_2(%arg0: i32, %arg1: i32) -> (i32, i32) {
    %c0_i32 = arith.constant 0 : i32
    %c0_i32_0 = arith.constant 0 : i32
    return %c0_i32, %arg0 : i32, i32
  }
}

module attributes {stable_mosaic.version = 11 : i64} {
  func.func @_matmul_bias_leaky_kernel(%arg0: i32, %arg1: i32, %arg2: i32, %arg3: memref<16x512xbf16, #tpu.memory_space<vmem>>, %arg4: memref<512x128xbf16, #tpu.memory_space<vmem>>, %arg5: memref<1x128xf32, #tpu.memory_space<vmem>>, %arg6: memref<16x128xbf16, #tpu.memory_space<vmem>>, %arg7: memref<16x128xf32, #tpu.memory_space<vmem>>) attributes {dimension_semantics = [#tpu.dimension_semantics<parallel>, #tpu.dimension_semantics<parallel>, #tpu.dimension_semantics<arbitrary>], iteration_bounds = array<i64: 2, 1, 1>, scalar_prefetch = 0 : i64, scratch_operands = 1 : i64, tpu.core_type = #tpu.core_type<tc>, window_params = [{transform_indices = @transform_0, window_bounds = array<i64: 16, 512>}, {transform_indices = @transform_1, window_bounds = array<i64: 512, 128>}, {transform_indices = @transform_2, window_bounds = array<i64: 1, 128>}, {transform_indices = @transform_3, window_bounds = array<i64: 16, 128>}]} {
    %c0_i32 = arith.constant 0 : i32
    %0 = arith.cmpi eq, %arg2, %c0_i32 : i32
    %1 = arith.extui %0 : i1 to i32
    %c0_i32_0 = arith.constant 0 : i32
    %2 = arith.cmpi ne, %1, %c0_i32_0 : i32
    scf.if %2 {
      %cst_10 = arith.constant 0.000000e+00 : f32
      %12 = vector.broadcast %cst_10 : f32 to vector<16x128xf32>
      %c0_11 = arith.constant 0 : index
      %c0_12 = arith.constant 0 : index
      %13 = vector.load %arg7[%c0_11, %c0_12] : memref<16x128xf32, #tpu.memory_space<vmem>>, vector<16x128xf32>
      tpu.vector_store %arg7[%c0_11, %c0_12], %12 {strides = array<i32>} : memref<16x128xf32, #tpu.memory_space<vmem>>, vector<16x128xf32>,
    } else {
    }
    %c0 = arith.constant 0 : index
    %c0_1 = arith.constant 0 : index
    %3 = vector.load %arg7[%c0, %c0_1] : memref<16x128xf32, #tpu.memory_space<vmem>>, vector<16x128xf32>
    %c0_2 = arith.constant 0 : index
    %c0_3 = arith.constant 0 : index
    %4 = vector.load %arg3[%c0_2, %c0_3] : memref<16x512xbf16, #tpu.memory_space<vmem>>, vector<16x512xbf16>
    %c0_4 = arith.constant 0 : index
    %c0_5 = arith.constant 0 : index
    %5 = vector.load %arg4[%c0_4, %c0_5] : memref<512x128xbf16, #tpu.memory_space<vmem>>, vector<512x128xbf16>
    %cst = arith.constant dense<0.000000e+00> : vector<16x128xf32>
    %6 = tpu.matmul %4, %5, %cst {dimension_numbers = #tpu.dot_dimension_numbers<[1], [0], [0], [1], [0, 0, 1, 1], [], []>} : vector<16x512xbf16>, vector<512x128xbf16>, vector<16x128xf32> -> vector<16x128xf32>
    %7 = arith.addf %3, %6 : vector<16x128xf32>
    %c0_6 = arith.constant 0 : index
    %c0_7 = arith.constant 0 : index
    %8 = vector.load %arg7[%c0_6, %c0_7] : memref<16x128xf32, #tpu.memory_space<vmem>>, vector<16x128xf32>
    tpu.vector_store %arg7[%c0_6, %c0_7], %7 {strides = array<i32>} : memref<16x128xf32, #tpu.memory_space<vmem>>, vector<16x128xf32>,
    %c0_i32_8 = arith.constant 0 : i32
    %9 = arith.cmpi eq, %arg2, %c0_i32_8 : i32
    %10 = arith.extui %9 : i1 to i32
    %c0_i32_9 = arith.constant 0 : i32
    %11 = arith.cmpi ne, %10, %c0_i32_9 : i32
    scf.if %11 {
      %c0_10 = arith.constant 0 : index
      %c0_11 = arith.constant 0 : index
      %12 = vector.load %arg7[%c0_10, %c0_11] : memref<16x128xf32, #tpu.memory_space<vmem>>, vector<16x128xf32>
      %c0_12 = arith.constant 0 : index
      %c0_13 = arith.constant 0 : index
      %13 = vector.load %arg5[%c0_12, %c0_13] : memref<1x128xf32, #tpu.memory_space<vmem>>, vector<1x128xf32>
      %14 = vector.broadcast %13 : vector<1x128xf32> to vector<16x128xf32>
      %15 = arith.addf %12, %14 : vector<16x128xf32>
      %cst_14 = arith.constant 0.000000e+00 : f32
      %16 = vector.broadcast %cst_14 : f32 to vector<16x128xf32>
      %17 = arith.cmpf ogt, %15, %16 : vector<16x128xf32>
      %cst_15 = arith.constant 0.00999999977 : f32
      %18 = vector.broadcast %cst_15 : f32 to vector<16x128xf32>
      %19 = arith.mulf %18, %15 : vector<16x128xf32>
      %20 = arith.select %17, %15, %19 : vector<16x128xi1>, vector<16x128xf32>
      %21 = arith.truncf %20 : vector<16x128xf32> to vector<16x128xbf16>
      %c0_16 = arith.constant 0 : index
      %c0_17 = arith.constant 0 : index
      %22 = vector.load %arg6[%c0_16, %c0_17] : memref<16x128xbf16, #tpu.memory_space<vmem>>, vector<16x128xbf16>
      tpu.vector_store %arg6[%c0_16, %c0_17], %21 {strides = array<i32>} : memref<16x128xbf16, #tpu.memory_space<vmem>>, vector<16x128xbf16>,
    } else {
    }
    return
  }
  func.func @transform_0(%arg0: i32, %arg1: i32, %arg2: i32) -> (i32, i32) {
    %c0_i32 = arith.constant 0 : i32
    return %arg0, %arg2 : i32, i32
  }
  func.func @transform_1(%arg0: i32, %arg1: i32, %arg2: i32) -> (i32, i32) {
    %c0_i32 = arith.constant 0 : i32
    return %arg2, %arg1 : i32, i32
  }
  func.func @transform_2(%arg0: i32, %arg1: i32, %arg2: i32) -> (i32, i32) {
    %c0_i32 = arith.constant 0 : i32
    %c0_i32_0 = arith.constant 0 : i32
    return %c0_i32, %arg1 : i32, i32
  }
  func.func @transform_3(%arg0: i32, %arg1: i32, %arg2: i32) -> (i32, i32) {
    %c0_i32 = arith.constant 0 : i32
    return %arg0, %arg1 : i32, i32
  }
}

module attributes {stable_mosaic.version = 11 : i64} {
  func.func @_bn_stats_kernel(%arg0: i32, %arg1: i32, %arg2: memref<32x128xbf16, #tpu.memory_space<vmem>>, %arg3: memref<1x128xf32, #tpu.memory_space<vmem>>, %arg4: memref<1x128xf32, #tpu.memory_space<vmem>>) attributes {dimension_semantics = [#tpu.dimension_semantics<parallel>, #tpu.dimension_semantics<arbitrary>], iteration_bounds = array<i64: 1, 1>, scalar_prefetch = 0 : i64, scratch_operands = 0 : i64, tpu.core_type = #tpu.core_type<tc>, window_params = [{transform_indices = @transform_0, window_bounds = array<i64: 32, 128>}, {transform_indices = @transform_1, window_bounds = array<i64: 1, 128>}, {transform_indices = @transform_2, window_bounds = array<i64: 1, 128>}]} {
    %c0_i32 = arith.constant 0 : i32
    %0 = arith.cmpi eq, %arg1, %c0_i32 : i32
    %1 = arith.extui %0 : i1 to i32
    %c0_i32_0 = arith.constant 0 : i32
    %2 = arith.cmpi ne, %1, %c0_i32_0 : i32
    scf.if %2 {
      %cst_11 = arith.constant 0.000000e+00 : f32
      %16 = vector.broadcast %cst_11 : f32 to vector<1x128xf32>
      %c0_12 = arith.constant 0 : index
      %c0_13 = arith.constant 0 : index
      %17 = vector.load %arg3[%c0_12, %c0_13] : memref<1x128xf32, #tpu.memory_space<vmem>>, vector<1x128xf32>
      tpu.vector_store %arg3[%c0_12, %c0_13], %16 {strides = array<i32>} : memref<1x128xf32, #tpu.memory_space<vmem>>, vector<1x128xf32>,
      %cst_14 = arith.constant 0.000000e+00 : f32
      %18 = vector.broadcast %cst_14 : f32 to vector<1x128xf32>
      %c0_15 = arith.constant 0 : index
      %c0_16 = arith.constant 0 : index
      %19 = vector.load %arg4[%c0_15, %c0_16] : memref<1x128xf32, #tpu.memory_space<vmem>>, vector<1x128xf32>
      tpu.vector_store %arg4[%c0_15, %c0_16], %18 {strides = array<i32>} : memref<1x128xf32, #tpu.memory_space<vmem>>, vector<1x128xf32>,
    } else {
    }
    %c0 = arith.constant 0 : index
    %c0_1 = arith.constant 0 : index
    %3 = vector.load %arg2[%c0, %c0_1] : memref<32x128xbf16, #tpu.memory_space<vmem>>, vector<32x128xbf16>
    %4 = arith.extf %3 : vector<32x128xbf16> to vector<32x128xf32>
    %c0_2 = arith.constant 0 : index
    %c0_3 = arith.constant 0 : index
    %5 = vector.load %arg3[%c0_2, %c0_3] : memref<1x128xf32, #tpu.memory_space<vmem>>, vector<1x128xf32>
    %cst = arith.constant dense<0.000000e+00> : vector<128xf32>
    %6 = vector.multi_reduction <add>, %4, %cst [0] : vector<32x128xf32> to vector<128xf32>
    %7 = vector.shape_cast %6 : vector<128xf32> to vector<1x128xf32>
    %8 = arith.addf %5, %7 : vector<1x128xf32>
    %c0_4 = arith.constant 0 : index
    %c0_5 = arith.constant 0 : index
    %9 = vector.load %arg3[%c0_4, %c0_5] : memref<1x128xf32, #tpu.memory_space<vmem>>, vector<1x128xf32>
    tpu.vector_store %arg3[%c0_4, %c0_5], %8 {strides = array<i32>} : memref<1x128xf32, #tpu.memory_space<vmem>>, vector<1x128xf32>,
    %c0_6 = arith.constant 0 : index
    %c0_7 = arith.constant 0 : index
    %10 = vector.load %arg4[%c0_6, %c0_7] : memref<1x128xf32, #tpu.memory_space<vmem>>, vector<1x128xf32>
    %11 = arith.mulf %4, %4 : vector<32x128xf32>
    %cst_8 = arith.constant dense<0.000000e+00> : vector<128xf32>
    %12 = vector.multi_reduction <add>, %11, %cst_8 [0] : vector<32x128xf32> to vector<128xf32>
    %13 = vector.shape_cast %12 : vector<128xf32> to vector<1x128xf32>
    %14 = arith.addf %10, %13 : vector<1x128xf32>
    %c0_9 = arith.constant 0 : index
    %c0_10 = arith.constant 0 : index
    %15 = vector.load %arg4[%c0_9, %c0_10] : memref<1x128xf32, #tpu.memory_space<vmem>>, vector<1x128xf32>
    tpu.vector_store %arg4[%c0_9, %c0_10], %14 {strides = array<i32>} : memref<1x128xf32, #tpu.memory_space<vmem>>, vector<1x128xf32>,
    return
  }
  func.func @transform_0(%arg0: i32, %arg1: i32) -> (i32, i32) {
    %c0_i32 = arith.constant 0 : i32
    return %arg1, %arg0 : i32, i32
  }
  func.func @transform_1(%arg0: i32, %arg1: i32) -> (i32, i32) {
    %c0_i32 = arith.constant 0 : i32
    %c0_i32_0 = arith.constant 0 : i32
    return %c0_i32, %arg0 : i32, i32
  }
  func.func @transform_2(%arg0: i32, %arg1: i32) -> (i32, i32) {
    %c0_i32 = arith.constant 0 : i32
    %c0_i32_0 = arith.constant 0 : i32
    return %c0_i32, %arg0 : i32, i32
  }
}

module attributes {stable_mosaic.version = 11 : i64} {
  func.func @_matmul_bias_leaky_kernel(%arg0: i32, %arg1: i32, %arg2: i32, %arg3: memref<16x1024xbf16, #tpu.memory_space<vmem>>, %arg4: memref<1024x128xbf16, #tpu.memory_space<vmem>>, %arg5: memref<1x128xf32, #tpu.memory_space<vmem>>, %arg6: memref<16x128xbf16, #tpu.memory_space<vmem>>, %arg7: memref<16x128xf32, #tpu.memory_space<vmem>>) attributes {dimension_semantics = [#tpu.dimension_semantics<parallel>, #tpu.dimension_semantics<parallel>, #tpu.dimension_semantics<arbitrary>], iteration_bounds = array<i64: 2, 1, 1>, scalar_prefetch = 0 : i64, scratch_operands = 1 : i64, tpu.core_type = #tpu.core_type<tc>, window_params = [{transform_indices = @transform_0, window_bounds = array<i64: 16, 1024>}, {transform_indices = @transform_1, window_bounds = array<i64: 1024, 128>}, {transform_indices = @transform_2, window_bounds = array<i64: 1, 128>}, {transform_indices = @transform_3, window_bounds = array<i64: 16, 128>}]} {
    %c0_i32 = arith.constant 0 : i32
    %0 = arith.cmpi eq, %arg2, %c0_i32 : i32
    %1 = arith.extui %0 : i1 to i32
    %c0_i32_0 = arith.constant 0 : i32
    %2 = arith.cmpi ne, %1, %c0_i32_0 : i32
    scf.if %2 {
      %cst_10 = arith.constant 0.000000e+00 : f32
      %12 = vector.broadcast %cst_10 : f32 to vector<16x128xf32>
      %c0_11 = arith.constant 0 : index
      %c0_12 = arith.constant 0 : index
      %13 = vector.load %arg7[%c0_11, %c0_12] : memref<16x128xf32, #tpu.memory_space<vmem>>, vector<16x128xf32>
      tpu.vector_store %arg7[%c0_11, %c0_12], %12 {strides = array<i32>} : memref<16x128xf32, #tpu.memory_space<vmem>>, vector<16x128xf32>,
    } else {
    }
    %c0 = arith.constant 0 : index
    %c0_1 = arith.constant 0 : index
    %3 = vector.load %arg7[%c0, %c0_1] : memref<16x128xf32, #tpu.memory_space<vmem>>, vector<16x128xf32>
    %c0_2 = arith.constant 0 : index
    %c0_3 = arith.constant 0 : index
    %4 = vector.load %arg3[%c0_2, %c0_3] : memref<16x1024xbf16, #tpu.memory_space<vmem>>, vector<16x1024xbf16>
    %c0_4 = arith.constant 0 : index
    %c0_5 = arith.constant 0 : index
    %5 = vector.load %arg4[%c0_4, %c0_5] : memref<1024x128xbf16, #tpu.memory_space<vmem>>, vector<1024x128xbf16>
    %cst = arith.constant dense<0.000000e+00> : vector<16x128xf32>
    %6 = tpu.matmul %4, %5, %cst {dimension_numbers = #tpu.dot_dimension_numbers<[1], [0], [0], [1], [0, 0, 1, 1], [], []>} : vector<16x1024xbf16>, vector<1024x128xbf16>, vector<16x128xf32> -> vector<16x128xf32>
    %7 = arith.addf %3, %6 : vector<16x128xf32>
    %c0_6 = arith.constant 0 : index
    %c0_7 = arith.constant 0 : index
    %8 = vector.load %arg7[%c0_6, %c0_7] : memref<16x128xf32, #tpu.memory_space<vmem>>, vector<16x128xf32>
    tpu.vector_store %arg7[%c0_6, %c0_7], %7 {strides = array<i32>} : memref<16x128xf32, #tpu.memory_space<vmem>>, vector<16x128xf32>,
    %c0_i32_8 = arith.constant 0 : i32
    %9 = arith.cmpi eq, %arg2, %c0_i32_8 : i32
    %10 = arith.extui %9 : i1 to i32
    %c0_i32_9 = arith.constant 0 : i32
    %11 = arith.cmpi ne, %10, %c0_i32_9 : i32
    scf.if %11 {
      %c0_10 = arith.constant 0 : index
      %c0_11 = arith.constant 0 : index
      %12 = vector.load %arg7[%c0_10, %c0_11] : memref<16x128xf32, #tpu.memory_space<vmem>>, vector<16x128xf32>
      %c0_12 = arith.constant 0 : index
      %c0_13 = arith.constant 0 : index
      %13 = vector.load %arg5[%c0_12, %c0_13] : memref<1x128xf32, #tpu.memory_space<vmem>>, vector<1x128xf32>
      %14 = vector.broadcast %13 : vector<1x128xf32> to vector<16x128xf32>
      %15 = arith.addf %12, %14 : vector<16x128xf32>
      %cst_14 = arith.constant 0.000000e+00 : f32
      %16 = vector.broadcast %cst_14 : f32 to vector<16x128xf32>
      %17 = arith.cmpf ogt, %15, %16 : vector<16x128xf32>
      %cst_15 = arith.constant 0.00999999977 : f32
      %18 = vector.broadcast %cst_15 : f32 to vector<16x128xf32>
      %19 = arith.mulf %18, %15 : vector<16x128xf32>
      %20 = arith.select %17, %15, %19 : vector<16x128xi1>, vector<16x128xf32>
      %21 = arith.truncf %20 : vector<16x128xf32> to vector<16x128xbf16>
      %c0_16 = arith.constant 0 : index
      %c0_17 = arith.constant 0 : index
      %22 = vector.load %arg6[%c0_16, %c0_17] : memref<16x128xbf16, #tpu.memory_space<vmem>>, vector<16x128xbf16>
      tpu.vector_store %arg6[%c0_16, %c0_17], %21 {strides = array<i32>} : memref<16x128xbf16, #tpu.memory_space<vmem>>, vector<16x128xbf16>,
    } else {
    }
    return
  }
  func.func @transform_0(%arg0: i32, %arg1: i32, %arg2: i32) -> (i32, i32) {
    %c0_i32 = arith.constant 0 : i32
    return %arg0, %arg2 : i32, i32
  }
  func.func @transform_1(%arg0: i32, %arg1: i32, %arg2: i32) -> (i32, i32) {
    %c0_i32 = arith.constant 0 : i32
    return %arg2, %arg1 : i32, i32
  }
  func.func @transform_2(%arg0: i32, %arg1: i32, %arg2: i32) -> (i32, i32) {
    %c0_i32 = arith.constant 0 : i32
    %c0_i32_0 = arith.constant 0 : i32
    return %c0_i32, %arg1 : i32, i32
  }
  func.func @transform_3(%arg0: i32, %arg1: i32, %arg2: i32) -> (i32, i32) {
    %c0_i32 = arith.constant 0 : i32
    return %arg0, %arg1 : i32, i32
  }
}

</mosaic_0001>

<llo_original>
// kernel: discriminator_forward.8
$region0: #{discriminator_forward.8}
  #allocation0 [shape = 'u32[]', space=smem, size = 0x4, offset = 0x4, fixed_abs, tag = 'smem constant byte address 0x4 - core index']
  #allocation1 [shape = 'u32[144,128]{1,0:T(1,128)}', space=vmem, size = 0x12000, scoped, tag = 'internal scratch']
  #allocation2 [shape = 'f32[512,128]{1,0:T(8,128)}', space=vmem, size = 0x40000, scoped, tag = 'scratch operand']
  %s0 = inlined_call_operand.vmem [shape: bf16[2048,128], index: 0, kind: input, shape index: {}]
  %s1 = inlined_call_operand.vmem [shape: bf16[128,128], index: 1, kind: input, shape index: {}]
  %s2 = inlined_call_operand.vmem [shape: f32[1,128], index: 2, kind: input, shape index: {}]
  %s3 = inlined_call_operand.vmem [shape: bf16[2048,128], index: 3, kind: output, shape index: {}]
  %s4 = sld [smem:[#allocation0]]
  $region53: #{discriminator_forward.8} parent=0
    _
  %s6 = ssub.s32 1, %s4
  %s7 = scalar_select 0, %s6, %s4
  loop: start=0, step=1, limit=6
  $region2: #{discriminator_forward.8} parent=0 // loop_pre_header
    _
  $region3: #{discriminator_forward.8} parent=0 // loop_header
    %s9 = sphi 0, %s13
    %p10 = scmp.ge.s32.totalorder %s9, 6
    %s16 = sphi 0, %s35
    %s17 = sphi 0, %s31
    %s18 = sphi 0, %s27
    %s19 = sphi 0, %s16
    %s20 = sphi 0, %s17
    %s21 = sphi 0, %s18
    %s22 = sphi 0, %s19
    %s23 = sphi 0, %s20
    %s24 = sphi 0, %s21
    %s40 = sphi 0, %s42
    %s43 = sphi 0, %s40
    %s44 = sphi 0, %s43
    %s60 = sphi 0, %s44
    %s68 = sphi 0, %s70
    %s71 = sphi 0, %s68
    %s72 = sphi 0, %s71
    %s88 = sphi 0, %s72
    %s94 = sphi 0, %s96
    %s97 = sphi 0, %s94
    %s98 = sphi 0, %s97
    %s114 = sphi 0, %s98
    %s122 = sphi 0, %s124
    %s125 = sphi 0, %s122
    %s126 = sphi 0, %s125
    %s142 = sphi 0, %s126
  $region4: #{discriminator_forward.8} parent=0 // loop_header_branch
    %12 = sbr.rel (%p10) target = $region8
  $region5: #{discriminator_forward.8} parent=0 // loop_body
    %s14 = ssub.s32 %s9, 1
    %s15 = ssub.s32 %s9, 2
    %s25 = sadd.s32 1, %s18
    %p26 = scmp.ge.s32.totalorder %s25, 1
    %s27 = scalar_select %p26, 0, %s25
    %s28 = sadd.s32 1, %s17
    %s29 = scalar_select %p26, %s28, %s17
    %p30 = scmp.ge.s32.totalorder %s29, 1
    %s31 = scalar_select %p30, 0, %s29
    %s32 = sadd.s32 1, %s16
    %s33 = scalar_select %p30, %s32, %s16
    %p34 = scmp.ge.s32.totalorder %s33, 4
    %s35 = scalar_select %p34, 0, %s33
    %s36 = ssub.s32 %s16, %s35
    %s37 = ssub.s32 %s18, %s27
    %s38 = sor.u32 %s36, %s37
    %p39 = scmp.eq.s32.totalorder %s38, 0
    %s41 = sadd.s32 %s40, 1
    %s42 = scalar_select %p39, %s40, %s41
    %p45 = pneg %p39
    %p46 = scmp.eq.s32.totalorder %s9, 3
    %p47 = por %p45, %p46
    %p48 = scmp.ne.s32.totalorder %s40, %s43
    %p49 = scmp.eq.s32.totalorder %s9, 0
    %p50 = por %p48, %p49
    %p51 = scmp.ne.s32.totalorder %s40, %s43
    %p52 = scmp.eq.s32.totalorder %s14, 3
    %p53 = por %p51, %p52
    %p54 = scmp.ne.s32.totalorder %s43, %s44
    %p55 = scmp.eq.s32.totalorder %s14, 0
    %p56 = por %p54, %p55
    %p57 = scmp.ne.s32.totalorder %s43, %s44
    %p58 = scmp.eq.s32.totalorder %s15, 3
    %p59 = por %p57, %p58
    %p61 = scmp.ne.s32.totalorder %s44, %s60
    %p62 = scmp.eq.s32.totalorder %s15, 0
    %p63 = por %p61, %p62
    %s64 = ssub.s32 %s18, %s27
    %s65 = ssub.s32 %s17, %s31
    %s66 = sor.u32 %s64, %s65
    %p67 = scmp.eq.s32.totalorder %s66, 0
    %s69 = sadd.s32 %s68, 1
    %s70 = scalar_select %p67, %s68, %s69
    %p73 = pneg %p67
    %p74 = scmp.eq.s32.totalorder %s9, 3
    %p75 = por %p73, %p74
    %p76 = scmp.ne.s32.totalorder %s68, %s71
    %p77 = scmp.eq.s32.totalorder %s9, 0
    %p78 = por %p76, %p77
    %p79 = scmp.ne.s32.totalorder %s68, %s71
    %p80 = scmp.eq.s32.totalorder %s14, 3
    %p81 = por %p79, %p80
    %p82 = scmp.ne.s32.totalorder %s71, %s72
    %p83 = scmp.eq.s32.totalorder %s14, 0
    %p84 = por %p82, %p83
    %p85 = scmp.ne.s32.totalorder %s71, %s72
    %p86 = scmp.eq.s32.totalorder %s15, 3
    %p87 = por %p85, %p86
    %p89 = scmp.ne.s32.totalorder %s72, %s88
    %p90 = scmp.eq.s32.totalorder %s15, 0
    %p91 = por %p89, %p90
    %s92 = ssub.s32 %s17, %s31
    %p93 = scmp.eq.s32.totalorder %s92, 0
    %s95 = sadd.s32 %s94, 1
    %s96 = scalar_select %p93, %s94, %s95
    %p99 = pneg %p93
    %p100 = scmp.eq.s32.totalorder %s9, 3
    %p101 = por %p99, %p100
    %p102 = scmp.ne.s32.totalorder %s94, %s97
    %p103 = scmp.eq.s32.totalorder %s9, 0
    %p104 = por %p102, %p103
    %p105 = scmp.ne.s32.totalorder %s94, %s97
    %p106 = scmp.eq.s32.totalorder %s14, 3
    %p107 = por %p105, %p106
    %p108 = scmp.ne.s32.totalorder %s97, %s98
    %p109 = scmp.eq.s32.totalorder %s14, 0
    %p110 = por %p108, %p109
    %p111 = scmp.ne.s32.totalorder %s97, %s98
    %p112 = scmp.eq.s32.totalorder %s15, 3
    %p113 = por %p111, %p112
    %p115 = scmp.ne.s32.totalorder %s98, %s114
    %p116 = scmp.eq.s32.totalorder %s15, 0
    %p117 = por %p115, %p116
    %s118 = ssub.s32 %s16, %s35
    %s119 = ssub.s32 %s17, %s31
    %s120 = sor.u32 %s118, %s119
    %p121 = scmp.eq.s32.totalorder %s120, 0
    %s123 = sadd.s32 %s122, 1
    %s124 = scalar_select %p121, %s122, %s123
    %p127 = pneg %p121
    %p128 = scmp.eq.s32.totalorder %s9, 3
    %p129 = por %p127, %p128
    %p130 = scmp.ne.s32.totalorder %s122, %s125
    %p131 = scmp.eq.s32.totalorder %s9, 0
    %p132 = por %p130, %p131
    %p133 = scmp.ne.s32.totalorder %s122, %s125
    %p134 = scmp.eq.s32.totalorder %s14, 3
    %p135 = por %p133, %p134
    %p136 = scmp.ne.s32.totalorder %s125, %s126
    %p137 = scmp.eq.s32.totalorder %s14, 0
    %p138 = por %p136, %p137
    %p139 = scmp.ne.s32.totalorder %s125, %s126
    %p140 = scmp.eq.s32.totalorder %s15, 3
    %p141 = por %p139, %p140
    %p143 = scmp.ne.s32.totalorder %s126, %s142
    %p144 = scmp.eq.s32.totalorder %s15, 0
    %p145 = por %p143, %p144
    %p146 = scmp.le.s32.totalorder 1, %s9
    %p147 = scmp.lt.s32.totalorder %s9, 5
    %p148 = pnand %p146, %p147
    %p149 = pneg %p148
    // Predicated region
    $region9: #{discriminator_forward.8} parent=5 // pred_check
      _
    $region10: #{discriminator_forward.8} parent=5 // pred_check_branch
      %151 = sbr.rel (%p148) target = $region12
    $region11: #{discriminator_forward.8} parent=5 // pred_region
      %s152 = ssub.s32 %s9, 1
      // Predicated region
      $region13: #{discriminator_forward.8} parent=11 // pred_check
        %p153 = pneg %p84
      $region14: #{discriminator_forward.8} parent=11 // pred_check_branch
        %155 = sbr.rel (%p153) target = $region16
      $region15: #{discriminator_forward.8} parent=11 // pred_region
        %s156 = smul.u32 16, %s21
        %p157 = scmp.lt.s32.totalorder %s156, 15
        %s158 = scalar_select %p157, %s156, 15
        %p159 = scmp.lt.s32.totalorder %s20, 0
        %s160 = scalar_select %p159, %s20, 0
        %s161 = sadd.s32 %s160, %s158
        %s162 = smul.addr %s161, 4
        %s163 = scalar_lea.vmem %s1, %s162
        %s164 = smul.u32 16, %s21
      $region16: #{discriminator_forward.8} parent=11 // pred_fallthru
        _
      // Predicated region
      $region17: #{discriminator_forward.8} parent=11 // pred_check
        %p165 = pneg %p110
      $region18: #{discriminator_forward.8} parent=11 // pred_check_branch
        %167 = sbr.rel (%p165) target = $region20
      $region19: #{discriminator_forward.8} parent=11 // pred_region
        %p168 = scmp.lt.s32.totalorder %s20, 0
        %s169 = scalar_select %p168, %s20, 0
        %s170 = scalar_lea.vmem %s2, %s169
      $region20: #{discriminator_forward.8} parent=11 // pred_fallthru
        _
    $region12: #{discriminator_forward.8} parent=5 // pred_fallthru
      _
    %p171 = scmp.lt.s32.totalorder %s9, 4
    // Predicated region
    $region21: #{discriminator_forward.8} parent=5 // pred_check
      %p172 = pneg %p171
    $region22: #{discriminator_forward.8} parent=5 // pred_check_branch
      %174 = sbr.rel (%p172) target = $region24
    $region23: #{discriminator_forward.8} parent=5 // pred_region
      // Predicated region
      $region25: #{discriminator_forward.8} parent=23 // pred_check
        %p175 = pneg %p50
      $region26: #{discriminator_forward.8} parent=23 // pred_check_branch
        %177 = sbr.rel (%p175) target = $region28
      $region27: #{discriminator_forward.8} parent=23 // pred_region
        %s178 = smul.u32 64, %s16
        %p179 = scmp.lt.s32.totalorder %s178, 255
        %s180 = scalar_select %p179, %s178, 255
        %p181 = scmp.lt.s32.totalorder %s18, 0
        %s182 = scalar_select %p181, %s18, 0
        %s183 = sadd.s32 %s182, %s180
        %s184 = smul.addr %s183, 4
        %s185 = scalar_lea.vmem %s0, %s184
        %s186 = smul.u32 64, %s16
      $region28: #{discriminator_forward.8} parent=23 // pred_fallthru
        _
    $region24: #{discriminator_forward.8} parent=5 // pred_fallthru
      _
    %p187 = scmp.le.s32.totalorder 1, %s9
    %p188 = scmp.lt.s32.totalorder %s9, 5
    %p189 = pnand %p187, %p188
    %p190 = pneg %p189
    // Predicated region
    $region29: #{discriminator_forward.8} parent=5 // pred_check
      _
    $region30: #{discriminator_forward.8} parent=5 // pred_check_branch
      %192 = sbr.rel (%p189) target = $region32
    $region31: #{discriminator_forward.8} parent=5 // pred_region
      %s193 = ssub.s32 %s9, 1
      %s194 = smul.u32 64, %s19
      %p195 = scmp.lt.s32.totalorder %s194, 255
      %s196 = scalar_select %p195, %s194, 255
      %p197 = scmp.lt.s32.totalorder %s21, 0
      %s198 = scalar_select %p197, %s21, 0
      %s199 = sadd.s32 %s198, %s196
      %s200 = smul.addr %s199, 4
      %s201 = scalar_lea.vmem %s0, %s200
      %p202 = pneg %p56
      %p203 = pneg %p53
      %s204 = smul.u32 16, %s21
      %p205 = scmp.lt.s32.totalorder %s204, 15
      %s206 = scalar_select %p205, %s204, 15
      %p207 = scmp.lt.s32.totalorder %s20, 0
      %s208 = scalar_select %p207, %s20, 0
      %s209 = sadd.s32 %s208, %s206
      %s210 = smul.addr %s209, 4
      %s211 = scalar_lea.vmem %s1, %s210
      %p212 = pneg %p84
      %p213 = pneg %p81
      %p214 = scmp.lt.s32.totalorder %s20, 0
      %s215 = scalar_select %p214, %s20, 0
      %s216 = scalar_lea.vmem %s2, %s215
      %p217 = pneg %p110
      %p218 = pneg %p107
      %p219 = pneg %p138
      %p220 = pneg %p135
      %s221 = smul.u32 64, %s19
      %p222 = scmp.lt.s32.totalorder %s221, 255
      %s223 = scalar_select %p222, %s221, 255
      %p224 = scmp.lt.s32.totalorder %s20, 0
      %s225 = scalar_select %p224, %s20, 0
      %s226 = sadd.s32 %s225, %s223
      %s227 = smul.addr %s226, 4
      %s228 = scalar_lea.vmem %s3, %s227
      %s229 = smul.u32 64, %s19
      %p230 = scmp.lt.s32.totalorder %s229, 255
      %s231 = scalar_select %p230, %s229, 255
      %p232 = scmp.lt.s32.totalorder %s21, 0
      %s233 = scalar_select %p232, %s21, 0
      %s234 = sadd.s32 %s233, %s231
      %s235 = smul.addr %s234, 4
      %s236 = scalar_lea.vmem %s0, %s235
      %s237 = smul.u32 64, %s19
      %s238 = smul.u32 16, %s21
      %p239 = scmp.lt.s32.totalorder %s238, 15
      %s240 = scalar_select %p239, %s238, 15
      %p241 = scmp.lt.s32.totalorder %s20, 0
      %s242 = scalar_select %p241, %s20, 0
      %s243 = sadd.s32 %s242, %s240
      %s244 = smul.addr %s243, 4
      %s245 = scalar_lea.vmem %s1, %s244
      %s246 = smul.u32 16, %s21
      %p247 = scmp.lt.s32.totalorder %s20, 0
      %s248 = scalar_select %p247, %s20, 0
      %s249 = scalar_lea.vmem %s2, %s248
      %s250 = smul.u32 64, %s19
      %p251 = scmp.lt.s32.totalorder %s250, 255
      %s252 = scalar_select %p251, %s250, 255
      %p253 = scmp.lt.s32.totalorder %s20, 0
      %s254 = scalar_select %p253, %s20, 0
      %s255 = sadd.s32 %s254, %s252
      %s256 = smul.addr %s255, 4
      %s257 = scalar_lea.vmem %s3, %s256
      %s258 = smul.u32 64, %s19
      %p260 = scmp.eq.s32.totalorder %s21, 0
      // Predicated region
      $region33: #{discriminator_forward.8} parent=31 // pred_check
        %p261 = pneg %p260
      $region34: #{discriminator_forward.8} parent=31 // pred_check_branch
        %263 = sbr.rel (%p261) target = $region36
      $region35: #{discriminator_forward.8} parent=31 // pred_region
        %264 = vst [vmem:[#allocation2] sm:$0xff] 0.0
        %265 = vst [vmem:[#allocation2 + $0x8] sm:$0xff] 0.0
        %266 = vst [vmem:[#allocation2 + $0x10] sm:$0xff] 0.0
        %267 = vst [vmem:[#allocation2 + $0x18] sm:$0xff] 0.0
        %268 = vst [vmem:[#allocation2 + $0x20] sm:$0xff] 0.0
        %269 = vst [vmem:[#allocation2 + $0x28] sm:$0xff] 0.0
        %270 = vst [vmem:[#allocation2 + $0x30] sm:$0xff] 0.0
        %271 = vst [vmem:[#allocation2 + $0x38] sm:$0xff] 0.0
        %272 = vst [vmem:[#allocation2 + $0x40] sm:$0xff] 0.0
        %273 = vst [vmem:[#allocation2 + $0x48] sm:$0xff] 0.0
        %274 = vst [vmem:[#allocation2 + $0x50] sm:$0xff] 0.0
        %275 = vst [vmem:[#allocation2 + $0x58] sm:$0xff] 0.0
        %276 = vst [vmem:[#allocation2 + $0x60] sm:$0xff] 0.0
        %277 = vst [vmem:[#allocation2 + $0x68] sm:$0xff] 0.0
        %278 = vst [vmem:[#allocation2 + $0x70] sm:$0xff] 0.0
        %279 = vst [vmem:[#allocation2 + $0x78] sm:$0xff] 0.0
        %280 = vst [vmem:[#allocation2 + $0x80] sm:$0xff] 0.0
        %281 = vst [vmem:[#allocation2 + $0x88] sm:$0xff] 0.0
        %282 = vst [vmem:[#allocation2 + $0x90] sm:$0xff] 0.0
        %283 = vst [vmem:[#allocation2 + $0x98] sm:$0xff] 0.0
        %284 = vst [vmem:[#allocation2 + $0xa0] sm:$0xff] 0.0
        %285 = vst [vmem:[#allocation2 + $0xa8] sm:$0xff] 0.0
        %286 = vst [vmem:[#allocation2 + $0xb0] sm:$0xff] 0.0
        %287 = vst [vmem:[#allocation2 + $0xb8] sm:$0xff] 0.0
        %288 = vst [vmem:[#allocation2 + $0xc0] sm:$0xff] 0.0
        %289 = vst [vmem:[#allocation2 + $0xc8] sm:$0xff] 0.0
        %290 = vst [vmem:[#allocation2 + $0xd0] sm:$0xff] 0.0
        %291 = vst [vmem:[#allocation2 + $0xd8] sm:$0xff] 0.0
        %292 = vst [vmem:[#allocation2 + $0xe0] sm:$0xff] 0.0
        %293 = vst [vmem:[#allocation2 + $0xe8] sm:$0xff] 0.0
        %294 = vst [vmem:[#allocation2 + $0xf0] sm:$0xff] 0.0
        %295 = vst [vmem:[#allocation2 + $0xf8] sm:$0xff] 0.0
        %296 = vst [vmem:[#allocation2 + $0x100] sm:$0xff] 0.0
        %297 = vst [vmem:[#allocation2 + $0x108] sm:$0xff] 0.0
        %298 = vst [vmem:[#allocation2 + $0x110] sm:$0xff] 0.0
        %299 = vst [vmem:[#allocation2 + $0x118] sm:$0xff] 0.0
        %300 = vst [vmem:[#allocation2 + $0x120] sm:$0xff] 0.0
        %301 = vst [vmem:[#allocation2 + $0x128] sm:$0xff] 0.0
        %302 = vst [vmem:[#allocation2 + $0x130] sm:$0xff] 0.0
        %303 = vst [vmem:[#allocation2 + $0x138] sm:$0xff] 0.0
        %304 = vst [vmem:[#allocation2 + $0x140] sm:$0xff] 0.0
        %305 = vst [vmem:[#allocation2 + $0x148] sm:$0xff] 0.0
        %306 = vst [vmem:[#allocation2 + $0x150] sm:$0xff] 0.0
        %307 = vst [vmem:[#allocation2 + $0x158] sm:$0xff] 0.0
        %308 = vst [vmem:[#allocation2 + $0x160] sm:$0xff] 0.0
        %309 = vst [vmem:[#allocation2 + $0x168] sm:$0xff] 0.0
        %310 = vst [vmem:[#allocation2 + $0x170] sm:$0xff] 0.0
        %311 = vst [vmem:[#allocation2 + $0x178] sm:$0xff] 0.0
        %312 = vst [vmem:[#allocation2 + $0x180] sm:$0xff] 0.0
        %313 = vst [vmem:[#allocation2 + $0x188] sm:$0xff] 0.0
        %314 = vst [vmem:[#allocation2 + $0x190] sm:$0xff] 0.0
        %315 = vst [vmem:[#allocation2 + $0x198] sm:$0xff] 0.0
        %316 = vst [vmem:[#allocation2 + $0x1a0] sm:$0xff] 0.0
        %317 = vst [vmem:[#allocation2 + $0x1a8] sm:$0xff] 0.0
        %318 = vst [vmem:[#allocation2 + $0x1b0] sm:$0xff] 0.0
        %319 = vst [vmem:[#allocation2 + $0x1b8] sm:$0xff] 0.0
        %320 = vst [vmem:[#allocation2 + $0x1c0] sm:$0xff] 0.0
        %321 = vst [vmem:[#allocation2 + $0x1c8] sm:$0xff] 0.0
        %322 = vst [vmem:[#allocation2 + $0x1d0] sm:$0xff] 0.0
        %323 = vst [vmem:[#allocation2 + $0x1d8] sm:$0xff] 0.0
        %324 = vst [vmem:[#allocation2 + $0x1e0] sm:$0xff] 0.0
        %325 = vst [vmem:[#allocation2 + $0x1e8] sm:$0xff] 0.0
        %326 = vst [vmem:[#allocation2 + $0x1f0] sm:$0xff] 0.0
        %327 = vst [vmem:[#allocation2 + $0x1f8] sm:$0xff] 0.0
      $region36: #{discriminator_forward.8} parent=31 // pred_fallthru
        _
      %v328 = vld [vmem:[#allocation2] sm:$0xff]
      %v329 = vld [vmem:[#allocation2 + $0x8] sm:$0xff]
      %v330 = vld [vmem:[#allocation2 + $0x10] sm:$0xff]
      %v331 = vld [vmem:[#allocation2 + $0x18] sm:$0xff]
      %v332 = vld [vmem:[#allocation2 + $0x20] sm:$0xff]
      %v333 = vld [vmem:[#allocation2 + $0x28] sm:$0xff]
      %v334 = vld [vmem:[#allocation2 + $0x30] sm:$0xff]
      %v335 = vld [vmem:[#allocation2 + $0x38] sm:$0xff]
      %v336 = vld [vmem:[#allocation2 + $0x40] sm:$0xff]
      %v337 = vld [vmem:[#allocation2 + $0x48] sm:$0xff]
      %v338 = vld [vmem:[#allocation2 + $0x50] sm:$0xff]
      %v339 = vld [vmem:[#allocation2 + $0x58] sm:$0xff]
      %v340 = vld [vmem:[#allocation2 + $0x60] sm:$0xff]
      %v341 = vld [vmem:[#allocation2 + $0x68] sm:$0xff]
      %v342 = vld [vmem:[#allocation2 + $0x70] sm:$0xff]
      %v343 = vld [vmem:[#allocation2 + $0x78] sm:$0xff]
      %v344 = vld [vmem:[#allocation2 + $0x80] sm:$0xff]
      %v345 = vld [vmem:[#allocation2 + $0x88] sm:$0xff]
      %v346 = vld [vmem:[#allocation2 + $0x90] sm:$0xff]
      %v347 = vld [vmem:[#allocation2 + $0x98] sm:$0xff]
      %v348 = vld [vmem:[#allocation2 + $0xa0] sm:$0xff]
      %v349 = vld [vmem:[#allocation2 + $0xa8] sm:$0xff]
      %v350 = vld [vmem:[#allocation2 + $0xb0] sm:$0xff]
      %v351 = vld [vmem:[#allocation2 + $0xb8] sm:$0xff]
      %v352 = vld [vmem:[#allocation2 + $0xc0] sm:$0xff]
      %v353 = vld [vmem:[#allocation2 + $0xc8] sm:$0xff]
      %v354 = vld [vmem:[#allocation2 + $0xd0] sm:$0xff]
      %v355 = vld [vmem:[#allocation2 + $0xd8] sm:$0xff]
      %v356 = vld [vmem:[#allocation2 + $0xe0] sm:$0xff]
      %v357 = vld [vmem:[#allocation2 + $0xe8] sm:$0xff]
      %v358 = vld [vmem:[#allocation2 + $0xf0] sm:$0xff]
      %v359 = vld [vmem:[#allocation2 + $0xf8] sm:$0xff]
      %v360 = vld [vmem:[#allocation2 + $0x100] sm:$0xff]
      %v361 = vld [vmem:[#allocation2 + $0x108] sm:$0xff]
      %v362 = vld [vmem:[#allocation2 + $0x110] sm:$0xff]
      %v363 = vld [vmem:[#allocation2 + $0x118] sm:$0xff]
      %v364 = vld [vmem:[#allocation2 + $0x120] sm:$0xff]
      %v365 = vld [vmem:[#allocation2 + $0x128] sm:$0xff]
      %v366 = vld [vmem:[#allocation2 + $0x130] sm:$0xff]
      %v367 = vld [vmem:[#allocation2 + $0x138] sm:$0xff]
      %v368 = vld [vmem:[#allocation2 + $0x140] sm:$0xff]
      %v369 = vld [vmem:[#allocation2 + $0x148] sm:$0xff]
      %v370 = vld [vmem:[#allocation2 + $0x150] sm:$0xff]
      %v371 = vld [vmem:[#allocation2 + $0x158] sm:$0xff]
      %v372 = vld [vmem:[#allocation2 + $0x160] sm:$0xff]
      %v373 = vld [vmem:[#allocation2 + $0x168] sm:$0xff]
      %v374 = vld [vmem:[#allocation2 + $0x170] sm:$0xff]
      %v375 = vld [vmem:[#allocation2 + $0x178] sm:$0xff]
      %v376 = vld [vmem:[#allocation2 + $0x180] sm:$0xff]
      %v377 = vld [vmem:[#allocation2 + $0x188] sm:$0xff]
      %v378 = vld [vmem:[#allocation2 + $0x190] sm:$0xff]
      %v379 = vld [vmem:[#allocation2 + $0x198] sm:$0xff]
      %v380 = vld [vmem:[#allocation2 + $0x1a0] sm:$0xff]
      %v381 = vld [vmem:[#allocation2 + $0x1a8] sm:$0xff]
      %v382 = vld [vmem:[#allocation2 + $0x1b0] sm:$0xff]
      %v383 = vld [vmem:[#allocation2 + $0x1b8] sm:$0xff]
      %v384 = vld [vmem:[#allocation2 + $0x1c0] sm:$0xff]
      %v385 = vld [vmem:[#allocation2 + $0x1c8] sm:$0xff]
      %v386 = vld [vmem:[#allocation2 + $0x1d0] sm:$0xff]
      %v387 = vld [vmem:[#allocation2 + $0x1d8] sm:$0xff]
      %v388 = vld [vmem:[#allocation2 + $0x1e0] sm:$0xff]
      %v389 = vld [vmem:[#allocation2 + $0x1e8] sm:$0xff]
      %v390 = vld [vmem:[#allocation2 + $0x1f0] sm:$0xff]
      %v391 = vld [vmem:[#allocation2 + $0x1f8] sm:$0xff]
      %v392 = vld [vmem:[%s236] sm:$0xf]
      %v393 = vld [vmem:[%s236 + $0x4] sm:$0xf]
      %v394 = vld [vmem:[%s236 + $0x8] sm:$0xf]
      %v395 = vld [vmem:[%s236 + $0xc] sm:$0xf]
      %v396 = vld [vmem:[%s236 + $0x10] sm:$0xf]
      %v397 = vld [vmem:[%s236 + $0x14] sm:$0xf]
      %v398 = vld [vmem:[%s236 + $0x18] sm:$0xf]
      %v399 = vld [vmem:[%s236 + $0x1c] sm:$0xf]
      %v400 = vld [vmem:[%s236 + $0x20] sm:$0xf]
      %v401 = vld [vmem:[%s236 + $0x24] sm:$0xf]
      %v402 = vld [vmem:[%s236 + $0x28] sm:$0xf]
      %v403 = vld [vmem:[%s236 + $0x2c] sm:$0xf]
      %v404 = vld [vmem:[%s236 + $0x30] sm:$0xf]
      %v405 = vld [vmem:[%s236 + $0x34] sm:$0xf]
      %v406 = vld [vmem:[%s236 + $0x38] sm:$0xf]
      %v407 = vld [vmem:[%s236 + $0x3c] sm:$0xf]
      %v408 = vld [vmem:[%s236 + $0x40] sm:$0xf]
      %v409 = vld [vmem:[%s236 + $0x44] sm:$0xf]
      %v410 = vld [vmem:[%s236 + $0x48] sm:$0xf]
      %v411 = vld [vmem:[%s236 + $0x4c] sm:$0xf]
      %v412 = vld [vmem:[%s236 + $0x50] sm:$0xf]
      %v413 = vld [vmem:[%s236 + $0x54] sm:$0xf]
      %v414 = vld [vmem:[%s236 + $0x58] sm:$0xf]
      %v415 = vld [vmem:[%s236 + $0x5c] sm:$0xf]
      %v416 = vld [vmem:[%s236 + $0x60] sm:$0xf]
      %v417 = vld [vmem:[%s236 + $0x64] sm:$0xf]
      %v418 = vld [vmem:[%s236 + $0x68] sm:$0xf]
      %v419 = vld [vmem:[%s236 + $0x6c] sm:$0xf]
      %v420 = vld [vmem:[%s236 + $0x70] sm:$0xf]
      %v421 = vld [vmem:[%s236 + $0x74] sm:$0xf]
      %v422 = vld [vmem:[%s236 + $0x78] sm:$0xf]
      %v423 = vld [vmem:[%s236 + $0x7c] sm:$0xf]
      %v424 = vld [vmem:[%s236 + $0x80] sm:$0xf]
      %v425 = vld [vmem:[%s236 + $0x84] sm:$0xf]
      %v426 = vld [vmem:[%s236 + $0x88] sm:$0xf]
      %v427 = vld [vmem:[%s236 + $0x8c] sm:$0xf]
      %v428 = vld [vmem:[%s236 + $0x90] sm:$0xf]
      %v429 = vld [vmem:[%s236 + $0x94] sm:$0xf]
      %v430 = vld [vmem:[%s236 + $0x98] sm:$0xf]
      %v431 = vld [vmem:[%s236 + $0x9c] sm:$0xf]
      %v432 = vld [vmem:[%s236 + $0xa0] sm:$0xf]
      %v433 = vld [vmem:[%s236 + $0xa4] sm:$0xf]
      %v434 = vld [vmem:[%s236 + $0xa8] sm:$0xf]
      %v435 = vld [vmem:[%s236 + $0xac] sm:$0xf]
      %v436 = vld [vmem:[%s236 + $0xb0] sm:$0xf]
      %v437 = vld [vmem:[%s236 + $0xb4] sm:$0xf]
      %v438 = vld [vmem:[%s236 + $0xb8] sm:$0xf]
      %v439 = vld [vmem:[%s236 + $0xbc] sm:$0xf]
      %v440 = vld [vmem:[%s236 + $0xc0] sm:$0xf]
      %v441 = vld [vmem:[%s236 + $0xc4] sm:$0xf]
      %v442 = vld [vmem:[%s236 + $0xc8] sm:$0xf]
      %v443 = vld [vmem:[%s236 + $0xcc] sm:$0xf]
      %v444 = vld [vmem:[%s236 + $0xd0] sm:$0xf]
      %v445 = vld [vmem:[%s236 + $0xd4] sm:$0xf]
      %v446 = vld [vmem:[%s236 + $0xd8] sm:$0xf]
      %v447 = vld [vmem:[%s236 + $0xdc] sm:$0xf]
      %v448 = vld [vmem:[%s236 + $0xe0] sm:$0xf]
      %v449 = vld [vmem:[%s236 + $0xe4] sm:$0xf]
      %v450 = vld [vmem:[%s236 + $0xe8] sm:$0xf]
      %v451 = vld [vmem:[%s236 + $0xec] sm:$0xf]
      %v452 = vld [vmem:[%s236 + $0xf0] sm:$0xf]
      %v453 = vld [vmem:[%s236 + $0xf4] sm:$0xf]
      %v454 = vld [vmem:[%s236 + $0xf8] sm:$0xf]
      %v455 = vld [vmem:[%s236 + $0xfc] sm:$0xf]
      %v456 = vld [vmem:[%s245] sm:$0xf]
      %v457 = vld [vmem:[%s245 + $0x4] sm:$0xf]
      %v458 = vld [vmem:[%s245 + $0x8] sm:$0xf]
      %v459 = vld [vmem:[%s245 + $0xc] sm:$0xf]
      %v460 = vld [vmem:[%s245 + $0x10] sm:$0xf]
      %v461 = vld [vmem:[%s245 + $0x14] sm:$0xf]
      %v462 = vld [vmem:[%s245 + $0x18] sm:$0xf]
      %v463 = vld [vmem:[%s245 + $0x1c] sm:$0xf]
      %v464 = vld [vmem:[%s245 + $0x20] sm:$0xf]
      %v465 = vld [vmem:[%s245 + $0x24] sm:$0xf]
      %v466 = vld [vmem:[%s245 + $0x28] sm:$0xf]
      %v467 = vld [vmem:[%s245 + $0x2c] sm:$0xf]
      %v468 = vld [vmem:[%s245 + $0x30] sm:$0xf]
      %v469 = vld [vmem:[%s245 + $0x34] sm:$0xf]
      %v470 = vld [vmem:[%s245 + $0x38] sm:$0xf]
      %v471 = vld [vmem:[%s245 + $0x3c] sm:$0xf]
      %v536 = vunpack.c.l.b16 %v392
      %v537 = vunpack.c.l.b16 %v393
      %v538 = vunpack.c.l.b16 %v394
      %v539 = vunpack.c.l.b16 %v395
      %v540 = vunpack.c.l.b16 %v396
      %v541 = vunpack.c.l.b16 %v397
      %v542 = vunpack.c.l.b16 %v398
      %v543 = vunpack.c.l.b16 %v399
      %v544 = vunpack.c.l.b16 %v400
      %v545 = vunpack.c.l.b16 %v401
      %v546 = vunpack.c.l.b16 %v402
      %v547 = vunpack.c.l.b16 %v403
      %v548 = vunpack.c.l.b16 %v404
      %v549 = vunpack.c.l.b16 %v405
      %v550 = vunpack.c.l.b16 %v406
      %v551 = vunpack.c.l.b16 %v407
      %v552 = vunpack.c.l.b16 %v408
      %v553 = vunpack.c.l.b16 %v409
      %v554 = vunpack.c.l.b16 %v410
      %v555 = vunpack.c.l.b16 %v411
      %v556 = vunpack.c.l.b16 %v412
      %v557 = vunpack.c.l.b16 %v413
      %v558 = vunpack.c.l.b16 %v414
      %v559 = vunpack.c.l.b16 %v415
      %v560 = vunpack.c.l.b16 %v416
      %v561 = vunpack.c.l.b16 %v417
      %v562 = vunpack.c.l.b16 %v418
      %v563 = vunpack.c.l.b16 %v419
      %v564 = vunpack.c.l.b16 %v420
      %v565 = vunpack.c.l.b16 %v421
      %v566 = vunpack.c.l.b16 %v422
      %v567 = vunpack.c.l.b16 %v423
      %v568 = vunpack.c.l.b16 %v424
      %v569 = vunpack.c.l.b16 %v425
      %v570 = vunpack.c.l.b16 %v426
      %v571 = vunpack.c.l.b16 %v427
      %v572 = vunpack.c.l.b16 %v428
      %v573 = vunpack.c.l.b16 %v429
      %v574 = vunpack.c.l.b16 %v430
      %v575 = vunpack.c.l.b16 %v431
      %v576 = vunpack.c.l.b16 %v432
      %v577 = vunpack.c.l.b16 %v433
      %v578 = vunpack.c.l.b16 %v434
      %v579 = vunpack.c.l.b16 %v435
      %v580 = vunpack.c.l.b16 %v436
      %v581 = vunpack.c.l.b16 %v437
      %v582 = vunpack.c.l.b16 %v438
      %v583 = vunpack.c.l.b16 %v439
      %v584 = vunpack.c.l.b16 %v440
      %v585 = vunpack.c.l.b16 %v441
      %v586 = vunpack.c.l.b16 %v442
      %v587 = vunpack.c.l.b16 %v443
      %v588 = vunpack.c.l.b16 %v444
      %v589 = vunpack.c.l.b16 %v445
      %v590 = vunpack.c.l.b16 %v446
      %v591 = vunpack.c.l.b16 %v447
      %v592 = vunpack.c.l.b16 %v448
      %v593 = vunpack.c.l.b16 %v449
      %v594 = vunpack.c.l.b16 %v450
      %v595 = vunpack.c.l.b16 %v451
      %v596 = vunpack.c.l.b16 %v452
      %v597 = vunpack.c.l.b16 %v453
      %v598 = vunpack.c.l.b16 %v454
      %v599 = vunpack.c.l.b16 %v455
      %v600 = vpack.c.b16 %v537, %v536
      %v601 = vpack.c.b16 %v539, %v538
      %v602 = vpack.c.b16 %v541, %v540
      %v603 = vpack.c.b16 %v543, %v542
      %v604 = vpack.c.b16 %v545, %v544
      %v605 = vpack.c.b16 %v547, %v546
      %v606 = vpack.c.b16 %v549, %v548
      %v607 = vpack.c.b16 %v551, %v550
      %v608 = vpack.c.b16 %v553, %v552
      %v609 = vpack.c.b16 %v555, %v554
      %v610 = vpack.c.b16 %v557, %v556
      %v611 = vpack.c.b16 %v559, %v558
      %v612 = vpack.c.b16 %v561, %v560
      %v613 = vpack.c.b16 %v563, %v562
      %v614 = vpack.c.b16 %v565, %v564
      %v615 = vpack.c.b16 %v567, %v566
      %v616 = vpack.c.b16 %v569, %v568
      %v617 = vpack.c.b16 %v571, %v570
      %v618 = vpack.c.b16 %v573, %v572
      %v619 = vpack.c.b16 %v575, %v574
      %v620 = vpack.c.b16 %v577, %v576
      %v621 = vpack.c.b16 %v579, %v578
      %v622 = vpack.c.b16 %v581, %v580
      %v623 = vpack.c.b16 %v583, %v582
      %v624 = vpack.c.b16 %v585, %v584
      %v625 = vpack.c.b16 %v587, %v586
      %v626 = vpack.c.b16 %v589, %v588
      %v627 = vpack.c.b16 %v591, %v590
      %v628 = vpack.c.b16 %v593, %v592
      %v629 = vpack.c.b16 %v595, %v594
      %v630 = vpack.c.b16 %v597, %v596
      %v631 = vpack.c.b16 %v599, %v598
      %v680 = vunpack.c.l.b16 %v456
      %v681 = vunpack.c.l.b16 %v457
      %v682 = vunpack.c.l.b16 %v458
      %v683 = vunpack.c.l.b16 %v459
      %v684 = vunpack.c.l.b16 %v460
      %v685 = vunpack.c.l.b16 %v461
      %v686 = vunpack.c.l.b16 %v462
      %v687 = vunpack.c.l.b16 %v463
      %v688 = vunpack.c.l.b16 %v464
      %v689 = vunpack.c.l.b16 %v465
      %v690 = vunpack.c.l.b16 %v466
      %v691 = vunpack.c.l.b16 %v467
      %v692 = vunpack.c.l.b16 %v468
      %v693 = vunpack.c.l.b16 %v469
      %v694 = vunpack.c.l.b16 %v470
      %v695 = vunpack.c.l.b16 %v471
      %v696 = vpack.c.b16 %v681, %v680
      %v697 = vpack.c.b16 %v683, %v682
      %v698 = vpack.c.b16 %v685, %v684
      %v699 = vpack.c.b16 %v687, %v686
      %v700 = vpack.c.b16 %v689, %v688
      %v701 = vpack.c.b16 %v691, %v690
      %v702 = vpack.c.b16 %v693, %v692
      %v703 = vpack.c.b16 %v695, %v694
      %712 = vmatprep.subr.bf16.mxu0 0
      %713 = vmatpush1.bf16.msra.mxu0 %v696
      %714 = vmatprep.subr.bf16.mxu0 0
      %715 = vmatpush1.bf16.msra.mxu0 %v697
      %716 = vmatprep.subr.bf16.mxu0 0
      %717 = vmatpush1.bf16.msra.mxu0 %v698
      %718 = vmatprep.subr.bf16.mxu0 0
      %719 = vmatpush1.bf16.msra.mxu0 %v699
      %720 = vmatprep.subr.bf16.mxu0 0
      %721 = vmatpush1.bf16.msra.mxu0 %v700
      %722 = vmatprep.subr.bf16.mxu0 0
      %723 = vmatpush1.bf16.msra.mxu0 %v701
      %724 = vmatprep.subr.bf16.mxu0 0
      %725 = vmatpush1.bf16.msra.mxu0 %v702
      %726 = vmatprep.subr.bf16.mxu0 0
      %727 = vmatpush1.bf16.msra.mxu0 %v703
      %728 = vmatprep.subr.bf16.mxu0 0
      %729 = vmatpush1.bf16.msra.mxu0 0
      %730 = vmatprep.subr.bf16.mxu0 0
      %731 = vmatpush1.bf16.msra.mxu0 0
      %732 = vmatprep.subr.bf16.mxu0 0
      %733 = vmatpush1.bf16.msra.mxu0 0
      %734 = vmatprep.subr.bf16.mxu0 0
      %735 = vmatpush1.bf16.msra.mxu0 0
      %736 = vmatprep.subr.bf16.mxu0 0
      %737 = vmatpush1.bf16.msra.mxu0 0
      %738 = vmatprep.subr.bf16.mxu0 0
      %739 = vmatpush1.bf16.msra.mxu0 0
      %740 = vmatprep.subr.bf16.mxu0 0
      %741 = vmatpush1.bf16.msra.mxu0 0
      %742 = vmatprep.subr.bf16.mxu0 0
      %743 = vmatpush1.bf16.msra.mxu0 0
      %744 = vmatprep.mubr.bf16.mxu0 0
      %745 = vmatmul.mubr.bf16.gmra.mrb[0].mxu0 %v600
      %v746 = vpop.f32.mrb[0].mxu0
      %v747 = vadd.f32 0.0, %v746
      %v748 = vpop.f32.mrb[0].mxu0
      %v749 = vpop.f32.mrb[0].mxu0
      %v750 = vadd.f32 0.0, %v749
      %v751 = vpop.f32.mrb[0].mxu0
      %752 = vmatprep.mubr.bf16.mxu0 0
      %753 = vmatmul.mubr.bf16.gmra.mrb[0].mxu0 %v601
      %v754 = vpop.f32.mrb[0].mxu0
      %v755 = vadd.f32 0.0, %v754
      %v756 = vpop.f32.mrb[0].mxu0
      %v757 = vpop.f32.mrb[0].mxu0
      %v758 = vadd.f32 0.0, %v757
      %v759 = vpop.f32.mrb[0].mxu0
      %760 = vmatprep.mubr.bf16.mxu0 0
      %761 = vmatmul.mubr.bf16.gmra.mrb[0].mxu0 %v602
      %v762 = vpop.f32.mrb[0].mxu0
      %v763 = vadd.f32 0.0, %v762
      %v764 = vpop.f32.mrb[0].mxu0
      %v765 = vpop.f32.mrb[0].mxu0
      %v766 = vadd.f32 0.0, %v765
      %v767 = vpop.f32.mrb[0].mxu0
      %768 = vmatprep.mubr.bf16.mxu0 0
      %769 = vmatmul.mubr.bf16.gmra.mrb[0].mxu0 %v603
      %v770 = vpop.f32.mrb[0].mxu0
      %v771 = vadd.f32 0.0, %v770
      %v772 = vpop.f32.mrb[0].mxu0
      %v773 = vpop.f32.mrb[0].mxu0
      %v774 = vadd.f32 0.0, %v773
      %v775 = vpop.f32.mrb[0].mxu0
      %776 = vmatprep.mubr.bf16.mxu0 0
      %777 = vmatmul.mubr.bf16.gmra.mrb[0].mxu0 %v604
      %v778 = vpop.f32.mrb[0].mxu0
      %v779 = vadd.f32 0.0, %v778
      %v780 = vpop.f32.mrb[0].mxu0
      %v781 = vpop.f32.mrb[0].mxu0
      %v782 = vadd.f32 0.0, %v781
      %v783 = vpop.f32.mrb[0].mxu0
      %784 = vmatprep.mubr.bf16.mxu0 0
      %785 = vmatmul.mubr.bf16.gmra.mrb[0].mxu0 %v605
      %v786 = vpop.f32.mrb[0].mxu0
      %v787 = vadd.f32 0.0, %v786
      %v788 = vpop.f32.mrb[0].mxu0
      %v789 = vpop.f32.mrb[0].mxu0
      %v790 = vadd.f32 0.0, %v789
      %v791 = vpop.f32.mrb[0].mxu0
      %792 = vmatprep.mubr.bf16.mxu0 0
      %793 = vmatmul.mubr.bf16.gmra.mrb[0].mxu0 %v606
      %v794 = vpop.f32.mrb[0].mxu0
      %v795 = vadd.f32 0.0, %v794
      %v796 = vpop.f32.mrb[0].mxu0
      %v797 = vpop.f32.mrb[0].mxu0
      %v798 = vadd.f32 0.0, %v797
      %v799 = vpop.f32.mrb[0].mxu0
      %800 = vmatprep.mubr.bf16.mxu0 0
      %801 = vmatmul.mubr.bf16.gmra.mrb[0].mxu0 %v607
      %v802 = vpop.f32.mrb[0].mxu0
      %v803 = vadd.f32 0.0, %v802
      %v804 = vpop.f32.mrb[0].mxu0
      %v805 = vpop.f32.mrb[0].mxu0
      %v806 = vadd.f32 0.0, %v805
      %v807 = vpop.f32.mrb[0].mxu0
      %808 = vmatprep.mubr.bf16.mxu0 0
      %809 = vmatmul.mubr.bf16.gmra.mrb[0].mxu0 %v608
      %v810 = vpop.f32.mrb[0].mxu0
      %v811 = vadd.f32 0.0, %v810
      %v812 = vpop.f32.mrb[0].mxu0
      %v813 = vpop.f32.mrb[0].mxu0
      %v814 = vadd.f32 0.0, %v813
      %v815 = vpop.f32.mrb[0].mxu0
      %816 = vmatprep.mubr.bf16.mxu0 0
      %817 = vmatmul.mubr.bf16.gmra.mrb[0].mxu0 %v609
      %v818 = vpop.f32.mrb[0].mxu0
      %v819 = vadd.f32 0.0, %v818
      %v820 = vpop.f32.mrb[0].mxu0
      %v821 = vpop.f32.mrb[0].mxu0
      %v822 = vadd.f32 0.0, %v821
      %v823 = vpop.f32.mrb[0].mxu0
      %824 = vmatprep.mubr.bf16.mxu0 0
      %825 = vmatmul.mubr.bf16.gmra.mrb[0].mxu0 %v610
      %v826 = vpop.f32.mrb[0].mxu0
      %v827 = vadd.f32 0.0, %v826
      %v828 = vpop.f32.mrb[0].mxu0
      %v829 = vpop.f32.mrb[0].mxu0
      %v830 = vadd.f32 0.0, %v829
      %v831 = vpop.f32.mrb[0].mxu0
      %832 = vmatprep.mubr.bf16.mxu0 0
      %833 = vmatmul.mubr.bf16.gmra.mrb[0].mxu0 %v611
      %v834 = vpop.f32.mrb[0].mxu0
      %v835 = vadd.f32 0.0, %v834
      %v836 = vpop.f32.mrb[0].mxu0
      %v837 = vpop.f32.mrb[0].mxu0
      %v838 = vadd.f32 0.0, %v837
      %v839 = vpop.f32.mrb[0].mxu0
      %840 = vmatprep.mubr.bf16.mxu0 0
      %841 = vmatmul.mubr.bf16.gmra.mrb[0].mxu0 %v612
      %v842 = vpop.f32.mrb[0].mxu0
      %v843 = vadd.f32 0.0, %v842
      %v844 = vpop.f32.mrb[0].mxu0
      %v845 = vpop.f32.mrb[0].mxu0
      %v846 = vadd.f32 0.0, %v845
      %v847 = vpop.f32.mrb[0].mxu0
      %848 = vmatprep.mubr.bf16.mxu0 0
      %849 = vmatmul.mubr.bf16.gmra.mrb[0].mxu0 %v613
      %v850 = vpop.f32.mrb[0].mxu0
      %v851 = vadd.f32 0.0, %v850
      %v852 = vpop.f32.mrb[0].mxu0
      %v853 = vpop.f32.mrb[0].mxu0
      %v854 = vadd.f32 0.0, %v853
      %v855 = vpop.f32.mrb[0].mxu0
      %856 = vmatprep.mubr.bf16.mxu0 0
      %857 = vmatmul.mubr.bf16.gmra.mrb[0].mxu0 %v614
      %v858 = vpop.f32.mrb[0].mxu0
      %v859 = vadd.f32 0.0, %v858
      %v860 = vpop.f32.mrb[0].mxu0
      %v861 = vpop.f32.mrb[0].mxu0
      %v862 = vadd.f32 0.0, %v861
      %v863 = vpop.f32.mrb[0].mxu0
      %864 = vmatprep.mubr.bf16.mxu0 0
      %865 = vmatmul.mubr.bf16.gmra.mrb[0].mxu0 %v615
      %v866 = vpop.f32.mrb[0].mxu0
      %v867 = vadd.f32 0.0, %v866
      %v868 = vpop.f32.mrb[0].mxu0
      %v869 = vpop.f32.mrb[0].mxu0
      %v870 = vadd.f32 0.0, %v869
      %v871 = vpop.f32.mrb[0].mxu0
      %872 = vmatprep.mubr.bf16.mxu0 0
      %873 = vmatmul.mubr.bf16.gmra.mrb[0].mxu0 %v616
      %v874 = vpop.f32.mrb[0].mxu0
      %v875 = vadd.f32 0.0, %v874
      %v876 = vpop.f32.mrb[0].mxu0
      %v877 = vpop.f32.mrb[0].mxu0
      %v878 = vadd.f32 0.0, %v877
      %v879 = vpop.f32.mrb[0].mxu0
      %880 = vmatprep.mubr.bf16.mxu0 0
      %881 = vmatmul.mubr.bf16.gmra.mrb[0].mxu0 %v617
      %v882 = vpop.f32.mrb[0].mxu0
      %v883 = vadd.f32 0.0, %v882
      %v884 = vpop.f32.mrb[0].mxu0
      %v885 = vpop.f32.mrb[0].mxu0
      %v886 = vadd.f32 0.0, %v885
      %v887 = vpop.f32.mrb[0].mxu0
      %888 = vmatprep.mubr.bf16.mxu0 0
      %889 = vmatmul.mubr.bf16.gmra.mrb[0].mxu0 %v618
      %v890 = vpop.f32.mrb[0].mxu0
      %v891 = vadd.f32 0.0, %v890
      %v892 = vpop.f32.mrb[0].mxu0
      %v893 = vpop.f32.mrb[0].mxu0
      %v894 = vadd.f32 0.0, %v893
      %v895 = vpop.f32.mrb[0].mxu0
      %896 = vmatprep.mubr.bf16.mxu0 0
      %897 = vmatmul.mubr.bf16.gmra.mrb[0].mxu0 %v619
      %v898 = vpop.f32.mrb[0].mxu0
      %v899 = vadd.f32 0.0, %v898
      %v900 = vpop.f32.mrb[0].mxu0
      %v901 = vpop.f32.mrb[0].mxu0
      %v902 = vadd.f32 0.0, %v901
      %v903 = vpop.f32.mrb[0].mxu0
      %904 = vmatprep.mubr.bf16.mxu0 0
      %905 = vmatmul.mubr.bf16.gmra.mrb[0].mxu0 %v620
      %v906 = vpop.f32.mrb[0].mxu0
      %v907 = vadd.f32 0.0, %v906
      %v908 = vpop.f32.mrb[0].mxu0
      %v909 = vpop.f32.mrb[0].mxu0
      %v910 = vadd.f32 0.0, %v909
      %v911 = vpop.f32.mrb[0].mxu0
      %912 = vmatprep.mubr.bf16.mxu0 0
      %913 = vmatmul.mubr.bf16.gmra.mrb[0].mxu0 %v621
      %v914 = vpop.f32.mrb[0].mxu0
      %v915 = vadd.f32 0.0, %v914
      %v916 = vpop.f32.mrb[0].mxu0
      %v917 = vpop.f32.mrb[0].mxu0
      %v918 = vadd.f32 0.0, %v917
      %v919 = vpop.f32.mrb[0].mxu0
      %920 = vmatprep.mubr.bf16.mxu0 0
      %921 = vmatmul.mubr.bf16.gmra.mrb[0].mxu0 %v622
      %v922 = vpop.f32.mrb[0].mxu0
      %v923 = vadd.f32 0.0, %v922
      %v924 = vpop.f32.mrb[0].mxu0
      %v925 = vpop.f32.mrb[0].mxu0
      %v926 = vadd.f32 0.0, %v925
      %v927 = vpop.f32.mrb[0].mxu0
      %928 = vmatprep.mubr.bf16.mxu0 0
      %929 = vmatmul.mubr.bf16.gmra.mrb[0].mxu0 %v623
      %v930 = vpop.f32.mrb[0].mxu0
      %v931 = vadd.f32 0.0, %v930
      %v932 = vpop.f32.mrb[0].mxu0
      %v933 = vpop.f32.mrb[0].mxu0
      %v934 = vadd.f32 0.0, %v933
      %v935 = vpop.f32.mrb[0].mxu0
      %936 = vmatprep.mubr.bf16.mxu0 0
      %937 = vmatmul.mubr.bf16.gmra.mrb[0].mxu0 %v624
      %v938 = vpop.f32.mrb[0].mxu0
      %v939 = vadd.f32 0.0, %v938
      %v940 = vpop.f32.mrb[0].mxu0
      %v941 = vpop.f32.mrb[0].mxu0
      %v942 = vadd.f32 0.0, %v941
      %v943 = vpop.f32.mrb[0].mxu0
      %944 = vmatprep.mubr.bf16.mxu0 0
      %945 = vmatmul.mubr.bf16.gmra.mrb[0].mxu0 %v625
      %v946 = vpop.f32.mrb[0].mxu0
      %v947 = vadd.f32 0.0, %v946
      %v948 = vpop.f32.mrb[0].mxu0
      %v949 = vpop.f32.mrb[0].mxu0
      %v950 = vadd.f32 0.0, %v949
      %v951 = vpop.f32.mrb[0].mxu0
      %952 = vmatprep.mubr.bf16.mxu0 0
      %953 = vmatmul.mubr.bf16.gmra.mrb[0].mxu0 %v626
      %v954 = vpop.f32.mrb[0].mxu0
      %v955 = vadd.f32 0.0, %v954
      %v956 = vpop.f32.mrb[0].mxu0
      %v957 = vpop.f32.mrb[0].mxu0
      %v958 = vadd.f32 0.0, %v957
      %v959 = vpop.f32.mrb[0].mxu0
      %960 = vmatprep.mubr.bf16.mxu0 0
      %961 = vmatmul.mubr.bf16.gmra.mrb[0].mxu0 %v627
      %v962 = vpop.f32.mrb[0].mxu0
      %v963 = vadd.f32 0.0, %v962
      %v964 = vpop.f32.mrb[0].mxu0
      %v965 = vpop.f32.mrb[0].mxu0
      %v966 = vadd.f32 0.0, %v965
      %v967 = vpop.f32.mrb[0].mxu0
      %968 = vmatprep.mubr.bf16.mxu0 0
      %969 = vmatmul.mubr.bf16.gmra.mrb[0].mxu0 %v628
      %v970 = vpop.f32.mrb[0].mxu0
      %v971 = vadd.f32 0.0, %v970
      %v972 = vpop.f32.mrb[0].mxu0
      %v973 = vpop.f32.mrb[0].mxu0
      %v974 = vadd.f32 0.0, %v973
      %v975 = vpop.f32.mrb[0].mxu0
      %976 = vmatprep.mubr.bf16.mxu0 0
      %977 = vmatmul.mubr.bf16.gmra.mrb[0].mxu0 %v629
      %v978 = vpop.f32.mrb[0].mxu0
      %v979 = vadd.f32 0.0, %v978
      %v980 = vpop.f32.mrb[0].mxu0
      %v981 = vpop.f32.mrb[0].mxu0
      %v982 = vadd.f32 0.0, %v981
      %v983 = vpop.f32.mrb[0].mxu0
      %984 = vmatprep.mubr.bf16.mxu0 0
      %985 = vmatmul.mubr.bf16.gmra.mrb[0].mxu0 %v630
      %v986 = vpop.f32.mrb[0].mxu0
      %v987 = vadd.f32 0.0, %v986
      %v988 = vpop.f32.mrb[0].mxu0
      %v989 = vpop.f32.mrb[0].mxu0
      %v990 = vadd.f32 0.0, %v989
      %v991 = vpop.f32.mrb[0].mxu0
      %992 = vmatprep.mubr.bf16.mxu0 0
      %993 = vmatmul.mubr.bf16.gmra.mrb[0].mxu0 %v631
      %v994 = vpop.f32.mrb[0].mxu0
      %v995 = vadd.f32 0.0, %v994
      %v996 = vpop.f32.mrb[0].mxu0
      %v997 = vpop.f32.mrb[0].mxu0
      %v998 = vadd.f32 0.0, %v997
      %v999 = vpop.f32.mrb[0].mxu0
      %1000 = vdwg.mxu0
      %v1001 = vadd.f32 %v328, %v747
      %v1002 = vadd.f32 %v329, %v750
      %v1003 = vadd.f32 %v330, %v755
      %v1004 = vadd.f32 %v331, %v758
      %v1005 = vadd.f32 %v332, %v763
      %v1006 = vadd.f32 %v333, %v766
      %v1007 = vadd.f32 %v334, %v771
      %v1008 = vadd.f32 %v335, %v774
      %v1009 = vadd.f32 %v336, %v779
      %v1010 = vadd.f32 %v337, %v782
      %v1011 = vadd.f32 %v338, %v787
      %v1012 = vadd.f32 %v339, %v790
      %v1013 = vadd.f32 %v340, %v795
      %v1014 = vadd.f32 %v341, %v798
      %v1015 = vadd.f32 %v342, %v803
      %v1016 = vadd.f32 %v343, %v806
      %v1017 = vadd.f32 %v344, %v811
      %v1018 = vadd.f32 %v345, %v814
      %v1019 = vadd.f32 %v346, %v819
      %v1020 = vadd.f32 %v347, %v822
      %v1021 = vadd.f32 %v348, %v827
      %v1022 = vadd.f32 %v349, %v830
      %v1023 = vadd.f32 %v350, %v835
      %v1024 = vadd.f32 %v351, %v838
      %v1025 = vadd.f32 %v352, %v843
      %v1026 = vadd.f32 %v353, %v846
      %v1027 = vadd.f32 %v354, %v851
      %v1028 = vadd.f32 %v355, %v854
      %v1029 = vadd.f32 %v356, %v859
      %v1030 = vadd.f32 %v357, %v862
      %v1031 = vadd.f32 %v358, %v867
      %v1032 = vadd.f32 %v359, %v870
      %v1033 = vadd.f32 %v360, %v875
      %v1034 = vadd.f32 %v361, %v878
      %v1035 = vadd.f32 %v362, %v883
      %v1036 = vadd.f32 %v363, %v886
      %v1037 = vadd.f32 %v364, %v891
      %v1038 = vadd.f32 %v365, %v894
      %v1039 = vadd.f32 %v366, %v899
      %v1040 = vadd.f32 %v367, %v902
      %v1041 = vadd.f32 %v368, %v907
      %v1042 = vadd.f32 %v369, %v910
      %v1043 = vadd.f32 %v370, %v915
      %v1044 = vadd.f32 %v371, %v918
      %v1045 = vadd.f32 %v372, %v923
      %v1046 = vadd.f32 %v373, %v926
      %v1047 = vadd.f32 %v374, %v931
      %v1048 = vadd.f32 %v375, %v934
      %v1049 = vadd.f32 %v376, %v939
      %v1050 = vadd.f32 %v377, %v942
      %v1051 = vadd.f32 %v378, %v947
      %v1052 = vadd.f32 %v379, %v950
      %v1053 = vadd.f32 %v380, %v955
      %v1054 = vadd.f32 %v381, %v958
      %v1055 = vadd.f32 %v382, %v963
      %v1056 = vadd.f32 %v383, %v966
      %v1057 = vadd.f32 %v384, %v971
      %v1058 = vadd.f32 %v385, %v974
      %v1059 = vadd.f32 %v386, %v979
      %v1060 = vadd.f32 %v387, %v982
      %v1061 = vadd.f32 %v388, %v987
      %v1062 = vadd.f32 %v389, %v990
      %v1063 = vadd.f32 %v390, %v995
      %v1064 = vadd.f32 %v391, %v998
      %1065 = vst [vmem:[#allocation2] sm:$0xff] %v1001
      %1066 = vst [vmem:[#allocation2 + $0x8] sm:$0xff] %v1002
      %1067 = vst [vmem:[#allocation2 + $0x10] sm:$0xff] %v1003
      %1068 = vst [vmem:[#allocation2 + $0x18] sm:$0xff] %v1004
      %1069 = vst [vmem:[#allocation2 + $0x20] sm:$0xff] %v1005
      %1070 = vst [vmem:[#allocation2 + $0x28] sm:$0xff] %v1006
      %1071 = vst [vmem:[#allocation2 + $0x30] sm:$0xff] %v1007
      %1072 = vst [vmem:[#allocation2 + $0x38] sm:$0xff] %v1008
      %1073 = vst [vmem:[#allocation2 + $0x40] sm:$0xff] %v1009
      %1074 = vst [vmem:[#allocation2 + $0x48] sm:$0xff] %v1010
      %1075 = vst [vmem:[#allocation2 + $0x50] sm:$0xff] %v1011
      %1076 = vst [vmem:[#allocation2 + $0x58] sm:$0xff] %v1012
      %1077 = vst [vmem:[#allocation2 + $0x60] sm:$0xff] %v1013
      %1078 = vst [vmem:[#allocation2 + $0x68] sm:$0xff] %v1014
      %1079 = vst [vmem:[#allocation2 + $0x70] sm:$0xff] %v1015
      %1080 = vst [vmem:[#allocation2 + $0x78] sm:$0xff] %v1016
      %1081 = vst [vmem:[#allocation2 + $0x80] sm:$0xff] %v1017
      %1082 = vst [vmem:[#allocation2 + $0x88] sm:$0xff] %v1018
      %1083 = vst [vmem:[#allocation2 + $0x90] sm:$0xff] %v1019
      %1084 = vst [vmem:[#allocation2 + $0x98] sm:$0xff] %v1020
      %1085 = vst [vmem:[#allocation2 + $0xa0] sm:$0xff] %v1021
      %1086 = vst [vmem:[#allocation2 + $0xa8] sm:$0xff] %v1022
      %1087 = vst [vmem:[#allocation2 + $0xb0] sm:$0xff] %v1023
      %1088 = vst [vmem:[#allocation2 + $0xb8] sm:$0xff] %v1024
      %1089 = vst [vmem:[#allocation2 + $0xc0] sm:$0xff] %v1025
      %1090 = vst [vmem:[#allocation2 + $0xc8] sm:$0xff] %v1026
      %1091 = vst [vmem:[#allocation2 + $0xd0] sm:$0xff] %v1027
      %1092 = vst [vmem:[#allocation2 + $0xd8] sm:$0xff] %v1028
      %1093 = vst [vmem:[#allocation2 + $0xe0] sm:$0xff] %v1029
      %1094 = vst [vmem:[#allocation2 + $0xe8] sm:$0xff] %v1030
      %1095 = vst [vmem:[#allocation2 + $0xf0] sm:$0xff] %v1031
      %1096 = vst [vmem:[#allocation2 + $0xf8] sm:$0xff] %v1032
      %1097 = vst [vmem:[#allocation2 + $0x100] sm:$0xff] %v1033
      %1098 = vst [vmem:[#allocation2 + $0x108] sm:$0xff] %v1034
      %1099 = vst [vmem:[#allocation2 + $0x110] sm:$0xff] %v1035
      %1100 = vst [vmem:[#allocation2 + $0x118] sm:$0xff] %v1036
      %1101 = vst [vmem:[#allocation2 + $0x120] sm:$0xff] %v1037
      %1102 = vst [vmem:[#allocation2 + $0x128] sm:$0xff] %v1038
      %1103 = vst [vmem:[#allocation2 + $0x130] sm:$0xff] %v1039
      %1104 = vst [vmem:[#allocation2 + $0x138] sm:$0xff] %v1040
      %1105 = vst [vmem:[#allocation2 + $0x140] sm:$0xff] %v1041
      %1106 = vst [vmem:[#allocation2 + $0x148] sm:$0xff] %v1042
      %1107 = vst [vmem:[#allocation2 + $0x150] sm:$0xff] %v1043
      %1108 = vst [vmem:[#allocation2 + $0x158] sm:$0xff] %v1044
      %1109 = vst [vmem:[#allocation2 + $0x160] sm:$0xff] %v1045
      %1110 = vst [vmem:[#allocation2 + $0x168] sm:$0xff] %v1046
      %1111 = vst [vmem:[#allocation2 + $0x170] sm:$0xff] %v1047
      %1112 = vst [vmem:[#allocation2 + $0x178] sm:$0xff] %v1048
      %1113 = vst [vmem:[#allocation2 + $0x180] sm:$0xff] %v1049
      %1114 = vst [vmem:[#allocation2 + $0x188] sm:$0xff] %v1050
      %1115 = vst [vmem:[#allocation2 + $0x190] sm:$0xff] %v1051
      %1116 = vst [vmem:[#allocation2 + $0x198] sm:$0xff] %v1052
      %1117 = vst [vmem:[#allocation2 + $0x1a0] sm:$0xff] %v1053
      %1118 = vst [vmem:[#allocation2 + $0x1a8] sm:$0xff] %v1054
      %1119 = vst [vmem:[#allocation2 + $0x1b0] sm:$0xff] %v1055
      %1120 = vst [vmem:[#allocation2 + $0x1b8] sm:$0xff] %v1056
      %1121 = vst [vmem:[#allocation2 + $0x1c0] sm:$0xff] %v1057
      %1122 = vst [vmem:[#allocation2 + $0x1c8] sm:$0xff] %v1058
      %1123 = vst [vmem:[#allocation2 + $0x1d0] sm:$0xff] %v1059
      %1124 = vst [vmem:[#allocation2 + $0x1d8] sm:$0xff] %v1060
      %1125 = vst [vmem:[#allocation2 + $0x1e0] sm:$0xff] %v1061
      %1126 = vst [vmem:[#allocation2 + $0x1e8] sm:$0xff] %v1062
      %1127 = vst [vmem:[#allocation2 + $0x1f0] sm:$0xff] %v1063
      %1128 = vst [vmem:[#allocation2 + $0x1f8] sm:$0xff] %v1064
      // Predicated region
      $region37: #{discriminator_forward.8} parent=31 // pred_check
        %p1129 = pneg %p260
      $region38: #{discriminator_forward.8} parent=31 // pred_check_branch
        %1131 = sbr.rel (%p1129) target = $region40
      $region39: #{discriminator_forward.8} parent=31 // pred_region
        %v1132 = vld [vmem:[#allocation2] sm:$0xff]
        %v1133 = vld [vmem:[#allocation2 + $0x8] sm:$0xff]
        %v1134 = vld [vmem:[#allocation2 + $0x10] sm:$0xff]
        %v1135 = vld [vmem:[#allocation2 + $0x18] sm:$0xff]
        %v1136 = vld [vmem:[#allocation2 + $0x20] sm:$0xff]
        %v1137 = vld [vmem:[#allocation2 + $0x28] sm:$0xff]
        %v1138 = vld [vmem:[#allocation2 + $0x30] sm:$0xff]
        %v1139 = vld [vmem:[#allocation2 + $0x38] sm:$0xff]
        %v1140 = vld [vmem:[#allocation2 + $0x40] sm:$0xff]
        %v1141 = vld [vmem:[#allocation2 + $0x48] sm:$0xff]
        %v1142 = vld [vmem:[#allocation2 + $0x50] sm:$0xff]
        %v1143 = vld [vmem:[#allocation2 + $0x58] sm:$0xff]
        %v1144 = vld [vmem:[#allocation2 + $0x60] sm:$0xff]
        %v1145 = vld [vmem:[#allocation2 + $0x68] sm:$0xff]
        %v1146 = vld [vmem:[#allocation2 + $0x70] sm:$0xff]
        %v1147 = vld [vmem:[#allocation2 + $0x78] sm:$0xff]
        %v1148 = vld [vmem:[#allocation2 + $0x80] sm:$0xff]
        %v1149 = vld [vmem:[#allocation2 + $0x88] sm:$0xff]
        %v1150 = vld [vmem:[#allocation2 + $0x90] sm:$0xff]
        %v1151 = vld [vmem:[#allocation2 + $0x98] sm:$0xff]
        %v1152 = vld [vmem:[#allocation2 + $0xa0] sm:$0xff]
        %v1153 = vld [vmem:[#allocation2 + $0xa8] sm:$0xff]
        %v1154 = vld [vmem:[#allocation2 + $0xb0] sm:$0xff]
        %v1155 = vld [vmem:[#allocation2 + $0xb8] sm:$0xff]
        %v1156 = vld [vmem:[#allocation2 + $0xc0] sm:$0xff]
        %v1157 = vld [vmem:[#allocation2 + $0xc8] sm:$0xff]
        %v1158 = vld [vmem:[#allocation2 + $0xd0] sm:$0xff]
        %v1159 = vld [vmem:[#allocation2 + $0xd8] sm:$0xff]
        %v1160 = vld [vmem:[#allocation2 + $0xe0] sm:$0xff]
        %v1161 = vld [vmem:[#allocation2 + $0xe8] sm:$0xff]
        %v1162 = vld [vmem:[#allocation2 + $0xf0] sm:$0xff]
        %v1163 = vld [vmem:[#allocation2 + $0xf8] sm:$0xff]
        %v1164 = vld [vmem:[#allocation2 + $0x100] sm:$0xff]
        %v1165 = vld [vmem:[#allocation2 + $0x108] sm:$0xff]
        %v1166 = vld [vmem:[#allocation2 + $0x110] sm:$0xff]
        %v1167 = vld [vmem:[#allocation2 + $0x118] sm:$0xff]
        %v1168 = vld [vmem:[#allocation2 + $0x120] sm:$0xff]
        %v1169 = vld [vmem:[#allocation2 + $0x128] sm:$0xff]
        %v1170 = vld [vmem:[#allocation2 + $0x130] sm:$0xff]
        %v1171 = vld [vmem:[#allocation2 + $0x138] sm:$0xff]
        %v1172 = vld [vmem:[#allocation2 + $0x140] sm:$0xff]
        %v1173 = vld [vmem:[#allocation2 + $0x148] sm:$0xff]
        %v1174 = vld [vmem:[#allocation2 + $0x150] sm:$0xff]
        %v1175 = vld [vmem:[#allocation2 + $0x158] sm:$0xff]
        %v1176 = vld [vmem:[#allocation2 + $0x160] sm:$0xff]
        %v1177 = vld [vmem:[#allocation2 + $0x168] sm:$0xff]
        %v1178 = vld [vmem:[#allocation2 + $0x170] sm:$0xff]
        %v1179 = vld [vmem:[#allocation2 + $0x178] sm:$0xff]
        %v1180 = vld [vmem:[#allocation2 + $0x180] sm:$0xff]
        %v1181 = vld [vmem:[#allocation2 + $0x188] sm:$0xff]
        %v1182 = vld [vmem:[#allocation2 + $0x190] sm:$0xff]
        %v1183 = vld [vmem:[#allocation2 + $0x198] sm:$0xff]
        %v1184 = vld [vmem:[#allocation2 + $0x1a0] sm:$0xff]
        %v1185 = vld [vmem:[#allocation2 + $0x1a8] sm:$0xff]
        %v1186 = vld [vmem:[#allocation2 + $0x1b0] sm:$0xff]
        %v1187 = vld [vmem:[#allocation2 + $0x1b8] sm:$0xff]
        %v1188 = vld [vmem:[#allocation2 + $0x1c0] sm:$0xff]
        %v1189 = vld [vmem:[#allocation2 + $0x1c8] sm:$0xff]
        %v1190 = vld [vmem:[#allocation2 + $0x1d0] sm:$0xff]
        %v1191 = vld [vmem:[#allocation2 + $0x1d8] sm:$0xff]
        %v1192 = vld [vmem:[#allocation2 + $0x1e0] sm:$0xff]
        %v1193 = vld [vmem:[#allocation2 + $0x1e8] sm:$0xff]
        %v1194 = vld [vmem:[#allocation2 + $0x1f0] sm:$0xff]
        %v1195 = vld [vmem:[#allocation2 + $0x1f8] sm:$0xff]
        %v1196 = vld [vmem:[%s249] sm:$0x1]
        %v1198 = vlaneseq
        %v1199 = vshrl.u32 %v1198, 7
        %v1200 = vsub.s32 0, %v1199
        %v1201 = vrot.slane %v1196, %v1200
        %v1203 = vadd.f32 %v1132, %v1201
        %v1204 = vadd.f32 %v1133, %v1201
        %v1205 = vadd.f32 %v1134, %v1201
        %v1206 = vadd.f32 %v1135, %v1201
        %v1207 = vadd.f32 %v1136, %v1201
        %v1208 = vadd.f32 %v1137, %v1201
        %v1209 = vadd.f32 %v1138, %v1201
        %v1210 = vadd.f32 %v1139, %v1201
        %v1211 = vadd.f32 %v1140, %v1201
        %v1212 = vadd.f32 %v1141, %v1201
        %v1213 = vadd.f32 %v1142, %v1201
        %v1214 = vadd.f32 %v1143, %v1201
        %v1215 = vadd.f32 %v1144, %v1201
        %v1216 = vadd.f32 %v1145, %v1201
        %v1217 = vadd.f32 %v1146, %v1201
        %v1218 = vadd.f32 %v1147, %v1201
        %v1219 = vadd.f32 %v1148, %v1201
        %v1220 = vadd.f32 %v1149, %v1201
        %v1221 = vadd.f32 %v1150, %v1201
        %v1222 = vadd.f32 %v1151, %v1201
        %v1223 = vadd.f32 %v1152, %v1201
        %v1224 = vadd.f32 %v1153, %v1201
        %v1225 = vadd.f32 %v1154, %v1201
        %v1226 = vadd.f32 %v1155, %v1201
        %v1227 = vadd.f32 %v1156, %v1201
        %v1228 = vadd.f32 %v1157, %v1201
        %v1229 = vadd.f32 %v1158, %v1201
        %v1230 = vadd.f32 %v1159, %v1201
        %v1231 = vadd.f32 %v1160, %v1201
        %v1232 = vadd.f32 %v1161, %v1201
        %v1233 = vadd.f32 %v1162, %v1201
        %v1234 = vadd.f32 %v1163, %v1201
        %v1235 = vadd.f32 %v1164, %v1201
        %v1236 = vadd.f32 %v1165, %v1201
        %v1237 = vadd.f32 %v1166, %v1201
        %v1238 = vadd.f32 %v1167, %v1201
        %v1239 = vadd.f32 %v1168, %v1201
        %v1240 = vadd.f32 %v1169, %v1201
        %v1241 = vadd.f32 %v1170, %v1201
        %v1242 = vadd.f32 %v1171, %v1201
        %v1243 = vadd.f32 %v1172, %v1201
        %v1244 = vadd.f32 %v1173, %v1201
        %v1245 = vadd.f32 %v1174, %v1201
        %v1246 = vadd.f32 %v1175, %v1201
        %v1247 = vadd.f32 %v1176, %v1201
        %v1248 = vadd.f32 %v1177, %v1201
        %v1249 = vadd.f32 %v1178, %v1201
        %v1250 = vadd.f32 %v1179, %v1201
        %v1251 = vadd.f32 %v1180, %v1201
        %v1252 = vadd.f32 %v1181, %v1201
        %v1253 = vadd.f32 %v1182, %v1201
        %v1254 = vadd.f32 %v1183, %v1201
        %v1255 = vadd.f32 %v1184, %v1201
        %v1256 = vadd.f32 %v1185, %v1201
        %v1257 = vadd.f32 %v1186, %v1201
        %v1258 = vadd.f32 %v1187, %v1201
        %v1259 = vadd.f32 %v1188, %v1201
        %v1260 = vadd.f32 %v1189, %v1201
        %v1261 = vadd.f32 %v1190, %v1201
        %v1262 = vadd.f32 %v1191, %v1201
        %v1263 = vadd.f32 %v1192, %v1201
        %v1264 = vadd.f32 %v1193, %v1201
        %v1265 = vadd.f32 %v1194, %v1201
        %v1266 = vadd.f32 %v1195, %v1201
        %vm1267 = vcmp.gt.f32.partialorder %v1203, 0.0
        %vm1268 = vcmp.gt.f32.partialorder %v1204, 0.0
        %vm1269 = vcmp.gt.f32.partialorder %v1205, 0.0
        %vm1270 = vcmp.gt.f32.partialorder %v1206, 0.0
        %vm1271 = vcmp.gt.f32.partialorder %v1207, 0.0
        %vm1272 = vcmp.gt.f32.partialorder %v1208, 0.0
        %vm1273 = vcmp.gt.f32.partialorder %v1209, 0.0
        %vm1274 = vcmp.gt.f32.partialorder %v1210, 0.0
        %vm1275 = vcmp.gt.f32.partialorder %v1211, 0.0
        %vm1276 = vcmp.gt.f32.partialorder %v1212, 0.0
        %vm1277 = vcmp.gt.f32.partialorder %v1213, 0.0
        %vm1278 = vcmp.gt.f32.partialorder %v1214, 0.0
        %vm1279 = vcmp.gt.f32.partialorder %v1215, 0.0
        %vm1280 = vcmp.gt.f32.partialorder %v1216, 0.0
        %vm1281 = vcmp.gt.f32.partialorder %v1217, 0.0
        %vm1282 = vcmp.gt.f32.partialorder %v1218, 0.0
        %vm1283 = vcmp.gt.f32.partialorder %v1219, 0.0
        %vm1284 = vcmp.gt.f32.partialorder %v1220, 0.0
        %vm1285 = vcmp.gt.f32.partialorder %v1221, 0.0
        %vm1286 = vcmp.gt.f32.partialorder %v1222, 0.0
        %vm1287 = vcmp.gt.f32.partialorder %v1223, 0.0
        %vm1288 = vcmp.gt.f32.partialorder %v1224, 0.0
        %vm1289 = vcmp.gt.f32.partialorder %v1225, 0.0
        %vm1290 = vcmp.gt.f32.partialorder %v1226, 0.0
        %vm1291 = vcmp.gt.f32.partialorder %v1227, 0.0
        %vm1292 = vcmp.gt.f32.partialorder %v1228, 0.0
        %vm1293 = vcmp.gt.f32.partialorder %v1229, 0.0
        %vm1294 = vcmp.gt.f32.partialorder %v1230, 0.0
        %vm1295 = vcmp.gt.f32.partialorder %v1231, 0.0
        %vm1296 = vcmp.gt.f32.partialorder %v1232, 0.0
        %vm1297 = vcmp.gt.f32.partialorder %v1233, 0.0
        %vm1298 = vcmp.gt.f32.partialorder %v1234, 0.0
        %vm1299 = vcmp.gt.f32.partialorder %v1235, 0.0
        %vm1300 = vcmp.gt.f32.partialorder %v1236, 0.0
        %vm1301 = vcmp.gt.f32.partialorder %v1237, 0.0
        %vm1302 = vcmp.gt.f32.partialorder %v1238, 0.0
        %vm1303 = vcmp.gt.f32.partialorder %v1239, 0.0
        %vm1304 = vcmp.gt.f32.partialorder %v1240, 0.0
        %vm1305 = vcmp.gt.f32.partialorder %v1241, 0.0
        %vm1306 = vcmp.gt.f32.partialorder %v1242, 0.0
        %vm1307 = vcmp.gt.f32.partialorder %v1243, 0.0
        %vm1308 = vcmp.gt.f32.partialorder %v1244, 0.0
        %vm1309 = vcmp.gt.f32.partialorder %v1245, 0.0
        %vm1310 = vcmp.gt.f32.partialorder %v1246, 0.0
        %vm1311 = vcmp.gt.f32.partialorder %v1247, 0.0
        %vm1312 = vcmp.gt.f32.partialorder %v1248, 0.0
        %vm1313 = vcmp.gt.f32.partialorder %v1249, 0.0
        %vm1314 = vcmp.gt.f32.partialorder %v1250, 0.0
        %vm1315 = vcmp.gt.f32.partialorder %v1251, 0.0
        %vm1316 = vcmp.gt.f32.partialorder %v1252, 0.0
        %vm1317 = vcmp.gt.f32.partialorder %v1253, 0.0
        %vm1318 = vcmp.gt.f32.partialorder %v1254, 0.0
        %vm1319 = vcmp.gt.f32.partialorder %v1255, 0.0
        %vm1320 = vcmp.gt.f32.partialorder %v1256, 0.0
        %vm1321 = vcmp.gt.f32.partialorder %v1257, 0.0
        %vm1322 = vcmp.gt.f32.partialorder %v1258, 0.0
        %vm1323 = vcmp.gt.f32.partialorder %v1259, 0.0
        %vm1324 = vcmp.gt.f32.partialorder %v1260, 0.0
        %vm1325 = vcmp.gt.f32.partialorder %v1261, 0.0
        %vm1326 = vcmp.gt.f32.partialorder %v1262, 0.0
        %vm1327 = vcmp.gt.f32.partialorder %v1263, 0.0
        %vm1328 = vcmp.gt.f32.partialorder %v1264, 0.0
        %vm1329 = vcmp.gt.f32.partialorder %v1265, 0.0
        %vm1330 = vcmp.gt.f32.partialorder %v1266, 0.0
        %v1331 = vmul.f32 %v1203, 0.01
        %v1332 = vmul.f32 %v1204, 0.01
        %v1333 = vmul.f32 %v1205, 0.01
        %v1334 = vmul.f32 %v1206, 0.01
        %v1335 = vmul.f32 %v1207, 0.01
        %v1336 = vmul.f32 %v1208, 0.01
        %v1337 = vmul.f32 %v1209, 0.01
        %v1338 = vmul.f32 %v1210, 0.01
        %v1339 = vmul.f32 %v1211, 0.01
        %v1340 = vmul.f32 %v1212, 0.01
        %v1341 = vmul.f32 %v1213, 0.01
        %v1342 = vmul.f32 %v1214, 0.01
        %v1343 = vmul.f32 %v1215, 0.01
        %v1344 = vmul.f32 %v1216, 0.01
        %v1345 = vmul.f32 %v1217, 0.01
        %v1346 = vmul.f32 %v1218, 0.01
        %v1347 = vmul.f32 %v1219, 0.01
        %v1348 = vmul.f32 %v1220, 0.01
        %v1349 = vmul.f32 %v1221, 0.01
        %v1350 = vmul.f32 %v1222, 0.01
        %v1351 = vmul.f32 %v1223, 0.01
        %v1352 = vmul.f32 %v1224, 0.01
        %v1353 = vmul.f32 %v1225, 0.01
        %v1354 = vmul.f32 %v1226, 0.01
        %v1355 = vmul.f32 %v1227, 0.01
        %v1356 = vmul.f32 %v1228, 0.01
        %v1357 = vmul.f32 %v1229, 0.01
        %v1358 = vmul.f32 %v1230, 0.01
        %v1359 = vmul.f32 %v1231, 0.01
        %v1360 = vmul.f32 %v1232, 0.01
        %v1361 = vmul.f32 %v1233, 0.01
        %v1362 = vmul.f32 %v1234, 0.01
        %v1363 = vmul.f32 %v1235, 0.01
        %v1364 = vmul.f32 %v1236, 0.01
        %v1365 = vmul.f32 %v1237, 0.01
        %v1366 = vmul.f32 %v1238, 0.01
        %v1367 = vmul.f32 %v1239, 0.01
        %v1368 = vmul.f32 %v1240, 0.01
        %v1369 = vmul.f32 %v1241, 0.01
        %v1370 = vmul.f32 %v1242, 0.01
        %v1371 = vmul.f32 %v1243, 0.01
        %v1372 = vmul.f32 %v1244, 0.01
        %v1373 = vmul.f32 %v1245, 0.01
        %v1374 = vmul.f32 %v1246, 0.01
        %v1375 = vmul.f32 %v1247, 0.01
        %v1376 = vmul.f32 %v1248, 0.01
        %v1377 = vmul.f32 %v1249, 0.01
        %v1378 = vmul.f32 %v1250, 0.01
        %v1379 = vmul.f32 %v1251, 0.01
        %v1380 = vmul.f32 %v1252, 0.01
        %v1381 = vmul.f32 %v1253, 0.01
        %v1382 = vmul.f32 %v1254, 0.01
        %v1383 = vmul.f32 %v1255, 0.01
        %v1384 = vmul.f32 %v1256, 0.01
        %v1385 = vmul.f32 %v1257, 0.01
        %v1386 = vmul.f32 %v1258, 0.01
        %v1387 = vmul.f32 %v1259, 0.01
        %v1388 = vmul.f32 %v1260, 0.01
        %v1389 = vmul.f32 %v1261, 0.01
        %v1390 = vmul.f32 %v1262, 0.01
        %v1391 = vmul.f32 %v1263, 0.01
        %v1392 = vmul.f32 %v1264, 0.01
        %v1393 = vmul.f32 %v1265, 0.01
        %v1394 = vmul.f32 %v1266, 0.01
        %v1395 = vsel %vm1267, %v1203, %v1331
        %v1396 = vsel %vm1268, %v1204, %v1332
        %v1397 = vsel %vm1269, %v1205, %v1333
        %v1398 = vsel %vm1270, %v1206, %v1334
        %v1399 = vsel %vm1271, %v1207, %v1335
        %v1400 = vsel %vm1272, %v1208, %v1336
        %v1401 = vsel %vm1273, %v1209, %v1337
        %v1402 = vsel %vm1274, %v1210, %v1338
        %v1403 = vsel %vm1275, %v1211, %v1339
        %v1404 = vsel %vm1276, %v1212, %v1340
        %v1405 = vsel %vm1277, %v1213, %v1341
        %v1406 = vsel %vm1278, %v1214, %v1342
        %v1407 = vsel %vm1279, %v1215, %v1343
        %v1408 = vsel %vm1280, %v1216, %v1344
        %v1409 = vsel %vm1281, %v1217, %v1345
        %v1410 = vsel %vm1282, %v1218, %v1346
        %v1411 = vsel %vm1283, %v1219, %v1347
        %v1412 = vsel %vm1284, %v1220, %v1348
        %v1413 = vsel %vm1285, %v1221, %v1349
        %v1414 = vsel %vm1286, %v1222, %v1350
        %v1415 = vsel %vm1287, %v1223, %v1351
        %v1416 = vsel %vm1288, %v1224, %v1352
        %v1417 = vsel %vm1289, %v1225, %v1353
        %v1418 = vsel %vm1290, %v1226, %v1354
        %v1419 = vsel %vm1291, %v1227, %v1355
        %v1420 = vsel %vm1292, %v1228, %v1356
        %v1421 = vsel %vm1293, %v1229, %v1357
        %v1422 = vsel %vm1294, %v1230, %v1358
        %v1423 = vsel %vm1295, %v1231, %v1359
        %v1424 = vsel %vm1296, %v1232, %v1360
        %v1425 = vsel %vm1297, %v1233, %v1361
        %v1426 = vsel %vm1298, %v1234, %v1362
        %v1427 = vsel %vm1299, %v1235, %v1363
        %v1428 = vsel %vm1300, %v1236, %v1364
        %v1429 = vsel %vm1301, %v1237, %v1365
        %v1430 = vsel %vm1302, %v1238, %v1366
        %v1431 = vsel %vm1303, %v1239, %v1367
        %v1432 = vsel %vm1304, %v1240, %v1368
        %v1433 = vsel %vm1305, %v1241, %v1369
        %v1434 = vsel %vm1306, %v1242, %v1370
        %v1435 = vsel %vm1307, %v1243, %v1371
        %v1436 = vsel %vm1308, %v1244, %v1372
        %v1437 = vsel %vm1309, %v1245, %v1373
        %v1438 = vsel %vm1310, %v1246, %v1374
        %v1439 = vsel %vm1311, %v1247, %v1375
        %v1440 = vsel %vm1312, %v1248, %v1376
        %v1441 = vsel %vm1313, %v1249, %v1377
        %v1442 = vsel %vm1314, %v1250, %v1378
        %v1443 = vsel %vm1315, %v1251, %v1379
        %v1444 = vsel %vm1316, %v1252, %v1380
        %v1445 = vsel %vm1317, %v1253, %v1381
        %v1446 = vsel %vm1318, %v1254, %v1382
        %v1447 = vsel %vm1319, %v1255, %v1383
        %v1448 = vsel %vm1320, %v1256, %v1384
        %v1449 = vsel %vm1321, %v1257, %v1385
        %v1450 = vsel %vm1322, %v1258, %v1386
        %v1451 = vsel %vm1323, %v1259, %v1387
        %v1452 = vsel %vm1324, %v1260, %v1388
        %v1453 = vsel %vm1325, %v1261, %v1389
        %v1454 = vsel %vm1326, %v1262, %v1390
        %v1455 = vsel %vm1327, %v1263, %v1391
        %v1456 = vsel %vm1328, %v1264, %v1392
        %v1457 = vsel %vm1329, %v1265, %v1393
        %v1458 = vsel %vm1330, %v1266, %v1394
        %v1459 = vpack.c.bf16 %v1396, %v1395
        %v1460 = vpack.c.bf16 %v1398, %v1397
        %v1461 = vpack.c.bf16 %v1400, %v1399
        %v1462 = vpack.c.bf16 %v1402, %v1401
        %v1463 = vpack.c.bf16 %v1404, %v1403
        %v1464 = vpack.c.bf16 %v1406, %v1405
        %v1465 = vpack.c.bf16 %v1408, %v1407
        %v1466 = vpack.c.bf16 %v1410, %v1409
        %v1467 = vpack.c.bf16 %v1412, %v1411
        %v1468 = vpack.c.bf16 %v1414, %v1413
        %v1469 = vpack.c.bf16 %v1416, %v1415
        %v1470 = vpack.c.bf16 %v1418, %v1417
        %v1471 = vpack.c.bf16 %v1420, %v1419
        %v1472 = vpack.c.bf16 %v1422, %v1421
        %v1473 = vpack.c.bf16 %v1424, %v1423
        %v1474 = vpack.c.bf16 %v1426, %v1425
        %v1475 = vpack.c.bf16 %v1428, %v1427
        %v1476 = vpack.c.bf16 %v1430, %v1429
        %v1477 = vpack.c.bf16 %v1432, %v1431
        %v1478 = vpack.c.bf16 %v1434, %v1433
        %v1479 = vpack.c.bf16 %v1436, %v1435
        %v1480 = vpack.c.bf16 %v1438, %v1437
        %v1481 = vpack.c.bf16 %v1440, %v1439
        %v1482 = vpack.c.bf16 %v1442, %v1441
        %v1483 = vpack.c.bf16 %v1444, %v1443
        %v1484 = vpack.c.bf16 %v1446, %v1445
        %v1485 = vpack.c.bf16 %v1448, %v1447
        %v1486 = vpack.c.bf16 %v1450, %v1449
        %v1487 = vpack.c.bf16 %v1452, %v1451
        %v1488 = vpack.c.bf16 %v1454, %v1453
        %v1489 = vpack.c.bf16 %v1456, %v1455
        %v1490 = vpack.c.bf16 %v1458, %v1457
        %v1523 = vunpack.c.l.b16 %v1459
        %v1524 = vunpack.c.h.b16 %v1459
        %v1525 = vunpack.c.l.b16 %v1460
        %v1526 = vunpack.c.h.b16 %v1460
        %v1527 = vunpack.c.l.b16 %v1461
        %v1528 = vunpack.c.h.b16 %v1461
        %v1529 = vunpack.c.l.b16 %v1462
        %v1530 = vunpack.c.h.b16 %v1462
        %v1531 = vunpack.c.l.b16 %v1463
        %v1532 = vunpack.c.h.b16 %v1463
        %v1533 = vunpack.c.l.b16 %v1464
        %v1534 = vunpack.c.h.b16 %v1464
        %v1535 = vunpack.c.l.b16 %v1465
        %v1536 = vunpack.c.h.b16 %v1465
        %v1537 = vunpack.c.l.b16 %v1466
        %v1538 = vunpack.c.h.b16 %v1466
        %v1539 = vunpack.c.l.b16 %v1467
        %v1540 = vunpack.c.h.b16 %v1467
        %v1541 = vunpack.c.l.b16 %v1468
        %v1542 = vunpack.c.h.b16 %v1468
        %v1543 = vunpack.c.l.b16 %v1469
        %v1544 = vunpack.c.h.b16 %v1469
        %v1545 = vunpack.c.l.b16 %v1470
        %v1546 = vunpack.c.h.b16 %v1470
        %v1547 = vunpack.c.l.b16 %v1471
        %v1548 = vunpack.c.h.b16 %v1471
        %v1549 = vunpack.c.l.b16 %v1472
        %v1550 = vunpack.c.h.b16 %v1472
        %v1551 = vunpack.c.l.b16 %v1473
        %v1552 = vunpack.c.h.b16 %v1473
        %v1553 = vunpack.c.l.b16 %v1474
        %v1554 = vunpack.c.h.b16 %v1474
        %v1555 = vunpack.c.l.b16 %v1475
        %v1556 = vunpack.c.h.b16 %v1475
        %v1557 = vunpack.c.l.b16 %v1476
        %v1558 = vunpack.c.h.b16 %v1476
        %v1559 = vunpack.c.l.b16 %v1477
        %v1560 = vunpack.c.h.b16 %v1477
        %v1561 = vunpack.c.l.b16 %v1478
        %v1562 = vunpack.c.h.b16 %v1478
        %v1563 = vunpack.c.l.b16 %v1479
        %v1564 = vunpack.c.h.b16 %v1479
        %v1565 = vunpack.c.l.b16 %v1480
        %v1566 = vunpack.c.h.b16 %v1480
        %v1567 = vunpack.c.l.b16 %v1481
        %v1568 = vunpack.c.h.b16 %v1481
        %v1569 = vunpack.c.l.b16 %v1482
        %v1570 = vunpack.c.h.b16 %v1482
        %v1571 = vunpack.c.l.b16 %v1483
        %v1572 = vunpack.c.h.b16 %v1483
        %v1573 = vunpack.c.l.b16 %v1484
        %v1574 = vunpack.c.h.b16 %v1484
        %v1575 = vunpack.c.l.b16 %v1485
        %v1576 = vunpack.c.h.b16 %v1485
        %v1577 = vunpack.c.l.b16 %v1486
        %v1578 = vunpack.c.h.b16 %v1486
        %v1579 = vunpack.c.l.b16 %v1487
        %v1580 = vunpack.c.h.b16 %v1487
        %v1581 = vunpack.c.l.b16 %v1488
        %v1582 = vunpack.c.h.b16 %v1488
        %v1583 = vunpack.c.l.b16 %v1489
        %v1584 = vunpack.c.h.b16 %v1489
        %v1585 = vunpack.c.l.b16 %v1490
        %v1586 = vunpack.c.h.b16 %v1490
        %v1587 = vpack.c.b16 %v1523, %v1523
        %v1588 = vpack.c.b16 %v1524, %v1524
        %v1589 = vpack.c.b16 %v1525, %v1525
        %v1590 = vpack.c.b16 %v1526, %v1526
        %v1591 = vpack.c.b16 %v1527, %v1527
        %v1592 = vpack.c.b16 %v1528, %v1528
        %v1593 = vpack.c.b16 %v1529, %v1529
        %v1594 = vpack.c.b16 %v1530, %v1530
        %v1595 = vpack.c.b16 %v1531, %v1531
        %v1596 = vpack.c.b16 %v1532, %v1532
        %v1597 = vpack.c.b16 %v1533, %v1533
        %v1598 = vpack.c.b16 %v1534, %v1534
        %v1599 = vpack.c.b16 %v1535, %v1535
        %v1600 = vpack.c.b16 %v1536, %v1536
        %v1601 = vpack.c.b16 %v1537, %v1537
        %v1602 = vpack.c.b16 %v1538, %v1538
        %v1603 = vpack.c.b16 %v1539, %v1539
        %v1604 = vpack.c.b16 %v1540, %v1540
        %v1605 = vpack.c.b16 %v1541, %v1541
        %v1606 = vpack.c.b16 %v1542, %v1542
        %v1607 = vpack.c.b16 %v1543, %v1543
        %v1608 = vpack.c.b16 %v1544, %v1544
        %v1609 = vpack.c.b16 %v1545, %v1545
        %v1610 = vpack.c.b16 %v1546, %v1546
        %v1611 = vpack.c.b16 %v1547, %v1547
        %v1612 = vpack.c.b16 %v1548, %v1548
        %v1613 = vpack.c.b16 %v1549, %v1549
        %v1614 = vpack.c.b16 %v1550, %v1550
        %v1615 = vpack.c.b16 %v1551, %v1551
        %v1616 = vpack.c.b16 %v1552, %v1552
        %v1617 = vpack.c.b16 %v1553, %v1553
        %v1618 = vpack.c.b16 %v1554, %v1554
        %v1619 = vpack.c.b16 %v1555, %v1555
        %v1620 = vpack.c.b16 %v1556, %v1556
        %v1621 = vpack.c.b16 %v1557, %v1557
        %v1622 = vpack.c.b16 %v1558, %v1558
        %v1623 = vpack.c.b16 %v1559, %v1559
        %v1624 = vpack.c.b16 %v1560, %v1560
        %v1625 = vpack.c.b16 %v1561, %v1561
        %v1626 = vpack.c.b16 %v1562, %v1562
        %v1627 = vpack.c.b16 %v1563, %v1563
        %v1628 = vpack.c.b16 %v1564, %v1564
        %v1629 = vpack.c.b16 %v1565, %v1565
        %v1630 = vpack.c.b16 %v1566, %v1566
        %v1631 = vpack.c.b16 %v1567, %v1567
        %v1632 = vpack.c.b16 %v1568, %v1568
        %v1633 = vpack.c.b16 %v1569, %v1569
        %v1634 = vpack.c.b16 %v1570, %v1570
        %v1635 = vpack.c.b16 %v1571, %v1571
        %v1636 = vpack.c.b16 %v1572, %v1572
        %v1637 = vpack.c.b16 %v1573, %v1573
        %v1638 = vpack.c.b16 %v1574, %v1574
        %v1639 = vpack.c.b16 %v1575, %v1575
        %v1640 = vpack.c.b16 %v1576, %v1576
        %v1641 = vpack.c.b16 %v1577, %v1577
        %v1642 = vpack.c.b16 %v1578, %v1578
        %v1643 = vpack.c.b16 %v1579, %v1579
        %v1644 = vpack.c.b16 %v1580, %v1580
        %v1645 = vpack.c.b16 %v1581, %v1581
        %v1646 = vpack.c.b16 %v1582, %v1582
        %v1647 = vpack.c.b16 %v1583, %v1583
        %v1648 = vpack.c.b16 %v1584, %v1584
        %v1649 = vpack.c.b16 %v1585, %v1585
        %v1650 = vpack.c.b16 %v1586, %v1586
        %1715 = vst [vmem:[%s257] sm:$0xf] %v1587
        %1716 = vst [vmem:[%s257 + $0x4] sm:$0xf] %v1588
        %1717 = vst [vmem:[%s257 + $0x8] sm:$0xf] %v1589
        %1718 = vst [vmem:[%s257 + $0xc] sm:$0xf] %v1590
        %1719 = vst [vmem:[%s257 + $0x10] sm:$0xf] %v1591
        %1720 = vst [vmem:[%s257 + $0x14] sm:$0xf] %v1592
        %1721 = vst [vmem:[%s257 + $0x18] sm:$0xf] %v1593
        %1722 = vst [vmem:[%s257 + $0x1c] sm:$0xf] %v1594
        %1723 = vst [vmem:[%s257 + $0x20] sm:$0xf] %v1595
        %1724 = vst [vmem:[%s257 + $0x24] sm:$0xf] %v1596
        %1725 = vst [vmem:[%s257 + $0x28] sm:$0xf] %v1597
        %1726 = vst [vmem:[%s257 + $0x2c] sm:$0xf] %v1598
        %1727 = vst [vmem:[%s257 + $0x30] sm:$0xf] %v1599
        %1728 = vst [vmem:[%s257 + $0x34] sm:$0xf] %v1600
        %1729 = vst [vmem:[%s257 + $0x38] sm:$0xf] %v1601
        %1730 = vst [vmem:[%s257 + $0x3c] sm:$0xf] %v1602
        %1731 = vst [vmem:[%s257 + $0x40] sm:$0xf] %v1603
        %1732 = vst [vmem:[%s257 + $0x44] sm:$0xf] %v1604
        %1733 = vst [vmem:[%s257 + $0x48] sm:$0xf] %v1605
        %1734 = vst [vmem:[%s257 + $0x4c] sm:$0xf] %v1606
        %1735 = vst [vmem:[%s257 + $0x50] sm:$0xf] %v1607
        %1736 = vst [vmem:[%s257 + $0x54] sm:$0xf] %v1608
        %1737 = vst [vmem:[%s257 + $0x58] sm:$0xf] %v1609
        %1738 = vst [vmem:[%s257 + $0x5c] sm:$0xf] %v1610
        %1739 = vst [vmem:[%s257 + $0x60] sm:$0xf] %v1611
        %1740 = vst [vmem:[%s257 + $0x64] sm:$0xf] %v1612
        %1741 = vst [vmem:[%s257 + $0x68] sm:$0xf] %v1613
        %1742 = vst [vmem:[%s257 + $0x6c] sm:$0xf] %v1614
        %1743 = vst [vmem:[%s257 + $0x70] sm:$0xf] %v1615
        %1744 = vst [vmem:[%s257 + $0x74] sm:$0xf] %v1616
        %1745 = vst [vmem:[%s257 + $0x78] sm:$0xf] %v1617
        %1746 = vst [vmem:[%s257 + $0x7c] sm:$0xf] %v1618
        %1747 = vst [vmem:[%s257 + $0x80] sm:$0xf] %v1619
        %1748 = vst [vmem:[%s257 + $0x84] sm:$0xf] %v1620
        %1749 = vst [vmem:[%s257 + $0x88] sm:$0xf] %v1621
        %1750 = vst [vmem:[%s257 + $0x8c] sm:$0xf] %v1622
        %1751 = vst [vmem:[%s257 + $0x90] sm:$0xf] %v1623
        %1752 = vst [vmem:[%s257 + $0x94] sm:$0xf] %v1624
        %1753 = vst [vmem:[%s257 + $0x98] sm:$0xf] %v1625
        %1754 = vst [vmem:[%s257 + $0x9c] sm:$0xf] %v1626
        %1755 = vst [vmem:[%s257 + $0xa0] sm:$0xf] %v1627
        %1756 = vst [vmem:[%s257 + $0xa4] sm:$0xf] %v1628
        %1757 = vst [vmem:[%s257 + $0xa8] sm:$0xf] %v1629
        %1758 = vst [vmem:[%s257 + $0xac] sm:$0xf] %v1630
        %1759 = vst [vmem:[%s257 + $0xb0] sm:$0xf] %v1631
        %1760 = vst [vmem:[%s257 + $0xb4] sm:$0xf] %v1632
        %1761 = vst [vmem:[%s257 + $0xb8] sm:$0xf] %v1633
        %1762 = vst [vmem:[%s257 + $0xbc] sm:$0xf] %v1634
        %1763 = vst [vmem:[%s257 + $0xc0] sm:$0xf] %v1635
        %1764 = vst [vmem:[%s257 + $0xc4] sm:$0xf] %v1636
        %1765 = vst [vmem:[%s257 + $0xc8] sm:$0xf] %v1637
        %1766 = vst [vmem:[%s257 + $0xcc] sm:$0xf] %v1638
        %1767 = vst [vmem:[%s257 + $0xd0] sm:$0xf] %v1639
        %1768 = vst [vmem:[%s257 + $0xd4] sm:$0xf] %v1640
        %1769 = vst [vmem:[%s257 + $0xd8] sm:$0xf] %v1641
        %1770 = vst [vmem:[%s257 + $0xdc] sm:$0xf] %v1642
        %1771 = vst [vmem:[%s257 + $0xe0] sm:$0xf] %v1643
        %1772 = vst [vmem:[%s257 + $0xe4] sm:$0xf] %v1644
        %1773 = vst [vmem:[%s257 + $0xe8] sm:$0xf] %v1645
        %1774 = vst [vmem:[%s257 + $0xec] sm:$0xf] %v1646
        %1775 = vst [vmem:[%s257 + $0xf0] sm:$0xf] %v1647
        %1776 = vst [vmem:[%s257 + $0xf4] sm:$0xf] %v1648
        %1777 = vst [vmem:[%s257 + $0xf8] sm:$0xf] %v1649
        %1778 = vst [vmem:[%s257 + $0xfc] sm:$0xf] %v1650
      $region40: #{discriminator_forward.8} parent=31 // pred_fallthru
        _
      %s1779 = smul.u32 64, %s19
      %p1780 = scmp.lt.s32.totalorder %s1779, 255
      %s1781 = scalar_select %p1780, %s1779, 255
      %p1782 = scmp.lt.s32.totalorder %s20, 0
      %s1783 = scalar_select %p1782, %s20, 0
      %s1784 = sadd.s32 %s1783, %s1781
      %s1785 = smul.addr %s1784, 4
      %s1786 = scalar_lea.vmem %s3, %s1785
      // Predicated region
      $region41: #{discriminator_forward.8} parent=31 // pred_check
        %p1787 = pneg %p135
      $region42: #{discriminator_forward.8} parent=31 // pred_check_branch
        %1789 = sbr.rel (%p1787) target = $region44
      $region43: #{discriminator_forward.8} parent=31 // pred_region
        %s1790 = smul.u32 64, %s19
      $region44: #{discriminator_forward.8} parent=31 // pred_fallthru
        _
    $region32: #{discriminator_forward.8} parent=5 // pred_fallthru
      _
    %p1791 = scmp.le.s32.totalorder 2, %s9
    // Predicated region
    $region45: #{discriminator_forward.8} parent=5 // pred_check
      %p1792 = pneg %p1791
    $region46: #{discriminator_forward.8} parent=5 // pred_check_branch
      %1794 = sbr.rel (%p1792) target = $region48
    $region47: #{discriminator_forward.8} parent=5 // pred_region
      %s1795 = ssub.s32 %s9, 2
      // Predicated region
      $region49: #{discriminator_forward.8} parent=47 // pred_check
        %p1796 = pneg %p141
      $region50: #{discriminator_forward.8} parent=47 // pred_check_branch
        %1798 = sbr.rel (%p1796) target = $region52
      $region51: #{discriminator_forward.8} parent=47 // pred_region
        %s1799 = smul.u32 64, %s22
        %p1800 = scmp.lt.s32.totalorder %s1799, 255
        %s1801 = scalar_select %p1800, %s1799, 255
        %p1802 = scmp.lt.s32.totalorder %s23, 0
        %s1803 = scalar_select %p1802, %s23, 0
        %s1804 = sadd.s32 %s1803, %s1801
        %s1805 = smul.addr %s1804, 4
        %s1806 = scalar_lea.vmem %s3, %s1805
      $region52: #{discriminator_forward.8} parent=47 // pred_fallthru
        _
    $region48: #{discriminator_forward.8} parent=5 // pred_fallthru
      _
  $region6: #{discriminator_forward.8} parent=0 // loop_footer
    %s13 = sadd.s32 1, %s9
  $region7: #{discriminator_forward.8} parent=0 // loop_footer_branch
    %8 = sbr.rel target = $region3
  $region8: #{discriminator_forward.8} parent=0 // loop_exit
    _

// kernel: discriminator_forward.9
$region0: #{discriminator_forward.9}
  #allocation0 [shape = 'u32[]', space=smem, size = 0x4, offset = 0x4, fixed_abs, tag = 'smem constant byte address 0x4 - core index']
  #allocation1 [shape = 'u32[144,128]{1,0:T(1,128)}', space=vmem, size = 0x12000, scoped, tag = 'internal scratch']
  #allocation2 [shape = 'f32[256,128]{1,0:T(8,128)}', space=vmem, size = 0x20000, scoped, tag = 'scratch operand']
  %s0 = inlined_call_operand.vmem [shape: bf16[512,128], index: 0, kind: input, shape index: {}]
  %s1 = inlined_call_operand.vmem [shape: bf16[128,128], index: 1, kind: input, shape index: {}]
  %s2 = inlined_call_operand.vmem [shape: f32[1,128], index: 2, kind: input, shape index: {}]
  %s3 = inlined_call_operand.vmem [shape: bf16[512,128], index: 3, kind: output, shape index: {}]
  %s4 = sld [smem:[#allocation0]]
  $region53: #{discriminator_forward.9} parent=0
    _
  %s6 = ssub.s32 1, %s4
  %s7 = scalar_select 0, %s6, %s4
  loop: start=0, step=1, limit=4
  $region2: #{discriminator_forward.9} parent=0 // loop_pre_header
    _
  $region3: #{discriminator_forward.9} parent=0 // loop_header
    %s9 = sphi 0, %s13
    %p10 = scmp.ge.s32.totalorder %s9, 4
    %s16 = sphi 0, %s35
    %s17 = sphi 0, %s31
    %s18 = sphi 0, %s27
    %s19 = sphi 0, %s16
    %s20 = sphi 0, %s17
    %s21 = sphi 0, %s18
    %s22 = sphi 0, %s19
    %s23 = sphi 0, %s20
    %s24 = sphi 0, %s21
    %s40 = sphi 0, %s42
    %s43 = sphi 0, %s40
    %s44 = sphi 0, %s43
    %s60 = sphi 0, %s44
    %s68 = sphi 0, %s70
    %s71 = sphi 0, %s68
    %s72 = sphi 0, %s71
    %s88 = sphi 0, %s72
    %s94 = sphi 0, %s96
    %s97 = sphi 0, %s94
    %s98 = sphi 0, %s97
    %s114 = sphi 0, %s98
    %s122 = sphi 0, %s124
    %s125 = sphi 0, %s122
    %s126 = sphi 0, %s125
    %s142 = sphi 0, %s126
  $region4: #{discriminator_forward.9} parent=0 // loop_header_branch
    %12 = sbr.rel (%p10) target = $region8
  $region5: #{discriminator_forward.9} parent=0 // loop_body
    %s14 = ssub.s32 %s9, 1
    %s15 = ssub.s32 %s9, 2
    %s25 = sadd.s32 1, %s18
    %p26 = scmp.ge.s32.totalorder %s25, 1
    %s27 = scalar_select %p26, 0, %s25
    %s28 = sadd.s32 1, %s17
    %s29 = scalar_select %p26, %s28, %s17
    %p30 = scmp.ge.s32.totalorder %s29, 1
    %s31 = scalar_select %p30, 0, %s29
    %s32 = sadd.s32 1, %s16
    %s33 = scalar_select %p30, %s32, %s16
    %p34 = scmp.ge.s32.totalorder %s33, 2
    %s35 = scalar_select %p34, 0, %s33
    %s36 = ssub.s32 %s16, %s35
    %s37 = ssub.s32 %s18, %s27
    %s38 = sor.u32 %s36, %s37
    %p39 = scmp.eq.s32.totalorder %s38, 0
    %s41 = sadd.s32 %s40, 1
    %s42 = scalar_select %p39, %s40, %s41
    %p45 = pneg %p39
    %p46 = scmp.eq.s32.totalorder %s9, 1
    %p47 = por %p45, %p46
    %p48 = scmp.ne.s32.totalorder %s40, %s43
    %p49 = scmp.eq.s32.totalorder %s9, 0
    %p50 = por %p48, %p49
    %p51 = scmp.ne.s32.totalorder %s40, %s43
    %p52 = scmp.eq.s32.totalorder %s14, 1
    %p53 = por %p51, %p52
    %p54 = scmp.ne.s32.totalorder %s43, %s44
    %p55 = scmp.eq.s32.totalorder %s14, 0
    %p56 = por %p54, %p55
    %p57 = scmp.ne.s32.totalorder %s43, %s44
    %p58 = scmp.eq.s32.totalorder %s15, 1
    %p59 = por %p57, %p58
    %p61 = scmp.ne.s32.totalorder %s44, %s60
    %p62 = scmp.eq.s32.totalorder %s15, 0
    %p63 = por %p61, %p62
    %s64 = ssub.s32 %s18, %s27
    %s65 = ssub.s32 %s17, %s31
    %s66 = sor.u32 %s64, %s65
    %p67 = scmp.eq.s32.totalorder %s66, 0
    %s69 = sadd.s32 %s68, 1
    %s70 = scalar_select %p67, %s68, %s69
    %p73 = pneg %p67
    %p74 = scmp.eq.s32.totalorder %s9, 1
    %p75 = por %p73, %p74
    %p76 = scmp.ne.s32.totalorder %s68, %s71
    %p77 = scmp.eq.s32.totalorder %s9, 0
    %p78 = por %p76, %p77
    %p79 = scmp.ne.s32.totalorder %s68, %s71
    %p80 = scmp.eq.s32.totalorder %s14, 1
    %p81 = por %p79, %p80
    %p82 = scmp.ne.s32.totalorder %s71, %s72
    %p83 = scmp.eq.s32.totalorder %s14, 0
    %p84 = por %p82, %p83
    %p85 = scmp.ne.s32.totalorder %s71, %s72
    %p86 = scmp.eq.s32.totalorder %s15, 1
    %p87 = por %p85, %p86
    %p89 = scmp.ne.s32.totalorder %s72, %s88
    %p90 = scmp.eq.s32.totalorder %s15, 0
    %p91 = por %p89, %p90
    %s92 = ssub.s32 %s17, %s31
    %p93 = scmp.eq.s32.totalorder %s92, 0
    %s95 = sadd.s32 %s94, 1
    %s96 = scalar_select %p93, %s94, %s95
    %p99 = pneg %p93
    %p100 = scmp.eq.s32.totalorder %s9, 1
    %p101 = por %p99, %p100
    %p102 = scmp.ne.s32.totalorder %s94, %s97
    %p103 = scmp.eq.s32.totalorder %s9, 0
    %p104 = por %p102, %p103
    %p105 = scmp.ne.s32.totalorder %s94, %s97
    %p106 = scmp.eq.s32.totalorder %s14, 1
    %p107 = por %p105, %p106
    %p108 = scmp.ne.s32.totalorder %s97, %s98
    %p109 = scmp.eq.s32.totalorder %s14, 0
    %p110 = por %p108, %p109
    %p111 = scmp.ne.s32.totalorder %s97, %s98
    %p112 = scmp.eq.s32.totalorder %s15, 1
    %p113 = por %p111, %p112
    %p115 = scmp.ne.s32.totalorder %s98, %s114
    %p116 = scmp.eq.s32.totalorder %s15, 0
    %p117 = por %p115, %p116
    %s118 = ssub.s32 %s16, %s35
    %s119 = ssub.s32 %s17, %s31
    %s120 = sor.u32 %s118, %s119
    %p121 = scmp.eq.s32.totalorder %s120, 0
    %s123 = sadd.s32 %s122, 1
    %s124 = scalar_select %p121, %s122, %s123
    %p127 = pneg %p121
    %p128 = scmp.eq.s32.totalorder %s9, 1
    %p129 = por %p127, %p128
    %p130 = scmp.ne.s32.totalorder %s122, %s125
    %p131 = scmp.eq.s32.totalorder %s9, 0
    %p132 = por %p130, %p131
    %p133 = scmp.ne.s32.totalorder %s122, %s125
    %p134 = scmp.eq.s32.totalorder %s14, 1
    %p135 = por %p133, %p134
    %p136 = scmp.ne.s32.totalorder %s125, %s126
    %p137 = scmp.eq.s32.totalorder %s14, 0
    %p138 = por %p136, %p137
    %p139 = scmp.ne.s32.totalorder %s125, %s126
    %p140 = scmp.eq.s32.totalorder %s15, 1
    %p141 = por %p139, %p140
    %p143 = scmp.ne.s32.totalorder %s126, %s142
    %p144 = scmp.eq.s32.totalorder %s15, 0
    %p145 = por %p143, %p144
    %p146 = scmp.le.s32.totalorder 1, %s9
    %p147 = scmp.lt.s32.totalorder %s9, 3
    %p148 = pnand %p146, %p147
    %p149 = pneg %p148
    // Predicated region
    $region9: #{discriminator_forward.9} parent=5 // pred_check
      _
    $region10: #{discriminator_forward.9} parent=5 // pred_check_branch
      %151 = sbr.rel (%p148) target = $region12
    $region11: #{discriminator_forward.9} parent=5 // pred_region
      %s152 = ssub.s32 %s9, 1
      // Predicated region
      $region13: #{discriminator_forward.9} parent=11 // pred_check
        %p153 = pneg %p84
      $region14: #{discriminator_forward.9} parent=11 // pred_check_branch
        %155 = sbr.rel (%p153) target = $region16
      $region15: #{discriminator_forward.9} parent=11 // pred_region
        %s156 = smul.u32 16, %s21
        %p157 = scmp.lt.s32.totalorder %s156, 15
        %s158 = scalar_select %p157, %s156, 15
        %p159 = scmp.lt.s32.totalorder %s20, 0
        %s160 = scalar_select %p159, %s20, 0
        %s161 = sadd.s32 %s160, %s158
        %s162 = smul.addr %s161, 4
        %s163 = scalar_lea.vmem %s1, %s162
        %s164 = smul.u32 16, %s21
      $region16: #{discriminator_forward.9} parent=11 // pred_fallthru
        _
      // Predicated region
      $region17: #{discriminator_forward.9} parent=11 // pred_check
        %p165 = pneg %p110
      $region18: #{discriminator_forward.9} parent=11 // pred_check_branch
        %167 = sbr.rel (%p165) target = $region20
      $region19: #{discriminator_forward.9} parent=11 // pred_region
        %p168 = scmp.lt.s32.totalorder %s20, 0
        %s169 = scalar_select %p168, %s20, 0
        %s170 = scalar_lea.vmem %s2, %s169
      $region20: #{discriminator_forward.9} parent=11 // pred_fallthru
        _
    $region12: #{discriminator_forward.9} parent=5 // pred_fallthru
      _
    %p171 = scmp.lt.s32.totalorder %s9, 2
    // Predicated region
    $region21: #{discriminator_forward.9} parent=5 // pred_check
      %p172 = pneg %p171
    $region22: #{discriminator_forward.9} parent=5 // pred_check_branch
      %174 = sbr.rel (%p172) target = $region24
    $region23: #{discriminator_forward.9} parent=5 // pred_region
      // Predicated region
      $region25: #{discriminator_forward.9} parent=23 // pred_check
        %p175 = pneg %p50
      $region26: #{discriminator_forward.9} parent=23 // pred_check_branch
        %177 = sbr.rel (%p175) target = $region28
      $region27: #{discriminator_forward.9} parent=23 // pred_region
        %s178 = smul.u32 32, %s16
        %p179 = scmp.lt.s32.totalorder %s178, 63
        %s180 = scalar_select %p179, %s178, 63
        %p181 = scmp.lt.s32.totalorder %s18, 0
        %s182 = scalar_select %p181, %s18, 0
        %s183 = sadd.s32 %s182, %s180
        %s184 = smul.addr %s183, 4
        %s185 = scalar_lea.vmem %s0, %s184
        %s186 = smul.u32 32, %s16
      $region28: #{discriminator_forward.9} parent=23 // pred_fallthru
        _
    $region24: #{discriminator_forward.9} parent=5 // pred_fallthru
      _
    %p187 = scmp.le.s32.totalorder 1, %s9
    %p188 = scmp.lt.s32.totalorder %s9, 3
    %p189 = pnand %p187, %p188
    %p190 = pneg %p189
    // Predicated region
    $region29: #{discriminator_forward.9} parent=5 // pred_check
      _
    $region30: #{discriminator_forward.9} parent=5 // pred_check_branch
      %192 = sbr.rel (%p189) target = $region32
    $region31: #{discriminator_forward.9} parent=5 // pred_region
      %s193 = ssub.s32 %s9, 1
      %s194 = smul.u32 32, %s19
      %p195 = scmp.lt.s32.totalorder %s194, 63
      %s196 = scalar_select %p195, %s194, 63
      %p197 = scmp.lt.s32.totalorder %s21, 0
      %s198 = scalar_select %p197, %s21, 0
      %s199 = sadd.s32 %s198, %s196
      %s200 = smul.addr %s199, 4
      %s201 = scalar_lea.vmem %s0, %s200
      %p202 = pneg %p56
      %p203 = pneg %p53
      %s204 = smul.u32 16, %s21
      %p205 = scmp.lt.s32.totalorder %s204, 15
      %s206 = scalar_select %p205, %s204, 15
      %p207 = scmp.lt.s32.totalorder %s20, 0
      %s208 = scalar_select %p207, %s20, 0
      %s209 = sadd.s32 %s208, %s206
      %s210 = smul.addr %s209, 4
      %s211 = scalar_lea.vmem %s1, %s210
      %p212 = pneg %p84
      %p213 = pneg %p81
      %p214 = scmp.lt.s32.totalorder %s20, 0
      %s215 = scalar_select %p214, %s20, 0
      %s216 = scalar_lea.vmem %s2, %s215
      %p217 = pneg %p110
      %p218 = pneg %p107
      %p219 = pneg %p138
      %p220 = pneg %p135
      %s221 = smul.u32 32, %s19
      %p222 = scmp.lt.s32.totalorder %s221, 63
      %s223 = scalar_select %p222, %s221, 63
      %p224 = scmp.lt.s32.totalorder %s20, 0
      %s225 = scalar_select %p224, %s20, 0
      %s226 = sadd.s32 %s225, %s223
      %s227 = smul.addr %s226, 4
      %s228 = scalar_lea.vmem %s3, %s227
      %s229 = smul.u32 32, %s19
      %p230 = scmp.lt.s32.totalorder %s229, 63
      %s231 = scalar_select %p230, %s229, 63
      %p232 = scmp.lt.s32.totalorder %s21, 0
      %s233 = scalar_select %p232, %s21, 0
      %s234 = sadd.s32 %s233, %s231
      %s235 = smul.addr %s234, 4
      %s236 = scalar_lea.vmem %s0, %s235
      %s237 = smul.u32 32, %s19
      %s238 = smul.u32 16, %s21
      %p239 = scmp.lt.s32.totalorder %s238, 15
      %s240 = scalar_select %p239, %s238, 15
      %p241 = scmp.lt.s32.totalorder %s20, 0
      %s242 = scalar_select %p241, %s20, 0
      %s243 = sadd.s32 %s242, %s240
      %s244 = smul.addr %s243, 4
      %s245 = scalar_lea.vmem %s1, %s244
      %s246 = smul.u32 16, %s21
      %p247 = scmp.lt.s32.totalorder %s20, 0
      %s248 = scalar_select %p247, %s20, 0
      %s249 = scalar_lea.vmem %s2, %s248
      %s250 = smul.u32 32, %s19
      %p251 = scmp.lt.s32.totalorder %s250, 63
      %s252 = scalar_select %p251, %s250, 63
      %p253 = scmp.lt.s32.totalorder %s20, 0
      %s254 = scalar_select %p253, %s20, 0
      %s255 = sadd.s32 %s254, %s252
      %s256 = smul.addr %s255, 4
      %s257 = scalar_lea.vmem %s3, %s256
      %s258 = smul.u32 32, %s19
      %p260 = scmp.eq.s32.totalorder %s21, 0
      // Predicated region
      $region33: #{discriminator_forward.9} parent=31 // pred_check
        %p261 = pneg %p260
      $region34: #{discriminator_forward.9} parent=31 // pred_check_branch
        %263 = sbr.rel (%p261) target = $region36
      $region35: #{discriminator_forward.9} parent=31 // pred_region
        %264 = vst [vmem:[#allocation2] sm:$0xff] 0.0
        %265 = vst [vmem:[#allocation2 + $0x8] sm:$0xff] 0.0
        %266 = vst [vmem:[#allocation2 + $0x10] sm:$0xff] 0.0
        %267 = vst [vmem:[#allocation2 + $0x18] sm:$0xff] 0.0
        %268 = vst [vmem:[#allocation2 + $0x20] sm:$0xff] 0.0
        %269 = vst [vmem:[#allocation2 + $0x28] sm:$0xff] 0.0
        %270 = vst [vmem:[#allocation2 + $0x30] sm:$0xff] 0.0
        %271 = vst [vmem:[#allocation2 + $0x38] sm:$0xff] 0.0
        %272 = vst [vmem:[#allocation2 + $0x40] sm:$0xff] 0.0
        %273 = vst [vmem:[#allocation2 + $0x48] sm:$0xff] 0.0
        %274 = vst [vmem:[#allocation2 + $0x50] sm:$0xff] 0.0
        %275 = vst [vmem:[#allocation2 + $0x58] sm:$0xff] 0.0
        %276 = vst [vmem:[#allocation2 + $0x60] sm:$0xff] 0.0
        %277 = vst [vmem:[#allocation2 + $0x68] sm:$0xff] 0.0
        %278 = vst [vmem:[#allocation2 + $0x70] sm:$0xff] 0.0
        %279 = vst [vmem:[#allocation2 + $0x78] sm:$0xff] 0.0
        %280 = vst [vmem:[#allocation2 + $0x80] sm:$0xff] 0.0
        %281 = vst [vmem:[#allocation2 + $0x88] sm:$0xff] 0.0
        %282 = vst [vmem:[#allocation2 + $0x90] sm:$0xff] 0.0
        %283 = vst [vmem:[#allocation2 + $0x98] sm:$0xff] 0.0
        %284 = vst [vmem:[#allocation2 + $0xa0] sm:$0xff] 0.0
        %285 = vst [vmem:[#allocation2 + $0xa8] sm:$0xff] 0.0
        %286 = vst [vmem:[#allocation2 + $0xb0] sm:$0xff] 0.0
        %287 = vst [vmem:[#allocation2 + $0xb8] sm:$0xff] 0.0
        %288 = vst [vmem:[#allocation2 + $0xc0] sm:$0xff] 0.0
        %289 = vst [vmem:[#allocation2 + $0xc8] sm:$0xff] 0.0
        %290 = vst [vmem:[#allocation2 + $0xd0] sm:$0xff] 0.0
        %291 = vst [vmem:[#allocation2 + $0xd8] sm:$0xff] 0.0
        %292 = vst [vmem:[#allocation2 + $0xe0] sm:$0xff] 0.0
        %293 = vst [vmem:[#allocation2 + $0xe8] sm:$0xff] 0.0
        %294 = vst [vmem:[#allocation2 + $0xf0] sm:$0xff] 0.0
        %295 = vst [vmem:[#allocation2 + $0xf8] sm:$0xff] 0.0
      $region36: #{discriminator_forward.9} parent=31 // pred_fallthru
        _
      %v296 = vld [vmem:[#allocation2] sm:$0xff]
      %v297 = vld [vmem:[#allocation2 + $0x8] sm:$0xff]
      %v298 = vld [vmem:[#allocation2 + $0x10] sm:$0xff]
      %v299 = vld [vmem:[#allocation2 + $0x18] sm:$0xff]
      %v300 = vld [vmem:[#allocation2 + $0x20] sm:$0xff]
      %v301 = vld [vmem:[#allocation2 + $0x28] sm:$0xff]
      %v302 = vld [vmem:[#allocation2 + $0x30] sm:$0xff]
      %v303 = vld [vmem:[#allocation2 + $0x38] sm:$0xff]
      %v304 = vld [vmem:[#allocation2 + $0x40] sm:$0xff]
      %v305 = vld [vmem:[#allocation2 + $0x48] sm:$0xff]
      %v306 = vld [vmem:[#allocation2 + $0x50] sm:$0xff]
      %v307 = vld [vmem:[#allocation2 + $0x58] sm:$0xff]
      %v308 = vld [vmem:[#allocation2 + $0x60] sm:$0xff]
      %v309 = vld [vmem:[#allocation2 + $0x68] sm:$0xff]
      %v310 = vld [vmem:[#allocation2 + $0x70] sm:$0xff]
      %v311 = vld [vmem:[#allocation2 + $0x78] sm:$0xff]
      %v312 = vld [vmem:[#allocation2 + $0x80] sm:$0xff]
      %v313 = vld [vmem:[#allocation2 + $0x88] sm:$0xff]
      %v314 = vld [vmem:[#allocation2 + $0x90] sm:$0xff]
      %v315 = vld [vmem:[#allocation2 + $0x98] sm:$0xff]
      %v316 = vld [vmem:[#allocation2 + $0xa0] sm:$0xff]
      %v317 = vld [vmem:[#allocation2 + $0xa8] sm:$0xff]
      %v318 = vld [vmem:[#allocation2 + $0xb0] sm:$0xff]
      %v319 = vld [vmem:[#allocation2 + $0xb8] sm:$0xff]
      %v320 = vld [vmem:[#allocation2 + $0xc0] sm:$0xff]
      %v321 = vld [vmem:[#allocation2 + $0xc8] sm:$0xff]
      %v322 = vld [vmem:[#allocation2 + $0xd0] sm:$0xff]
      %v323 = vld [vmem:[#allocation2 + $0xd8] sm:$0xff]
      %v324 = vld [vmem:[#allocation2 + $0xe0] sm:$0xff]
      %v325 = vld [vmem:[#allocation2 + $0xe8] sm:$0xff]
      %v326 = vld [vmem:[#allocation2 + $0xf0] sm:$0xff]
      %v327 = vld [vmem:[#allocation2 + $0xf8] sm:$0xff]
      %v328 = vld [vmem:[%s236] sm:$0xf]
      %v329 = vld [vmem:[%s236 + $0x4] sm:$0xf]
      %v330 = vld [vmem:[%s236 + $0x8] sm:$0xf]
      %v331 = vld [vmem:[%s236 + $0xc] sm:$0xf]
      %v332 = vld [vmem:[%s236 + $0x10] sm:$0xf]
      %v333 = vld [vmem:[%s236 + $0x14] sm:$0xf]
      %v334 = vld [vmem:[%s236 + $0x18] sm:$0xf]
      %v335 = vld [vmem:[%s236 + $0x1c] sm:$0xf]
      %v336 = vld [vmem:[%s236 + $0x20] sm:$0xf]
      %v337 = vld [vmem:[%s236 + $0x24] sm:$0xf]
      %v338 = vld [vmem:[%s236 + $0x28] sm:$0xf]
      %v339 = vld [vmem:[%s236 + $0x2c] sm:$0xf]
      %v340 = vld [vmem:[%s236 + $0x30] sm:$0xf]
      %v341 = vld [vmem:[%s236 + $0x34] sm:$0xf]
      %v342 = vld [vmem:[%s236 + $0x38] sm:$0xf]
      %v343 = vld [vmem:[%s236 + $0x3c] sm:$0xf]
      %v344 = vld [vmem:[%s236 + $0x40] sm:$0xf]
      %v345 = vld [vmem:[%s236 + $0x44] sm:$0xf]
      %v346 = vld [vmem:[%s236 + $0x48] sm:$0xf]
      %v347 = vld [vmem:[%s236 + $0x4c] sm:$0xf]
      %v348 = vld [vmem:[%s236 + $0x50] sm:$0xf]
      %v349 = vld [vmem:[%s236 + $0x54] sm:$0xf]
      %v350 = vld [vmem:[%s236 + $0x58] sm:$0xf]
      %v351 = vld [vmem:[%s236 + $0x5c] sm:$0xf]
      %v352 = vld [vmem:[%s236 + $0x60] sm:$0xf]
      %v353 = vld [vmem:[%s236 + $0x64] sm:$0xf]
      %v354 = vld [vmem:[%s236 + $0x68] sm:$0xf]
      %v355 = vld [vmem:[%s236 + $0x6c] sm:$0xf]
      %v356 = vld [vmem:[%s236 + $0x70] sm:$0xf]
      %v357 = vld [vmem:[%s236 + $0x74] sm:$0xf]
      %v358 = vld [vmem:[%s236 + $0x78] sm:$0xf]
      %v359 = vld [vmem:[%s236 + $0x7c] sm:$0xf]
      %v360 = vld [vmem:[%s245] sm:$0xf]
      %v361 = vld [vmem:[%s245 + $0x4] sm:$0xf]
      %v362 = vld [vmem:[%s245 + $0x8] sm:$0xf]
      %v363 = vld [vmem:[%s245 + $0xc] sm:$0xf]
      %v364 = vld [vmem:[%s245 + $0x10] sm:$0xf]
      %v365 = vld [vmem:[%s245 + $0x14] sm:$0xf]
      %v366 = vld [vmem:[%s245 + $0x18] sm:$0xf]
      %v367 = vld [vmem:[%s245 + $0x1c] sm:$0xf]
      %v368 = vld [vmem:[%s245 + $0x20] sm:$0xf]
      %v369 = vld [vmem:[%s245 + $0x24] sm:$0xf]
      %v370 = vld [vmem:[%s245 + $0x28] sm:$0xf]
      %v371 = vld [vmem:[%s245 + $0x2c] sm:$0xf]
      %v372 = vld [vmem:[%s245 + $0x30] sm:$0xf]
      %v373 = vld [vmem:[%s245 + $0x34] sm:$0xf]
      %v374 = vld [vmem:[%s245 + $0x38] sm:$0xf]
      %v375 = vld [vmem:[%s245 + $0x3c] sm:$0xf]
      %v408 = vunpack.c.l.b16 %v328
      %v409 = vunpack.c.l.b16 %v329
      %v410 = vunpack.c.l.b16 %v330
      %v411 = vunpack.c.l.b16 %v331
      %v412 = vunpack.c.l.b16 %v332
      %v413 = vunpack.c.l.b16 %v333
      %v414 = vunpack.c.l.b16 %v334
      %v415 = vunpack.c.l.b16 %v335
      %v416 = vunpack.c.l.b16 %v336
      %v417 = vunpack.c.l.b16 %v337
      %v418 = vunpack.c.l.b16 %v338
      %v419 = vunpack.c.l.b16 %v339
      %v420 = vunpack.c.l.b16 %v340
      %v421 = vunpack.c.l.b16 %v341
      %v422 = vunpack.c.l.b16 %v342
      %v423 = vunpack.c.l.b16 %v343
      %v424 = vunpack.c.l.b16 %v344
      %v425 = vunpack.c.l.b16 %v345
      %v426 = vunpack.c.l.b16 %v346
      %v427 = vunpack.c.l.b16 %v347
      %v428 = vunpack.c.l.b16 %v348
      %v429 = vunpack.c.l.b16 %v349
      %v430 = vunpack.c.l.b16 %v350
      %v431 = vunpack.c.l.b16 %v351
      %v432 = vunpack.c.l.b16 %v352
      %v433 = vunpack.c.l.b16 %v353
      %v434 = vunpack.c.l.b16 %v354
      %v435 = vunpack.c.l.b16 %v355
      %v436 = vunpack.c.l.b16 %v356
      %v437 = vunpack.c.l.b16 %v357
      %v438 = vunpack.c.l.b16 %v358
      %v439 = vunpack.c.l.b16 %v359
      %v440 = vpack.c.b16 %v409, %v408
      %v441 = vpack.c.b16 %v411, %v410
      %v442 = vpack.c.b16 %v413, %v412
      %v443 = vpack.c.b16 %v415, %v414
      %v444 = vpack.c.b16 %v417, %v416
      %v445 = vpack.c.b16 %v419, %v418
      %v446 = vpack.c.b16 %v421, %v420
      %v447 = vpack.c.b16 %v423, %v422
      %v448 = vpack.c.b16 %v425, %v424
      %v449 = vpack.c.b16 %v427, %v426
      %v450 = vpack.c.b16 %v429, %v428
      %v451 = vpack.c.b16 %v431, %v430
      %v452 = vpack.c.b16 %v433, %v432
      %v453 = vpack.c.b16 %v435, %v434
      %v454 = vpack.c.b16 %v437, %v436
      %v455 = vpack.c.b16 %v439, %v438
      %v488 = vunpack.c.l.b16 %v360
      %v489 = vunpack.c.l.b16 %v361
      %v490 = vunpack.c.l.b16 %v362
      %v491 = vunpack.c.l.b16 %v363
      %v492 = vunpack.c.l.b16 %v364
      %v493 = vunpack.c.l.b16 %v365
      %v494 = vunpack.c.l.b16 %v366
      %v495 = vunpack.c.l.b16 %v367
      %v496 = vunpack.c.l.b16 %v368
      %v497 = vunpack.c.l.b16 %v369
      %v498 = vunpack.c.l.b16 %v370
      %v499 = vunpack.c.l.b16 %v371
      %v500 = vunpack.c.l.b16 %v372
      %v501 = vunpack.c.l.b16 %v373
      %v502 = vunpack.c.l.b16 %v374
      %v503 = vunpack.c.l.b16 %v375
      %v504 = vpack.c.b16 %v489, %v488
      %v505 = vpack.c.b16 %v491, %v490
      %v506 = vpack.c.b16 %v493, %v492
      %v507 = vpack.c.b16 %v495, %v494
      %v508 = vpack.c.b16 %v497, %v496
      %v509 = vpack.c.b16 %v499, %v498
      %v510 = vpack.c.b16 %v501, %v500
      %v511 = vpack.c.b16 %v503, %v502
      %520 = vmatprep.subr.bf16.mxu0 0
      %521 = vmatpush1.bf16.msra.mxu0 %v504
      %522 = vmatprep.subr.bf16.mxu0 0
      %523 = vmatpush1.bf16.msra.mxu0 %v505
      %524 = vmatprep.subr.bf16.mxu0 0
      %525 = vmatpush1.bf16.msra.mxu0 %v506
      %526 = vmatprep.subr.bf16.mxu0 0
      %527 = vmatpush1.bf16.msra.mxu0 %v507
      %528 = vmatprep.subr.bf16.mxu0 0
      %529 = vmatpush1.bf16.msra.mxu0 %v508
      %530 = vmatprep.subr.bf16.mxu0 0
      %531 = vmatpush1.bf16.msra.mxu0 %v509
      %532 = vmatprep.subr.bf16.mxu0 0
      %533 = vmatpush1.bf16.msra.mxu0 %v510
      %534 = vmatprep.subr.bf16.mxu0 0
      %535 = vmatpush1.bf16.msra.mxu0 %v511
      %536 = vmatprep.subr.bf16.mxu0 0
      %537 = vmatpush1.bf16.msra.mxu0 0
      %538 = vmatprep.subr.bf16.mxu0 0
      %539 = vmatpush1.bf16.msra.mxu0 0
      %540 = vmatprep.subr.bf16.mxu0 0
      %541 = vmatpush1.bf16.msra.mxu0 0
      %542 = vmatprep.subr.bf16.mxu0 0
      %543 = vmatpush1.bf16.msra.mxu0 0
      %544 = vmatprep.subr.bf16.mxu0 0
      %545 = vmatpush1.bf16.msra.mxu0 0
      %546 = vmatprep.subr.bf16.mxu0 0
      %547 = vmatpush1.bf16.msra.mxu0 0
      %548 = vmatprep.subr.bf16.mxu0 0
      %549 = vmatpush1.bf16.msra.mxu0 0
      %550 = vmatprep.subr.bf16.mxu0 0
      %551 = vmatpush1.bf16.msra.mxu0 0
      %552 = vmatprep.mubr.bf16.mxu0 0
      %553 = vmatmul.mubr.bf16.gmra.mrb[0].mxu0 %v440
      %v554 = vpop.f32.mrb[0].mxu0
      %v555 = vadd.f32 0.0, %v554
      %v556 = vpop.f32.mrb[0].mxu0
      %v557 = vpop.f32.mrb[0].mxu0
      %v558 = vadd.f32 0.0, %v557
      %v559 = vpop.f32.mrb[0].mxu0
      %560 = vmatprep.mubr.bf16.mxu0 0
      %561 = vmatmul.mubr.bf16.gmra.mrb[0].mxu0 %v441
      %v562 = vpop.f32.mrb[0].mxu0
      %v563 = vadd.f32 0.0, %v562
      %v564 = vpop.f32.mrb[0].mxu0
      %v565 = vpop.f32.mrb[0].mxu0
      %v566 = vadd.f32 0.0, %v565
      %v567 = vpop.f32.mrb[0].mxu0
      %568 = vmatprep.mubr.bf16.mxu0 0
      %569 = vmatmul.mubr.bf16.gmra.mrb[0].mxu0 %v442
      %v570 = vpop.f32.mrb[0].mxu0
      %v571 = vadd.f32 0.0, %v570
      %v572 = vpop.f32.mrb[0].mxu0
      %v573 = vpop.f32.mrb[0].mxu0
      %v574 = vadd.f32 0.0, %v573
      %v575 = vpop.f32.mrb[0].mxu0
      %576 = vmatprep.mubr.bf16.mxu0 0
      %577 = vmatmul.mubr.bf16.gmra.mrb[0].mxu0 %v443
      %v578 = vpop.f32.mrb[0].mxu0
      %v579 = vadd.f32 0.0, %v578
      %v580 = vpop.f32.mrb[0].mxu0
      %v581 = vpop.f32.mrb[0].mxu0
      %v582 = vadd.f32 0.0, %v581
      %v583 = vpop.f32.mrb[0].mxu0
      %584 = vmatprep.mubr.bf16.mxu0 0
      %585 = vmatmul.mubr.bf16.gmra.mrb[0].mxu0 %v444
      %v586 = vpop.f32.mrb[0].mxu0
      %v587 = vadd.f32 0.0, %v586
      %v588 = vpop.f32.mrb[0].mxu0
      %v589 = vpop.f32.mrb[0].mxu0
      %v590 = vadd.f32 0.0, %v589
      %v591 = vpop.f32.mrb[0].mxu0
      %592 = vmatprep.mubr.bf16.mxu0 0
      %593 = vmatmul.mubr.bf16.gmra.mrb[0].mxu0 %v445
      %v594 = vpop.f32.mrb[0].mxu0
      %v595 = vadd.f32 0.0, %v594
      %v596 = vpop.f32.mrb[0].mxu0
      %v597 = vpop.f32.mrb[0].mxu0
      %v598 = vadd.f32 0.0, %v597
      %v599 = vpop.f32.mrb[0].mxu0
      %600 = vmatprep.mubr.bf16.mxu0 0
      %601 = vmatmul.mubr.bf16.gmra.mrb[0].mxu0 %v446
      %v602 = vpop.f32.mrb[0].mxu0
      %v603 = vadd.f32 0.0, %v602
      %v604 = vpop.f32.mrb[0].mxu0
      %v605 = vpop.f32.mrb[0].mxu0
      %v606 = vadd.f32 0.0, %v605
      %v607 = vpop.f32.mrb[0].mxu0
      %608 = vmatprep.mubr.bf16.mxu0 0
      %609 = vmatmul.mubr.bf16.gmra.mrb[0].mxu0 %v447
      %v610 = vpop.f32.mrb[0].mxu0
      %v611 = vadd.f32 0.0, %v610
      %v612 = vpop.f32.mrb[0].mxu0
      %v613 = vpop.f32.mrb[0].mxu0
      %v614 = vadd.f32 0.0, %v613
      %v615 = vpop.f32.mrb[0].mxu0
      %616 = vmatprep.mubr.bf16.mxu0 0
      %617 = vmatmul.mubr.bf16.gmra.mrb[0].mxu0 %v448
      %v618 = vpop.f32.mrb[0].mxu0
      %v619 = vadd.f32 0.0, %v618
      %v620 = vpop.f32.mrb[0].mxu0
      %v621 = vpop.f32.mrb[0].mxu0
      %v622 = vadd.f32 0.0, %v621
      %v623 = vpop.f32.mrb[0].mxu0
      %624 = vmatprep.mubr.bf16.mxu0 0
      %625 = vmatmul.mubr.bf16.gmra.mrb[0].mxu0 %v449
      %v626 = vpop.f32.mrb[0].mxu0
      %v627 = vadd.f32 0.0, %v626
      %v628 = vpop.f32.mrb[0].mxu0
      %v629 = vpop.f32.mrb[0].mxu0
      %v630 = vadd.f32 0.0, %v629
      %v631 = vpop.f32.mrb[0].mxu0
      %632 = vmatprep.mubr.bf16.mxu0 0
      %633 = vmatmul.mubr.bf16.gmra.mrb[0].mxu0 %v450
      %v634 = vpop.f32.mrb[0].mxu0
      %v635 = vadd.f32 0.0, %v634
      %v636 = vpop.f32.mrb[0].mxu0
      %v637 = vpop.f32.mrb[0].mxu0
      %v638 = vadd.f32 0.0, %v637
      %v639 = vpop.f32.mrb[0].mxu0
      %640 = vmatprep.mubr.bf16.mxu0 0
      %641 = vmatmul.mubr.bf16.gmra.mrb[0].mxu0 %v451
      %v642 = vpop.f32.mrb[0].mxu0
      %v643 = vadd.f32 0.0, %v642
      %v644 = vpop.f32.mrb[0].mxu0
      %v645 = vpop.f32.mrb[0].mxu0
      %v646 = vadd.f32 0.0, %v645
      %v647 = vpop.f32.mrb[0].mxu0
      %648 = vmatprep.mubr.bf16.mxu0 0
      %649 = vmatmul.mubr.bf16.gmra.mrb[0].mxu0 %v452
      %v650 = vpop.f32.mrb[0].mxu0
      %v651 = vadd.f32 0.0, %v650
      %v652 = vpop.f32.mrb[0].mxu0
      %v653 = vpop.f32.mrb[0].mxu0
      %v654 = vadd.f32 0.0, %v653
      %v655 = vpop.f32.mrb[0].mxu0
      %656 = vmatprep.mubr.bf16.mxu0 0
      %657 = vmatmul.mubr.bf16.gmra.mrb[0].mxu0 %v453
      %v658 = vpop.f32.mrb[0].mxu0
      %v659 = vadd.f32 0.0, %v658
      %v660 = vpop.f32.mrb[0].mxu0
      %v661 = vpop.f32.mrb[0].mxu0
      %v662 = vadd.f32 0.0, %v661
      %v663 = vpop.f32.mrb[0].mxu0
      %664 = vmatprep.mubr.bf16.mxu0 0
      %665 = vmatmul.mubr.bf16.gmra.mrb[0].mxu0 %v454
      %v666 = vpop.f32.mrb[0].mxu0
      %v667 = vadd.f32 0.0, %v666
      %v668 = vpop.f32.mrb[0].mxu0
      %v669 = vpop.f32.mrb[0].mxu0
      %v670 = vadd.f32 0.0, %v669
      %v671 = vpop.f32.mrb[0].mxu0
      %672 = vmatprep.mubr.bf16.mxu0 0
      %673 = vmatmul.mubr.bf16.gmra.mrb[0].mxu0 %v455
      %v674 = vpop.f32.mrb[0].mxu0
      %v675 = vadd.f32 0.0, %v674
      %v676 = vpop.f32.mrb[0].mxu0
      %v677 = vpop.f32.mrb[0].mxu0
      %v678 = vadd.f32 0.0, %v677
      %v679 = vpop.f32.mrb[0].mxu0
      %680 = vdwg.mxu0
      %v681 = vadd.f32 %v296, %v555
      %v682 = vadd.f32 %v297, %v558
      %v683 = vadd.f32 %v298, %v563
      %v684 = vadd.f32 %v299, %v566
      %v685 = vadd.f32 %v300, %v571
      %v686 = vadd.f32 %v301, %v574
      %v687 = vadd.f32 %v302, %v579
      %v688 = vadd.f32 %v303, %v582
      %v689 = vadd.f32 %v304, %v587
      %v690 = vadd.f32 %v305, %v590
      %v691 = vadd.f32 %v306, %v595
      %v692 = vadd.f32 %v307, %v598
      %v693 = vadd.f32 %v308, %v603
      %v694 = vadd.f32 %v309, %v606
      %v695 = vadd.f32 %v310, %v611
      %v696 = vadd.f32 %v311, %v614
      %v697 = vadd.f32 %v312, %v619
      %v698 = vadd.f32 %v313, %v622
      %v699 = vadd.f32 %v314, %v627
      %v700 = vadd.f32 %v315, %v630
      %v701 = vadd.f32 %v316, %v635
      %v702 = vadd.f32 %v317, %v638
      %v703 = vadd.f32 %v318, %v643
      %v704 = vadd.f32 %v319, %v646
      %v705 = vadd.f32 %v320, %v651
      %v706 = vadd.f32 %v321, %v654
      %v707 = vadd.f32 %v322, %v659
      %v708 = vadd.f32 %v323, %v662
      %v709 = vadd.f32 %v324, %v667
      %v710 = vadd.f32 %v325, %v670
      %v711 = vadd.f32 %v326, %v675
      %v712 = vadd.f32 %v327, %v678
      %713 = vst [vmem:[#allocation2] sm:$0xff] %v681
      %714 = vst [vmem:[#allocation2 + $0x8] sm:$0xff] %v682
      %715 = vst [vmem:[#allocation2 + $0x10] sm:$0xff] %v683
      %716 = vst [vmem:[#allocation2 + $0x18] sm:$0xff] %v684
      %717 = vst [vmem:[#allocation2 + $0x20] sm:$0xff] %v685
      %718 = vst [vmem:[#allocation2 + $0x28] sm:$0xff] %v686
      %719 = vst [vmem:[#allocation2 + $0x30] sm:$0xff] %v687
      %720 = vst [vmem:[#allocation2 + $0x38] sm:$0xff] %v688
      %721 = vst [vmem:[#allocation2 + $0x40] sm:$0xff] %v689
      %722 = vst [vmem:[#allocation2 + $0x48] sm:$0xff] %v690
      %723 = vst [vmem:[#allocation2 + $0x50] sm:$0xff] %v691
      %724 = vst [vmem:[#allocation2 + $0x58] sm:$0xff] %v692
      %725 = vst [vmem:[#allocation2 + $0x60] sm:$0xff] %v693
      %726 = vst [vmem:[#allocation2 + $0x68] sm:$0xff] %v694
      %727 = vst [vmem:[#allocation2 + $0x70] sm:$0xff] %v695
      %728 = vst [vmem:[#allocation2 + $0x78] sm:$0xff] %v696
      %729 = vst [vmem:[#allocation2 + $0x80] sm:$0xff] %v697
      %730 = vst [vmem:[#allocation2 + $0x88] sm:$0xff] %v698
      %731 = vst [vmem:[#allocation2 + $0x90] sm:$0xff] %v699
      %732 = vst [vmem:[#allocation2 + $0x98] sm:$0xff] %v700
      %733 = vst [vmem:[#allocation2 + $0xa0] sm:$0xff] %v701
      %734 = vst [vmem:[#allocation2 + $0xa8] sm:$0xff] %v702
      %735 = vst [vmem:[#allocation2 + $0xb0] sm:$0xff] %v703
      %736 = vst [vmem:[#allocation2 + $0xb8] sm:$0xff] %v704
      %737 = vst [vmem:[#allocation2 + $0xc0] sm:$0xff] %v705
      %738 = vst [vmem:[#allocation2 + $0xc8] sm:$0xff] %v706
      %739 = vst [vmem:[#allocation2 + $0xd0] sm:$0xff] %v707
      %740 = vst [vmem:[#allocation2 + $0xd8] sm:$0xff] %v708
      %741 = vst [vmem:[#allocation2 + $0xe0] sm:$0xff] %v709
      %742 = vst [vmem:[#allocation2 + $0xe8] sm:$0xff] %v710
      %743 = vst [vmem:[#allocation2 + $0xf0] sm:$0xff] %v711
      %744 = vst [vmem:[#allocation2 + $0xf8] sm:$0xff] %v712
      // Predicated region
      $region37: #{discriminator_forward.9} parent=31 // pred_check
        %p745 = pneg %p260
      $region38: #{discriminator_forward.9} parent=31 // pred_check_branch
        %747 = sbr.rel (%p745) target = $region40
      $region39: #{discriminator_forward.9} parent=31 // pred_region
        %v748 = vld [vmem:[#allocation2] sm:$0xff]
        %v749 = vld [vmem:[#allocation2 + $0x8] sm:$0xff]
        %v750 = vld [vmem:[#allocation2 + $0x10] sm:$0xff]
        %v751 = vld [vmem:[#allocation2 + $0x18] sm:$0xff]
        %v752 = vld [vmem:[#allocation2 + $0x20] sm:$0xff]
        %v753 = vld [vmem:[#allocation2 + $0x28] sm:$0xff]
        %v754 = vld [vmem:[#allocation2 + $0x30] sm:$0xff]
        %v755 = vld [vmem:[#allocation2 + $0x38] sm:$0xff]
        %v756 = vld [vmem:[#allocation2 + $0x40] sm:$0xff]
        %v757 = vld [vmem:[#allocation2 + $0x48] sm:$0xff]
        %v758 = vld [vmem:[#allocation2 + $0x50] sm:$0xff]
        %v759 = vld [vmem:[#allocation2 + $0x58] sm:$0xff]
        %v760 = vld [vmem:[#allocation2 + $0x60] sm:$0xff]
        %v761 = vld [vmem:[#allocation2 + $0x68] sm:$0xff]
        %v762 = vld [vmem:[#allocation2 + $0x70] sm:$0xff]
        %v763 = vld [vmem:[#allocation2 + $0x78] sm:$0xff]
        %v764 = vld [vmem:[#allocation2 + $0x80] sm:$0xff]
        %v765 = vld [vmem:[#allocation2 + $0x88] sm:$0xff]
        %v766 = vld [vmem:[#allocation2 + $0x90] sm:$0xff]
        %v767 = vld [vmem:[#allocation2 + $0x98] sm:$0xff]
        %v768 = vld [vmem:[#allocation2 + $0xa0] sm:$0xff]
        %v769 = vld [vmem:[#allocation2 + $0xa8] sm:$0xff]
        %v770 = vld [vmem:[#allocation2 + $0xb0] sm:$0xff]
        %v771 = vld [vmem:[#allocation2 + $0xb8] sm:$0xff]
        %v772 = vld [vmem:[#allocation2 + $0xc0] sm:$0xff]
        %v773 = vld [vmem:[#allocation2 + $0xc8] sm:$0xff]
        %v774 = vld [vmem:[#allocation2 + $0xd0] sm:$0xff]
        %v775 = vld [vmem:[#allocation2 + $0xd8] sm:$0xff]
        %v776 = vld [vmem:[#allocation2 + $0xe0] sm:$0xff]
        %v777 = vld [vmem:[#allocation2 + $0xe8] sm:$0xff]
        %v778 = vld [vmem:[#allocation2 + $0xf0] sm:$0xff]
        %v779 = vld [vmem:[#allocation2 + $0xf8] sm:$0xff]
        %v780 = vld [vmem:[%s249] sm:$0x1]
        %v782 = vlaneseq
        %v783 = vshrl.u32 %v782, 7
        %v784 = vsub.s32 0, %v783
        %v785 = vrot.slane %v780, %v784
        %v787 = vadd.f32 %v748, %v785
        %v788 = vadd.f32 %v749, %v785
        %v789 = vadd.f32 %v750, %v785
        %v790 = vadd.f32 %v751, %v785
        %v791 = vadd.f32 %v752, %v785
        %v792 = vadd.f32 %v753, %v785
        %v793 = vadd.f32 %v754, %v785
        %v794 = vadd.f32 %v755, %v785
        %v795 = vadd.f32 %v756, %v785
        %v796 = vadd.f32 %v757, %v785
        %v797 = vadd.f32 %v758, %v785
        %v798 = vadd.f32 %v759, %v785
        %v799 = vadd.f32 %v760, %v785
        %v800 = vadd.f32 %v761, %v785
        %v801 = vadd.f32 %v762, %v785
        %v802 = vadd.f32 %v763, %v785
        %v803 = vadd.f32 %v764, %v785
        %v804 = vadd.f32 %v765, %v785
        %v805 = vadd.f32 %v766, %v785
        %v806 = vadd.f32 %v767, %v785
        %v807 = vadd.f32 %v768, %v785
        %v808 = vadd.f32 %v769, %v785
        %v809 = vadd.f32 %v770, %v785
        %v810 = vadd.f32 %v771, %v785
        %v811 = vadd.f32 %v772, %v785
        %v812 = vadd.f32 %v773, %v785
        %v813 = vadd.f32 %v774, %v785
        %v814 = vadd.f32 %v775, %v785
        %v815 = vadd.f32 %v776, %v785
        %v816 = vadd.f32 %v777, %v785
        %v817 = vadd.f32 %v778, %v785
        %v818 = vadd.f32 %v779, %v785
        %vm819 = vcmp.gt.f32.partialorder %v787, 0.0
        %vm820 = vcmp.gt.f32.partialorder %v788, 0.0
        %vm821 = vcmp.gt.f32.partialorder %v789, 0.0
        %vm822 = vcmp.gt.f32.partialorder %v790, 0.0
        %vm823 = vcmp.gt.f32.partialorder %v791, 0.0
        %vm824 = vcmp.gt.f32.partialorder %v792, 0.0
        %vm825 = vcmp.gt.f32.partialorder %v793, 0.0
        %vm826 = vcmp.gt.f32.partialorder %v794, 0.0
        %vm827 = vcmp.gt.f32.partialorder %v795, 0.0
        %vm828 = vcmp.gt.f32.partialorder %v796, 0.0
        %vm829 = vcmp.gt.f32.partialorder %v797, 0.0
        %vm830 = vcmp.gt.f32.partialorder %v798, 0.0
        %vm831 = vcmp.gt.f32.partialorder %v799, 0.0
        %vm832 = vcmp.gt.f32.partialorder %v800, 0.0
        %vm833 = vcmp.gt.f32.partialorder %v801, 0.0
        %vm834 = vcmp.gt.f32.partialorder %v802, 0.0
        %vm835 = vcmp.gt.f32.partialorder %v803, 0.0
        %vm836 = vcmp.gt.f32.partialorder %v804, 0.0
        %vm837 = vcmp.gt.f32.partialorder %v805, 0.0
        %vm838 = vcmp.gt.f32.partialorder %v806, 0.0
        %vm839 = vcmp.gt.f32.partialorder %v807, 0.0
        %vm840 = vcmp.gt.f32.partialorder %v808, 0.0
        %vm841 = vcmp.gt.f32.partialorder %v809, 0.0
        %vm842 = vcmp.gt.f32.partialorder %v810, 0.0
        %vm843 = vcmp.gt.f32.partialorder %v811, 0.0
        %vm844 = vcmp.gt.f32.partialorder %v812, 0.0
        %vm845 = vcmp.gt.f32.partialorder %v813, 0.0
        %vm846 = vcmp.gt.f32.partialorder %v814, 0.0
        %vm847 = vcmp.gt.f32.partialorder %v815, 0.0
        %vm848 = vcmp.gt.f32.partialorder %v816, 0.0
        %vm849 = vcmp.gt.f32.partialorder %v817, 0.0
        %vm850 = vcmp.gt.f32.partialorder %v818, 0.0
        %v851 = vmul.f32 %v787, 0.01
        %v852 = vmul.f32 %v788, 0.01
        %v853 = vmul.f32 %v789, 0.01
        %v854 = vmul.f32 %v790, 0.01
        %v855 = vmul.f32 %v791, 0.01
        %v856 = vmul.f32 %v792, 0.01
        %v857 = vmul.f32 %v793, 0.01
        %v858 = vmul.f32 %v794, 0.01
        %v859 = vmul.f32 %v795, 0.01
        %v860 = vmul.f32 %v796, 0.01
        %v861 = vmul.f32 %v797, 0.01
        %v862 = vmul.f32 %v798, 0.01
        %v863 = vmul.f32 %v799, 0.01
        %v864 = vmul.f32 %v800, 0.01
        %v865 = vmul.f32 %v801, 0.01
        %v866 = vmul.f32 %v802, 0.01
        %v867 = vmul.f32 %v803, 0.01
        %v868 = vmul.f32 %v804, 0.01
        %v869 = vmul.f32 %v805, 0.01
        %v870 = vmul.f32 %v806, 0.01
        %v871 = vmul.f32 %v807, 0.01
        %v872 = vmul.f32 %v808, 0.01
        %v873 = vmul.f32 %v809, 0.01
        %v874 = vmul.f32 %v810, 0.01
        %v875 = vmul.f32 %v811, 0.01
        %v876 = vmul.f32 %v812, 0.01
        %v877 = vmul.f32 %v813, 0.01
        %v878 = vmul.f32 %v814, 0.01
        %v879 = vmul.f32 %v815, 0.01
        %v880 = vmul.f32 %v816, 0.01
        %v881 = vmul.f32 %v817, 0.01
        %v882 = vmul.f32 %v818, 0.01
        %v883 = vsel %vm819, %v787, %v851
        %v884 = vsel %vm820, %v788, %v852
        %v885 = vsel %vm821, %v789, %v853
        %v886 = vsel %vm822, %v790, %v854
        %v887 = vsel %vm823, %v791, %v855
        %v888 = vsel %vm824, %v792, %v856
        %v889 = vsel %vm825, %v793, %v857
        %v890 = vsel %vm826, %v794, %v858
        %v891 = vsel %vm827, %v795, %v859
        %v892 = vsel %vm828, %v796, %v860
        %v893 = vsel %vm829, %v797, %v861
        %v894 = vsel %vm830, %v798, %v862
        %v895 = vsel %vm831, %v799, %v863
        %v896 = vsel %vm832, %v800, %v864
        %v897 = vsel %vm833, %v801, %v865
        %v898 = vsel %vm834, %v802, %v866
        %v899 = vsel %vm835, %v803, %v867
        %v900 = vsel %vm836, %v804, %v868
        %v901 = vsel %vm837, %v805, %v869
        %v902 = vsel %vm838, %v806, %v870
        %v903 = vsel %vm839, %v807, %v871
        %v904 = vsel %vm840, %v808, %v872
        %v905 = vsel %vm841, %v809, %v873
        %v906 = vsel %vm842, %v810, %v874
        %v907 = vsel %vm843, %v811, %v875
        %v908 = vsel %vm844, %v812, %v876
        %v909 = vsel %vm845, %v813, %v877
        %v910 = vsel %vm846, %v814, %v878
        %v911 = vsel %vm847, %v815, %v879
        %v912 = vsel %vm848, %v816, %v880
        %v913 = vsel %vm849, %v817, %v881
        %v914 = vsel %vm850, %v818, %v882
        %v915 = vpack.c.bf16 %v884, %v883
        %v916 = vpack.c.bf16 %v886, %v885
        %v917 = vpack.c.bf16 %v888, %v887
        %v918 = vpack.c.bf16 %v890, %v889
        %v919 = vpack.c.bf16 %v892, %v891
        %v920 = vpack.c.bf16 %v894, %v893
        %v921 = vpack.c.bf16 %v896, %v895
        %v922 = vpack.c.bf16 %v898, %v897
        %v923 = vpack.c.bf16 %v900, %v899
        %v924 = vpack.c.bf16 %v902, %v901
        %v925 = vpack.c.bf16 %v904, %v903
        %v926 = vpack.c.bf16 %v906, %v905
        %v927 = vpack.c.bf16 %v908, %v907
        %v928 = vpack.c.bf16 %v910, %v909
        %v929 = vpack.c.bf16 %v912, %v911
        %v930 = vpack.c.bf16 %v914, %v913
        %v947 = vunpack.c.l.b16 %v915
        %v948 = vunpack.c.h.b16 %v915
        %v949 = vunpack.c.l.b16 %v916
        %v950 = vunpack.c.h.b16 %v916
        %v951 = vunpack.c.l.b16 %v917
        %v952 = vunpack.c.h.b16 %v917
        %v953 = vunpack.c.l.b16 %v918
        %v954 = vunpack.c.h.b16 %v918
        %v955 = vunpack.c.l.b16 %v919
        %v956 = vunpack.c.h.b16 %v919
        %v957 = vunpack.c.l.b16 %v920
        %v958 = vunpack.c.h.b16 %v920
        %v959 = vunpack.c.l.b16 %v921
        %v960 = vunpack.c.h.b16 %v921
        %v961 = vunpack.c.l.b16 %v922
        %v962 = vunpack.c.h.b16 %v922
        %v963 = vunpack.c.l.b16 %v923
        %v964 = vunpack.c.h.b16 %v923
        %v965 = vunpack.c.l.b16 %v924
        %v966 = vunpack.c.h.b16 %v924
        %v967 = vunpack.c.l.b16 %v925
        %v968 = vunpack.c.h.b16 %v925
        %v969 = vunpack.c.l.b16 %v926
        %v970 = vunpack.c.h.b16 %v926
        %v971 = vunpack.c.l.b16 %v927
        %v972 = vunpack.c.h.b16 %v927
        %v973 = vunpack.c.l.b16 %v928
        %v974 = vunpack.c.h.b16 %v928
        %v975 = vunpack.c.l.b16 %v929
        %v976 = vunpack.c.h.b16 %v929
        %v977 = vunpack.c.l.b16 %v930
        %v978 = vunpack.c.h.b16 %v930
        %v979 = vpack.c.b16 %v947, %v947
        %v980 = vpack.c.b16 %v948, %v948
        %v981 = vpack.c.b16 %v949, %v949
        %v982 = vpack.c.b16 %v950, %v950
        %v983 = vpack.c.b16 %v951, %v951
        %v984 = vpack.c.b16 %v952, %v952
        %v985 = vpack.c.b16 %v953, %v953
        %v986 = vpack.c.b16 %v954, %v954
        %v987 = vpack.c.b16 %v955, %v955
        %v988 = vpack.c.b16 %v956, %v956
        %v989 = vpack.c.b16 %v957, %v957
        %v990 = vpack.c.b16 %v958, %v958
        %v991 = vpack.c.b16 %v959, %v959
        %v992 = vpack.c.b16 %v960, %v960
        %v993 = vpack.c.b16 %v961, %v961
        %v994 = vpack.c.b16 %v962, %v962
        %v995 = vpack.c.b16 %v963, %v963
        %v996 = vpack.c.b16 %v964, %v964
        %v997 = vpack.c.b16 %v965, %v965
        %v998 = vpack.c.b16 %v966, %v966
        %v999 = vpack.c.b16 %v967, %v967
        %v1000 = vpack.c.b16 %v968, %v968
        %v1001 = vpack.c.b16 %v969, %v969
        %v1002 = vpack.c.b16 %v970, %v970
        %v1003 = vpack.c.b16 %v971, %v971
        %v1004 = vpack.c.b16 %v972, %v972
        %v1005 = vpack.c.b16 %v973, %v973
        %v1006 = vpack.c.b16 %v974, %v974
        %v1007 = vpack.c.b16 %v975, %v975
        %v1008 = vpack.c.b16 %v976, %v976
        %v1009 = vpack.c.b16 %v977, %v977
        %v1010 = vpack.c.b16 %v978, %v978
        %1043 = vst [vmem:[%s257] sm:$0xf] %v979
        %1044 = vst [vmem:[%s257 + $0x4] sm:$0xf] %v980
        %1045 = vst [vmem:[%s257 + $0x8] sm:$0xf] %v981
        %1046 = vst [vmem:[%s257 + $0xc] sm:$0xf] %v982
        %1047 = vst [vmem:[%s257 + $0x10] sm:$0xf] %v983
        %1048 = vst [vmem:[%s257 + $0x14] sm:$0xf] %v984
        %1049 = vst [vmem:[%s257 + $0x18] sm:$0xf] %v985
        %1050 = vst [vmem:[%s257 + $0x1c] sm:$0xf] %v986
        %1051 = vst [vmem:[%s257 + $0x20] sm:$0xf] %v987
        %1052 = vst [vmem:[%s257 + $0x24] sm:$0xf] %v988
        %1053 = vst [vmem:[%s257 + $0x28] sm:$0xf] %v989
        %1054 = vst [vmem:[%s257 + $0x2c] sm:$0xf] %v990
        %1055 = vst [vmem:[%s257 + $0x30] sm:$0xf] %v991
        %1056 = vst [vmem:[%s257 + $0x34] sm:$0xf] %v992
        %1057 = vst [vmem:[%s257 + $0x38] sm:$0xf] %v993
        %1058 = vst [vmem:[%s257 + $0x3c] sm:$0xf] %v994
        %1059 = vst [vmem:[%s257 + $0x40] sm:$0xf] %v995
        %1060 = vst [vmem:[%s257 + $0x44] sm:$0xf] %v996
        %1061 = vst [vmem:[%s257 + $0x48] sm:$0xf] %v997
        %1062 = vst [vmem:[%s257 + $0x4c] sm:$0xf] %v998
        %1063 = vst [vmem:[%s257 + $0x50] sm:$0xf] %v999
        %1064 = vst [vmem:[%s257 + $0x54] sm:$0xf] %v1000
        %1065 = vst [vmem:[%s257 + $0x58] sm:$0xf] %v1001
        %1066 = vst [vmem:[%s257 + $0x5c] sm:$0xf] %v1002
        %1067 = vst [vmem:[%s257 + $0x60] sm:$0xf] %v1003
        %1068 = vst [vmem:[%s257 + $0x64] sm:$0xf] %v1004
        %1069 = vst [vmem:[%s257 + $0x68] sm:$0xf] %v1005
        %1070 = vst [vmem:[%s257 + $0x6c] sm:$0xf] %v1006
        %1071 = vst [vmem:[%s257 + $0x70] sm:$0xf] %v1007
        %1072 = vst [vmem:[%s257 + $0x74] sm:$0xf] %v1008
        %1073 = vst [vmem:[%s257 + $0x78] sm:$0xf] %v1009
        %1074 = vst [vmem:[%s257 + $0x7c] sm:$0xf] %v1010
      $region40: #{discriminator_forward.9} parent=31 // pred_fallthru
        _
      %s1075 = smul.u32 32, %s19
      %p1076 = scmp.lt.s32.totalorder %s1075, 63
      %s1077 = scalar_select %p1076, %s1075, 63
      %p1078 = scmp.lt.s32.totalorder %s20, 0
      %s1079 = scalar_select %p1078, %s20, 0
      %s1080 = sadd.s32 %s1079, %s1077
      %s1081 = smul.addr %s1080, 4
      %s1082 = scalar_lea.vmem %s3, %s1081
      // Predicated region
      $region41: #{discriminator_forward.9} parent=31 // pred_check
        %p1083 = pneg %p135
      $region42: #{discriminator_forward.9} parent=31 // pred_check_branch
        %1085 = sbr.rel (%p1083) target = $region44
      $region43: #{discriminator_forward.9} parent=31 // pred_region
        %s1086 = smul.u32 32, %s19
      $region44: #{discriminator_forward.9} parent=31 // pred_fallthru
        _
    $region32: #{discriminator_forward.9} parent=5 // pred_fallthru
      _
    %p1087 = scmp.le.s32.totalorder 2, %s9
    // Predicated region
    $region45: #{discriminator_forward.9} parent=5 // pred_check
      %p1088 = pneg %p1087
    $region46: #{discriminator_forward.9} parent=5 // pred_check_branch
      %1090 = sbr.rel (%p1088) target = $region48
    $region47: #{discriminator_forward.9} parent=5 // pred_region
      %s1091 = ssub.s32 %s9, 2
      // Predicated region
      $region49: #{discriminator_forward.9} parent=47 // pred_check
        %p1092 = pneg %p141
      $region50: #{discriminator_forward.9} parent=47 // pred_check_branch
        %1094 = sbr.rel (%p1092) target = $region52
      $region51: #{discriminator_forward.9} parent=47 // pred_region
        %s1095 = smul.u32 32, %s22
        %p1096 = scmp.lt.s32.totalorder %s1095, 63
        %s1097 = scalar_select %p1096, %s1095, 63
        %p1098 = scmp.lt.s32.totalorder %s23, 0
        %s1099 = scalar_select %p1098, %s23, 0
        %s1100 = sadd.s32 %s1099, %s1097
        %s1101 = smul.addr %s1100, 4
        %s1102 = scalar_lea.vmem %s3, %s1101
      $region52: #{discriminator_forward.9} parent=47 // pred_fallthru
        _
    $region48: #{discriminator_forward.9} parent=5 // pred_fallthru
      _
  $region6: #{discriminator_forward.9} parent=0 // loop_footer
    %s13 = sadd.s32 1, %s9
  $region7: #{discriminator_forward.9} parent=0 // loop_footer_branch
    %8 = sbr.rel target = $region3
  $region8: #{discriminator_forward.9} parent=0 // loop_exit
    _

// kernel: discriminator_forward.10
$region0: #{discriminator_forward.10}
  #allocation0 [shape = 'u32[]', space=smem, size = 0x4, offset = 0x4, fixed_abs, tag = 'smem constant byte address 0x4 - core index']
  #allocation1 [shape = 'u32[144,128]{1,0:T(1,128)}', space=vmem, size = 0x12000, scoped, tag = 'internal scratch']
  %s0 = inlined_call_operand.vmem [shape: bf16[512,128], index: 0, kind: input, shape index: {}]
  %s1 = inlined_call_operand.vmem [shape: f32[1,128], index: 1, kind: output, shape index: {0}]
  %s2 = inlined_call_operand.vmem [shape: f32[1,128], index: 2, kind: output, shape index: {1}]
  %3 = xla_tuple %s1, %s2
  %s4 = sld [smem:[#allocation0]]
  $region26: #{discriminator_forward.10} parent=0
    _
  %s6 = ssub.s32 1, %s4
  %s7 = scalar_select 0, %s6, %s4
  // Predicated region
  $region2: #{discriminator_forward.10} parent=0 // pred_check
    _
  $region3: #{discriminator_forward.10} parent=0 // pred_check_branch
    %9 = sbr.rel (0) target = $region5
  $region4: #{discriminator_forward.10} parent=0 // pred_region
    _
  $region5: #{discriminator_forward.10} parent=0 // pred_fallthru
    _
  %p10 = scmp.eq.s32.totalorder 0, 0
  // Predicated region
  $region6: #{discriminator_forward.10} parent=0 // pred_check
    %p11 = pneg %p10
  $region7: #{discriminator_forward.10} parent=0 // pred_check_branch
    %13 = sbr.rel (%p11) target = $region9
  $region8: #{discriminator_forward.10} parent=0 // pred_region
    %14 = vst [vmem:[%s1] sm:$0x1] 0.0
    %15 = vst [vmem:[%s2] sm:$0x1] 0.0
  $region9: #{discriminator_forward.10} parent=0 // pred_fallthru
    _
  %v16 = vld [vmem:[%s0] sm:$0xf]
  %v17 = vld [vmem:[%s0 + $0x4] sm:$0xf]
  %v18 = vld [vmem:[%s0 + $0x8] sm:$0xf]
  %v19 = vld [vmem:[%s0 + $0xc] sm:$0xf]
  %v20 = vld [vmem:[%s0 + $0x10] sm:$0xf]
  %v21 = vld [vmem:[%s0 + $0x14] sm:$0xf]
  %v22 = vld [vmem:[%s0 + $0x18] sm:$0xf]
  %v23 = vld [vmem:[%s0 + $0x1c] sm:$0xf]
  %v24 = vld [vmem:[%s0 + $0x20] sm:$0xf]
  %v25 = vld [vmem:[%s0 + $0x24] sm:$0xf]
  %v26 = vld [vmem:[%s0 + $0x28] sm:$0xf]
  %v27 = vld [vmem:[%s0 + $0x2c] sm:$0xf]
  %v28 = vld [vmem:[%s0 + $0x30] sm:$0xf]
  %v29 = vld [vmem:[%s0 + $0x34] sm:$0xf]
  %v30 = vld [vmem:[%s0 + $0x38] sm:$0xf]
  %v31 = vld [vmem:[%s0 + $0x3c] sm:$0xf]
  %v32 = vld [vmem:[%s0 + $0x40] sm:$0xf]
  %v33 = vld [vmem:[%s0 + $0x44] sm:$0xf]
  %v34 = vld [vmem:[%s0 + $0x48] sm:$0xf]
  %v35 = vld [vmem:[%s0 + $0x4c] sm:$0xf]
  %v36 = vld [vmem:[%s0 + $0x50] sm:$0xf]
  %v37 = vld [vmem:[%s0 + $0x54] sm:$0xf]
  %v38 = vld [vmem:[%s0 + $0x58] sm:$0xf]
  %v39 = vld [vmem:[%s0 + $0x5c] sm:$0xf]
  %v40 = vld [vmem:[%s0 + $0x60] sm:$0xf]
  %v41 = vld [vmem:[%s0 + $0x64] sm:$0xf]
  %v42 = vld [vmem:[%s0 + $0x68] sm:$0xf]
  %v43 = vld [vmem:[%s0 + $0x6c] sm:$0xf]
  %v44 = vld [vmem:[%s0 + $0x70] sm:$0xf]
  %v45 = vld [vmem:[%s0 + $0x74] sm:$0xf]
  %v46 = vld [vmem:[%s0 + $0x78] sm:$0xf]
  %v47 = vld [vmem:[%s0 + $0x7c] sm:$0xf]
  %v48 = vld [vmem:[%s0 + $0x80] sm:$0xf]
  %v49 = vld [vmem:[%s0 + $0x84] sm:$0xf]
  %v50 = vld [vmem:[%s0 + $0x88] sm:$0xf]
  %v51 = vld [vmem:[%s0 + $0x8c] sm:$0xf]
  %v52 = vld [vmem:[%s0 + $0x90] sm:$0xf]
  %v53 = vld [vmem:[%s0 + $0x94] sm:$0xf]
  %v54 = vld [vmem:[%s0 + $0x98] sm:$0xf]
  %v55 = vld [vmem:[%s0 + $0x9c] sm:$0xf]
  %v56 = vld [vmem:[%s0 + $0xa0] sm:$0xf]
  %v57 = vld [vmem:[%s0 + $0xa4] sm:$0xf]
  %v58 = vld [vmem:[%s0 + $0xa8] sm:$0xf]
  %v59 = vld [vmem:[%s0 + $0xac] sm:$0xf]
  %v60 = vld [vmem:[%s0 + $0xb0] sm:$0xf]
  %v61 = vld [vmem:[%s0 + $0xb4] sm:$0xf]
  %v62 = vld [vmem:[%s0 + $0xb8] sm:$0xf]
  %v63 = vld [vmem:[%s0 + $0xbc] sm:$0xf]
  %v64 = vld [vmem:[%s0 + $0xc0] sm:$0xf]
  %v65 = vld [vmem:[%s0 + $0xc4] sm:$0xf]
  %v66 = vld [vmem:[%s0 + $0xc8] sm:$0xf]
  %v67 = vld [vmem:[%s0 + $0xcc] sm:$0xf]
  %v68 = vld [vmem:[%s0 + $0xd0] sm:$0xf]
  %v69 = vld [vmem:[%s0 + $0xd4] sm:$0xf]
  %v70 = vld [vmem:[%s0 + $0xd8] sm:$0xf]
  %v71 = vld [vmem:[%s0 + $0xdc] sm:$0xf]
  %v72 = vld [vmem:[%s0 + $0xe0] sm:$0xf]
  %v73 = vld [vmem:[%s0 + $0xe4] sm:$0xf]
  %v74 = vld [vmem:[%s0 + $0xe8] sm:$0xf]
  %v75 = vld [vmem:[%s0 + $0xec] sm:$0xf]
  %v76 = vld [vmem:[%s0 + $0xf0] sm:$0xf]
  %v77 = vld [vmem:[%s0 + $0xf4] sm:$0xf]
  %v78 = vld [vmem:[%s0 + $0xf8] sm:$0xf]
  %v79 = vld [vmem:[%s0 + $0xfc] sm:$0xf]
  %v80 = vunpack.c.l.bf16 %v16
  %v81 = vunpack.c.l.bf16 %v17
  %v82 = vunpack.c.l.bf16 %v18
  %v83 = vunpack.c.l.bf16 %v19
  %v84 = vunpack.c.l.bf16 %v20
  %v85 = vunpack.c.l.bf16 %v21
  %v86 = vunpack.c.l.bf16 %v22
  %v87 = vunpack.c.l.bf16 %v23
  %v88 = vunpack.c.l.bf16 %v24
  %v89 = vunpack.c.l.bf16 %v25
  %v90 = vunpack.c.l.bf16 %v26
  %v91 = vunpack.c.l.bf16 %v27
  %v92 = vunpack.c.l.bf16 %v28
  %v93 = vunpack.c.l.bf16 %v29
  %v94 = vunpack.c.l.bf16 %v30
  %v95 = vunpack.c.l.bf16 %v31
  %v96 = vunpack.c.l.bf16 %v32
  %v97 = vunpack.c.l.bf16 %v33
  %v98 = vunpack.c.l.bf16 %v34
  %v99 = vunpack.c.l.bf16 %v35
  %v100 = vunpack.c.l.bf16 %v36
  %v101 = vunpack.c.l.bf16 %v37
  %v102 = vunpack.c.l.bf16 %v38
  %v103 = vunpack.c.l.bf16 %v39
  %v104 = vunpack.c.l.bf16 %v40
  %v105 = vunpack.c.l.bf16 %v41
  %v106 = vunpack.c.l.bf16 %v42
  %v107 = vunpack.c.l.bf16 %v43
  %v108 = vunpack.c.l.bf16 %v44
  %v109 = vunpack.c.l.bf16 %v45
  %v110 = vunpack.c.l.bf16 %v46
  %v111 = vunpack.c.l.bf16 %v47
  %v112 = vunpack.c.l.bf16 %v48
  %v113 = vunpack.c.l.bf16 %v49
  %v114 = vunpack.c.l.bf16 %v50
  %v115 = vunpack.c.l.bf16 %v51
  %v116 = vunpack.c.l.bf16 %v52
  %v117 = vunpack.c.l.bf16 %v53
  %v118 = vunpack.c.l.bf16 %v54
  %v119 = vunpack.c.l.bf16 %v55
  %v120 = vunpack.c.l.bf16 %v56
  %v121 = vunpack.c.l.bf16 %v57
  %v122 = vunpack.c.l.bf16 %v58
  %v123 = vunpack.c.l.bf16 %v59
  %v124 = vunpack.c.l.bf16 %v60
  %v125 = vunpack.c.l.bf16 %v61
  %v126 = vunpack.c.l.bf16 %v62
  %v127 = vunpack.c.l.bf16 %v63
  %v128 = vunpack.c.l.bf16 %v64
  %v129 = vunpack.c.l.bf16 %v65
  %v130 = vunpack.c.l.bf16 %v66
  %v131 = vunpack.c.l.bf16 %v67
  %v132 = vunpack.c.l.bf16 %v68
  %v133 = vunpack.c.l.bf16 %v69
  %v134 = vunpack.c.l.bf16 %v70
  %v135 = vunpack.c.l.bf16 %v71
  %v136 = vunpack.c.l.bf16 %v72
  %v137 = vunpack.c.l.bf16 %v73
  %v138 = vunpack.c.l.bf16 %v74
  %v139 = vunpack.c.l.bf16 %v75
  %v140 = vunpack.c.l.bf16 %v76
  %v141 = vunpack.c.l.bf16 %v77
  %v142 = vunpack.c.l.bf16 %v78
  %v143 = vunpack.c.l.bf16 %v79
  %v144 = vld [vmem:[%s1] sm:$0x1]
  %v145 = vadd.f32 %v80, %v81
  %v146 = vadd.f32 %v145, %v82
  %v147 = vadd.f32 %v146, %v83
  %v148 = vadd.f32 %v147, %v84
  %v149 = vadd.f32 %v148, %v85
  %v150 = vadd.f32 %v149, %v86
  %v151 = vadd.f32 %v150, %v87
  %v152 = vadd.f32 %v151, %v88
  %v153 = vadd.f32 %v152, %v89
  %v154 = vadd.f32 %v153, %v90
  %v155 = vadd.f32 %v154, %v91
  %v156 = vadd.f32 %v155, %v92
  %v157 = vadd.f32 %v156, %v93
  %v158 = vadd.f32 %v157, %v94
  %v159 = vadd.f32 %v158, %v95
  %v160 = vadd.f32 %v159, %v96
  %v161 = vadd.f32 %v160, %v97
  %v162 = vadd.f32 %v161, %v98
  %v163 = vadd.f32 %v162, %v99
  %v164 = vadd.f32 %v163, %v100
  %v165 = vadd.f32 %v164, %v101
  %v166 = vadd.f32 %v165, %v102
  %v167 = vadd.f32 %v166, %v103
  %v168 = vadd.f32 %v167, %v104
  %v169 = vadd.f32 %v168, %v105
  %v170 = vadd.f32 %v169, %v106
  %v171 = vadd.f32 %v170, %v107
  %v172 = vadd.f32 %v171, %v108
  %v173 = vadd.f32 %v172, %v109
  %v174 = vadd.f32 %v173, %v110
  %v175 = vadd.f32 %v174, %v111
  %v176 = vadd.f32 %v175, %v112
  %v177 = vadd.f32 %v176, %v113
  %v178 = vadd.f32 %v177, %v114
  %v179 = vadd.f32 %v178, %v115
  %v180 = vadd.f32 %v179, %v116
  %v181 = vadd.f32 %v180, %v117
  %v182 = vadd.f32 %v181, %v118
  %v183 = vadd.f32 %v182, %v119
  %v184 = vadd.f32 %v183, %v120
  %v185 = vadd.f32 %v184, %v121
  %v186 = vadd.f32 %v185, %v122
  %v187 = vadd.f32 %v186, %v123
  %v188 = vadd.f32 %v187, %v124
  %v189 = vadd.f32 %v188, %v125
  %v190 = vadd.f32 %v189, %v126
  %v191 = vadd.f32 %v190, %v127
  %v192 = vadd.f32 %v191, %v128
  %v193 = vadd.f32 %v192, %v129
  %v194 = vadd.f32 %v193, %v130
  %v195 = vadd.f32 %v194, %v131
  %v196 = vadd.f32 %v195, %v132
  %v197 = vadd.f32 %v196, %v133
  %v198 = vadd.f32 %v197, %v134
  %v199 = vadd.f32 %v198, %v135
  %v200 = vadd.f32 %v199, %v136
  %v201 = vadd.f32 %v200, %v137
  %v202 = vadd.f32 %v201, %v138
  %v203 = vadd.f32 %v202, %v139
  %v204 = vadd.f32 %v203, %v140
  %v205 = vadd.f32 %v204, %v141
  %v206 = vadd.f32 %v205, %v142
  %v207 = vadd.f32 %v206, %v143
  %v208 = vrot.slane %v207, 4
  %v209 = vadd.f32 %v207, %v208
  %v210 = vrot.slane %v209, 2
  %v211 = vadd.f32 %v209, %v210
  %v212 = vrot.slane %v211, 1
  %v213 = vadd.f32 %v211, %v212
  %v214 = vadd.f32 %v144, %v213
  %215 = vst [vmem:[%s1] sm:$0x1] %v214
  %v216 = vld [vmem:[%s2] sm:$0x1]
  %v217 = vmul.f32 %v80, %v80
  %v218 = vmul.f32 %v81, %v81
  %v219 = vmul.f32 %v82, %v82
  %v220 = vmul.f32 %v83, %v83
  %v221 = vmul.f32 %v84, %v84
  %v222 = vmul.f32 %v85, %v85
  %v223 = vmul.f32 %v86, %v86
  %v224 = vmul.f32 %v87, %v87
  %v225 = vmul.f32 %v88, %v88
  %v226 = vmul.f32 %v89, %v89
  %v227 = vmul.f32 %v90, %v90
  %v228 = vmul.f32 %v91, %v91
  %v229 = vmul.f32 %v92, %v92
  %v230 = vmul.f32 %v93, %v93
  %v231 = vmul.f32 %v94, %v94
  %v232 = vmul.f32 %v95, %v95
  %v233 = vmul.f32 %v96, %v96
  %v234 = vmul.f32 %v97, %v97
  %v235 = vmul.f32 %v98, %v98
  %v236 = vmul.f32 %v99, %v99
  %v237 = vmul.f32 %v100, %v100
  %v238 = vmul.f32 %v101, %v101
  %v239 = vmul.f32 %v102, %v102
  %v240 = vmul.f32 %v103, %v103
  %v241 = vmul.f32 %v104, %v104
  %v242 = vmul.f32 %v105, %v105
  %v243 = vmul.f32 %v106, %v106
  %v244 = vmul.f32 %v107, %v107
  %v245 = vmul.f32 %v108, %v108
  %v246 = vmul.f32 %v109, %v109
  %v247 = vmul.f32 %v110, %v110
  %v248 = vmul.f32 %v111, %v111
  %v249 = vmul.f32 %v112, %v112
  %v250 = vmul.f32 %v113, %v113
  %v251 = vmul.f32 %v114, %v114
  %v252 = vmul.f32 %v115, %v115
  %v253 = vmul.f32 %v116, %v116
  %v254 = vmul.f32 %v117, %v117
  %v255 = vmul.f32 %v118, %v118
  %v256 = vmul.f32 %v119, %v119
  %v257 = vmul.f32 %v120, %v120
  %v258 = vmul.f32 %v121, %v121
  %v259 = vmul.f32 %v122, %v122
  %v260 = vmul.f32 %v123, %v123
  %v261 = vmul.f32 %v124, %v124
  %v262 = vmul.f32 %v125, %v125
  %v263 = vmul.f32 %v126, %v126
  %v264 = vmul.f32 %v127, %v127
  %v265 = vmul.f32 %v128, %v128
  %v266 = vmul.f32 %v129, %v129
  %v267 = vmul.f32 %v130, %v130
  %v268 = vmul.f32 %v131, %v131
  %v269 = vmul.f32 %v132, %v132
  %v270 = vmul.f32 %v133, %v133
  %v271 = vmul.f32 %v134, %v134
  %v272 = vmul.f32 %v135, %v135
  %v273 = vmul.f32 %v136, %v136
  %v274 = vmul.f32 %v137, %v137
  %v275 = vmul.f32 %v138, %v138
  %v276 = vmul.f32 %v139, %v139
  %v277 = vmul.f32 %v140, %v140
  %v278 = vmul.f32 %v141, %v141
  %v279 = vmul.f32 %v142, %v142
  %v280 = vmul.f32 %v143, %v143
  %v281 = vadd.f32 %v217, %v218
  %v282 = vadd.f32 %v281, %v219
  %v283 = vadd.f32 %v282, %v220
  %v284 = vadd.f32 %v283, %v221
  %v285 = vadd.f32 %v284, %v222
  %v286 = vadd.f32 %v285, %v223
  %v287 = vadd.f32 %v286, %v224
  %v288 = vadd.f32 %v287, %v225
  %v289 = vadd.f32 %v288, %v226
  %v290 = vadd.f32 %v289, %v227
  %v291 = vadd.f32 %v290, %v228
  %v292 = vadd.f32 %v291, %v229
  %v293 = vadd.f32 %v292, %v230
  %v294 = vadd.f32 %v293, %v231
  %v295 = vadd.f32 %v294, %v232
  %v296 = vadd.f32 %v295, %v233
  %v297 = vadd.f32 %v296, %v234
  %v298 = vadd.f32 %v297, %v235
  %v299 = vadd.f32 %v298, %v236
  %v300 = vadd.f32 %v299, %v237
  %v301 = vadd.f32 %v300, %v238
  %v302 = vadd.f32 %v301, %v239
  %v303 = vadd.f32 %v302, %v240
  %v304 = vadd.f32 %v303, %v241
  %v305 = vadd.f32 %v304, %v242
  %v306 = vadd.f32 %v305, %v243
  %v307 = vadd.f32 %v306, %v244
  %v308 = vadd.f32 %v307, %v245
  %v309 = vadd.f32 %v308, %v246
  %v310 = vadd.f32 %v309, %v247
  %v311 = vadd.f32 %v310, %v248
  %v312 = vadd.f32 %v311, %v249
  %v313 = vadd.f32 %v312, %v250
  %v314 = vadd.f32 %v313, %v251
  %v315 = vadd.f32 %v314, %v252
  %v316 = vadd.f32 %v315, %v253
  %v317 = vadd.f32 %v316, %v254
  %v318 = vadd.f32 %v317, %v255
  %v319 = vadd.f32 %v318, %v256
  %v320 = vadd.f32 %v319, %v257
  %v321 = vadd.f32 %v320, %v258
  %v322 = vadd.f32 %v321, %v259
  %v323 = vadd.f32 %v322, %v260
  %v324 = vadd.f32 %v323, %v261
  %v325 = vadd.f32 %v324, %v262
  %v326 = vadd.f32 %v325, %v263
  %v327 = vadd.f32 %v326, %v264
  %v328 = vadd.f32 %v327, %v265
  %v329 = vadd.f32 %v328, %v266
  %v330 = vadd.f32 %v329, %v267
  %v331 = vadd.f32 %v330, %v268
  %v332 = vadd.f32 %v331, %v269
  %v333 = vadd.f32 %v332, %v270
  %v334 = vadd.f32 %v333, %v271
  %v335 = vadd.f32 %v334, %v272
  %v336 = vadd.f32 %v335, %v273
  %v337 = vadd.f32 %v336, %v274
  %v338 = vadd.f32 %v337, %v275
  %v339 = vadd.f32 %v338, %v276
  %v340 = vadd.f32 %v339, %v277
  %v341 = vadd.f32 %v340, %v278
  %v342 = vadd.f32 %v341, %v279
  %v343 = vadd.f32 %v342, %v280
  %v344 = vrot.slane %v343, 4
  %v345 = vadd.f32 %v343, %v344
  %v346 = vrot.slane %v345, 2
  %v347 = vadd.f32 %v345, %v346
  %v348 = vrot.slane %v347, 1
  %v349 = vadd.f32 %v347, %v348
  %v350 = vadd.f32 %v216, %v349
  %351 = vst [vmem:[%s2] sm:$0x1] %v350
  // Predicated region
  $region10: #{discriminator_forward.10} parent=0 // pred_check
    _
  $region11: #{discriminator_forward.10} parent=0 // pred_check_branch
    %353 = sbr.rel (0) target = $region13
  $region12: #{discriminator_forward.10} parent=0 // pred_region
    _
  $region13: #{discriminator_forward.10} parent=0 // pred_fallthru
    _
  // Predicated region
  $region14: #{discriminator_forward.10} parent=0 // pred_check
    _
  $region15: #{discriminator_forward.10} parent=0 // pred_check_branch
    %355 = sbr.rel (0) target = $region17
  $region16: #{discriminator_forward.10} parent=0 // pred_region
    _
  $region17: #{discriminator_forward.10} parent=0 // pred_fallthru
    _
  // Predicated region
  $region18: #{discriminator_forward.10} parent=0 // pred_check
    _
  $region19: #{discriminator_forward.10} parent=0 // pred_check_branch
    %357 = sbr.rel (0) target = $region21
  $region20: #{discriminator_forward.10} parent=0 // pred_region
    _
  $region21: #{discriminator_forward.10} parent=0 // pred_fallthru
    _
  // Predicated region
  $region22: #{discriminator_forward.10} parent=0 // pred_check
    _
  $region23: #{discriminator_forward.10} parent=0 // pred_check_branch
    %359 = sbr.rel (0) target = $region25
  $region24: #{discriminator_forward.10} parent=0 // pred_region
    _
  $region25: #{discriminator_forward.10} parent=0 // pred_fallthru
    _

// kernel: discriminator_forward.11
$region0: #{discriminator_forward.11}
  #allocation0 [shape = 'u32[]', space=smem, size = 0x4, offset = 0x4, fixed_abs, tag = 'smem constant byte address 0x4 - core index']
  #allocation1 [shape = 'u32[144,128]{1,0:T(1,128)}', space=vmem, size = 0x12000, scoped, tag = 'internal scratch']
  #allocation2 [shape = 'f32[64,128]{1,0:T(8,128)}', space=vmem, size = 0x8000, scoped, tag = 'scratch operand']
  %s0 = inlined_call_operand.vmem [shape: bf16[128,256], index: 0, kind: input, shape index: {}]
  %s1 = inlined_call_operand.vmem [shape: bf16[256,128], index: 1, kind: input, shape index: {}]
  %s2 = inlined_call_operand.vmem [shape: f32[1,128], index: 2, kind: input, shape index: {}]
  %s3 = inlined_call_operand.vmem [shape: bf16[128,128], index: 3, kind: output, shape index: {}]
  %s4 = sld [smem:[#allocation0]]
  $region53: #{discriminator_forward.11} parent=0
    _
  %s6 = ssub.s32 1, %s4
  %s7 = scalar_select 0, %s6, %s4
  loop: start=0, step=1, limit=4
  $region2: #{discriminator_forward.11} parent=0 // loop_pre_header
    _
  $region3: #{discriminator_forward.11} parent=0 // loop_header
    %s9 = sphi 0, %s13
    %p10 = scmp.ge.s32.totalorder %s9, 4
    %s16 = sphi 0, %s35
    %s17 = sphi 0, %s31
    %s18 = sphi 0, %s27
    %s19 = sphi 0, %s16
    %s20 = sphi 0, %s17
    %s21 = sphi 0, %s18
    %s22 = sphi 0, %s19
    %s23 = sphi 0, %s20
    %s24 = sphi 0, %s21
    %s40 = sphi 0, %s42
    %s43 = sphi 0, %s40
    %s44 = sphi 0, %s43
    %s60 = sphi 0, %s44
    %s68 = sphi 0, %s70
    %s71 = sphi 0, %s68
    %s72 = sphi 0, %s71
    %s88 = sphi 0, %s72
    %s94 = sphi 0, %s96
    %s97 = sphi 0, %s94
    %s98 = sphi 0, %s97
    %s114 = sphi 0, %s98
    %s122 = sphi 0, %s124
    %s125 = sphi 0, %s122
    %s126 = sphi 0, %s125
    %s142 = sphi 0, %s126
  $region4: #{discriminator_forward.11} parent=0 // loop_header_branch
    %12 = sbr.rel (%p10) target = $region8
  $region5: #{discriminator_forward.11} parent=0 // loop_body
    %s14 = ssub.s32 %s9, 1
    %s15 = ssub.s32 %s9, 2
    %s25 = sadd.s32 1, %s18
    %p26 = scmp.ge.s32.totalorder %s25, 1
    %s27 = scalar_select %p26, 0, %s25
    %s28 = sadd.s32 1, %s17
    %s29 = scalar_select %p26, %s28, %s17
    %p30 = scmp.ge.s32.totalorder %s29, 1
    %s31 = scalar_select %p30, 0, %s29
    %s32 = sadd.s32 1, %s16
    %s33 = scalar_select %p30, %s32, %s16
    %p34 = scmp.ge.s32.totalorder %s33, 2
    %s35 = scalar_select %p34, 0, %s33
    %s36 = ssub.s32 %s16, %s35
    %s37 = ssub.s32 %s18, %s27
    %s38 = sor.u32 %s36, %s37
    %p39 = scmp.eq.s32.totalorder %s38, 0
    %s41 = sadd.s32 %s40, 1
    %s42 = scalar_select %p39, %s40, %s41
    %p45 = pneg %p39
    %p46 = scmp.eq.s32.totalorder %s9, 1
    %p47 = por %p45, %p46
    %p48 = scmp.ne.s32.totalorder %s40, %s43
    %p49 = scmp.eq.s32.totalorder %s9, 0
    %p50 = por %p48, %p49
    %p51 = scmp.ne.s32.totalorder %s40, %s43
    %p52 = scmp.eq.s32.totalorder %s14, 1
    %p53 = por %p51, %p52
    %p54 = scmp.ne.s32.totalorder %s43, %s44
    %p55 = scmp.eq.s32.totalorder %s14, 0
    %p56 = por %p54, %p55
    %p57 = scmp.ne.s32.totalorder %s43, %s44
    %p58 = scmp.eq.s32.totalorder %s15, 1
    %p59 = por %p57, %p58
    %p61 = scmp.ne.s32.totalorder %s44, %s60
    %p62 = scmp.eq.s32.totalorder %s15, 0
    %p63 = por %p61, %p62
    %s64 = ssub.s32 %s18, %s27
    %s65 = ssub.s32 %s17, %s31
    %s66 = sor.u32 %s64, %s65
    %p67 = scmp.eq.s32.totalorder %s66, 0
    %s69 = sadd.s32 %s68, 1
    %s70 = scalar_select %p67, %s68, %s69
    %p73 = pneg %p67
    %p74 = scmp.eq.s32.totalorder %s9, 1
    %p75 = por %p73, %p74
    %p76 = scmp.ne.s32.totalorder %s68, %s71
    %p77 = scmp.eq.s32.totalorder %s9, 0
    %p78 = por %p76, %p77
    %p79 = scmp.ne.s32.totalorder %s68, %s71
    %p80 = scmp.eq.s32.totalorder %s14, 1
    %p81 = por %p79, %p80
    %p82 = scmp.ne.s32.totalorder %s71, %s72
    %p83 = scmp.eq.s32.totalorder %s14, 0
    %p84 = por %p82, %p83
    %p85 = scmp.ne.s32.totalorder %s71, %s72
    %p86 = scmp.eq.s32.totalorder %s15, 1
    %p87 = por %p85, %p86
    %p89 = scmp.ne.s32.totalorder %s72, %s88
    %p90 = scmp.eq.s32.totalorder %s15, 0
    %p91 = por %p89, %p90
    %s92 = ssub.s32 %s17, %s31
    %p93 = scmp.eq.s32.totalorder %s92, 0
    %s95 = sadd.s32 %s94, 1
    %s96 = scalar_select %p93, %s94, %s95
    %p99 = pneg %p93
    %p100 = scmp.eq.s32.totalorder %s9, 1
    %p101 = por %p99, %p100
    %p102 = scmp.ne.s32.totalorder %s94, %s97
    %p103 = scmp.eq.s32.totalorder %s9, 0
    %p104 = por %p102, %p103
    %p105 = scmp.ne.s32.totalorder %s94, %s97
    %p106 = scmp.eq.s32.totalorder %s14, 1
    %p107 = por %p105, %p106
    %p108 = scmp.ne.s32.totalorder %s97, %s98
    %p109 = scmp.eq.s32.totalorder %s14, 0
    %p110 = por %p108, %p109
    %p111 = scmp.ne.s32.totalorder %s97, %s98
    %p112 = scmp.eq.s32.totalorder %s15, 1
    %p113 = por %p111, %p112
    %p115 = scmp.ne.s32.totalorder %s98, %s114
    %p116 = scmp.eq.s32.totalorder %s15, 0
    %p117 = por %p115, %p116
    %s118 = ssub.s32 %s16, %s35
    %s119 = ssub.s32 %s17, %s31
    %s120 = sor.u32 %s118, %s119
    %p121 = scmp.eq.s32.totalorder %s120, 0
    %s123 = sadd.s32 %s122, 1
    %s124 = scalar_select %p121, %s122, %s123
    %p127 = pneg %p121
    %p128 = scmp.eq.s32.totalorder %s9, 1
    %p129 = por %p127, %p128
    %p130 = scmp.ne.s32.totalorder %s122, %s125
    %p131 = scmp.eq.s32.totalorder %s9, 0
    %p132 = por %p130, %p131
    %p133 = scmp.ne.s32.totalorder %s122, %s125
    %p134 = scmp.eq.s32.totalorder %s14, 1
    %p135 = por %p133, %p134
    %p136 = scmp.ne.s32.totalorder %s125, %s126
    %p137 = scmp.eq.s32.totalorder %s14, 0
    %p138 = por %p136, %p137
    %p139 = scmp.ne.s32.totalorder %s125, %s126
    %p140 = scmp.eq.s32.totalorder %s15, 1
    %p141 = por %p139, %p140
    %p143 = scmp.ne.s32.totalorder %s126, %s142
    %p144 = scmp.eq.s32.totalorder %s15, 0
    %p145 = por %p143, %p144
    %p146 = scmp.le.s32.totalorder 1, %s9
    %p147 = scmp.lt.s32.totalorder %s9, 3
    %p148 = pnand %p146, %p147
    %p149 = pneg %p148
    // Predicated region
    $region9: #{discriminator_forward.11} parent=5 // pred_check
      _
    $region10: #{discriminator_forward.11} parent=5 // pred_check_branch
      %151 = sbr.rel (%p148) target = $region12
    $region11: #{discriminator_forward.11} parent=5 // pred_region
      %s152 = ssub.s32 %s9, 1
      // Predicated region
      $region13: #{discriminator_forward.11} parent=11 // pred_check
        %p153 = pneg %p84
      $region14: #{discriminator_forward.11} parent=11 // pred_check_branch
        %155 = sbr.rel (%p153) target = $region16
      $region15: #{discriminator_forward.11} parent=11 // pred_region
        %s156 = smul.u32 32, %s21
        %p157 = scmp.lt.s32.totalorder %s156, 31
        %s158 = scalar_select %p157, %s156, 31
        %p159 = scmp.lt.s32.totalorder %s20, 0
        %s160 = scalar_select %p159, %s20, 0
        %s161 = sadd.s32 %s160, %s158
        %s162 = smul.addr %s161, 4
        %s163 = scalar_lea.vmem %s1, %s162
        %s164 = smul.u32 32, %s21
      $region16: #{discriminator_forward.11} parent=11 // pred_fallthru
        _
      // Predicated region
      $region17: #{discriminator_forward.11} parent=11 // pred_check
        %p165 = pneg %p110
      $region18: #{discriminator_forward.11} parent=11 // pred_check_branch
        %167 = sbr.rel (%p165) target = $region20
      $region19: #{discriminator_forward.11} parent=11 // pred_region
        %p168 = scmp.lt.s32.totalorder %s20, 0
        %s169 = scalar_select %p168, %s20, 0
        %s170 = scalar_lea.vmem %s2, %s169
      $region20: #{discriminator_forward.11} parent=11 // pred_fallthru
        _
    $region12: #{discriminator_forward.11} parent=5 // pred_fallthru
      _
    %p171 = scmp.lt.s32.totalorder %s9, 2
    // Predicated region
    $region21: #{discriminator_forward.11} parent=5 // pred_check
      %p172 = pneg %p171
    $region22: #{discriminator_forward.11} parent=5 // pred_check_branch
      %174 = sbr.rel (%p172) target = $region24
    $region23: #{discriminator_forward.11} parent=5 // pred_region
      // Predicated region
      $region25: #{discriminator_forward.11} parent=23 // pred_check
        %p175 = pneg %p50
      $region26: #{discriminator_forward.11} parent=23 // pred_check_branch
        %177 = sbr.rel (%p175) target = $region28
      $region27: #{discriminator_forward.11} parent=23 // pred_region
        %s178 = smul.u32 8, %s16
        %s179 = smul.u32 2, %s18
        %p180 = scmp.lt.s32.totalorder %s178, 15
        %s181 = scalar_select %p180, %s178, 15
        %p182 = scmp.lt.s32.totalorder %s179, 1
        %s183 = scalar_select %p182, %s179, 1
        %s184 = smul.addr %s181, 2
        %s185 = sadd.s32 %s183, %s184
        %s186 = smul.addr %s185, 4
        %s187 = scalar_lea.vmem %s0, %s186
        %s188 = smul.u32 8, %s16
        %s189 = smul.u32 2, %s18
      $region28: #{discriminator_forward.11} parent=23 // pred_fallthru
        _
    $region24: #{discriminator_forward.11} parent=5 // pred_fallthru
      _
    %p190 = scmp.le.s32.totalorder 1, %s9
    %p191 = scmp.lt.s32.totalorder %s9, 3
    %p192 = pnand %p190, %p191
    %p193 = pneg %p192
    // Predicated region
    $region29: #{discriminator_forward.11} parent=5 // pred_check
      _
    $region30: #{discriminator_forward.11} parent=5 // pred_check_branch
      %195 = sbr.rel (%p192) target = $region32
    $region31: #{discriminator_forward.11} parent=5 // pred_region
      %s196 = ssub.s32 %s9, 1
      %s197 = smul.u32 8, %s19
      %s198 = smul.u32 2, %s21
      %p199 = scmp.lt.s32.totalorder %s197, 15
      %s200 = scalar_select %p199, %s197, 15
      %p201 = scmp.lt.s32.totalorder %s198, 1
      %s202 = scalar_select %p201, %s198, 1
      %s203 = smul.addr %s200, 2
      %s204 = sadd.s32 %s202, %s203
      %s205 = smul.addr %s204, 4
      %s206 = scalar_lea.vmem %s0, %s205
      %p207 = pneg %p56
      %p208 = pneg %p53
      %s209 = smul.u32 32, %s21
      %p210 = scmp.lt.s32.totalorder %s209, 31
      %s211 = scalar_select %p210, %s209, 31
      %p212 = scmp.lt.s32.totalorder %s20, 0
      %s213 = scalar_select %p212, %s20, 0
      %s214 = sadd.s32 %s213, %s211
      %s215 = smul.addr %s214, 4
      %s216 = scalar_lea.vmem %s1, %s215
      %p217 = pneg %p84
      %p218 = pneg %p81
      %p219 = scmp.lt.s32.totalorder %s20, 0
      %s220 = scalar_select %p219, %s20, 0
      %s221 = scalar_lea.vmem %s2, %s220
      %p222 = pneg %p110
      %p223 = pneg %p107
      %p224 = pneg %p138
      %p225 = pneg %p135
      %s226 = smul.u32 8, %s19
      %p227 = scmp.lt.s32.totalorder %s226, 15
      %s228 = scalar_select %p227, %s226, 15
      %p229 = scmp.lt.s32.totalorder %s20, 0
      %s230 = scalar_select %p229, %s20, 0
      %s231 = sadd.s32 %s230, %s228
      %s232 = smul.addr %s231, 4
      %s233 = scalar_lea.vmem %s3, %s232
      %s234 = smul.u32 8, %s19
      %s235 = smul.u32 2, %s21
      %p236 = scmp.lt.s32.totalorder %s234, 15
      %s237 = scalar_select %p236, %s234, 15
      %p238 = scmp.lt.s32.totalorder %s235, 1
      %s239 = scalar_select %p238, %s235, 1
      %s240 = smul.addr %s237, 2
      %s241 = sadd.s32 %s239, %s240
      %s242 = smul.addr %s241, 4
      %s243 = scalar_lea.vmem %s0, %s242
      %s244 = smul.u32 8, %s19
      %s245 = smul.u32 2, %s21
      %s246 = smul.u32 32, %s21
      %p247 = scmp.lt.s32.totalorder %s246, 31
      %s248 = scalar_select %p247, %s246, 31
      %p249 = scmp.lt.s32.totalorder %s20, 0
      %s250 = scalar_select %p249, %s20, 0
      %s251 = sadd.s32 %s250, %s248
      %s252 = smul.addr %s251, 4
      %s253 = scalar_lea.vmem %s1, %s252
      %s254 = smul.u32 32, %s21
      %p255 = scmp.lt.s32.totalorder %s20, 0
      %s256 = scalar_select %p255, %s20, 0
      %s257 = scalar_lea.vmem %s2, %s256
      %s258 = smul.u32 8, %s19
      %p259 = scmp.lt.s32.totalorder %s258, 15
      %s260 = scalar_select %p259, %s258, 15
      %p261 = scmp.lt.s32.totalorder %s20, 0
      %s262 = scalar_select %p261, %s20, 0
      %s263 = sadd.s32 %s262, %s260
      %s264 = smul.addr %s263, 4
      %s265 = scalar_lea.vmem %s3, %s264
      %s266 = smul.u32 8, %s19
      %p268 = scmp.eq.s32.totalorder %s21, 0
      // Predicated region
      $region33: #{discriminator_forward.11} parent=31 // pred_check
        %p269 = pneg %p268
      $region34: #{discriminator_forward.11} parent=31 // pred_check_branch
        %271 = sbr.rel (%p269) target = $region36
      $region35: #{discriminator_forward.11} parent=31 // pred_region
        %272 = vst [vmem:[#allocation2] sm:$0xff] 0.0
        %273 = vst [vmem:[#allocation2 + $0x8] sm:$0xff] 0.0
        %274 = vst [vmem:[#allocation2 + $0x10] sm:$0xff] 0.0
        %275 = vst [vmem:[#allocation2 + $0x18] sm:$0xff] 0.0
        %276 = vst [vmem:[#allocation2 + $0x20] sm:$0xff] 0.0
        %277 = vst [vmem:[#allocation2 + $0x28] sm:$0xff] 0.0
        %278 = vst [vmem:[#allocation2 + $0x30] sm:$0xff] 0.0
        %279 = vst [vmem:[#allocation2 + $0x38] sm:$0xff] 0.0
      $region36: #{discriminator_forward.11} parent=31 // pred_fallthru
        _
      %v280 = vld [vmem:[#allocation2] sm:$0xff]
      %v281 = vld [vmem:[#allocation2 + $0x8] sm:$0xff]
      %v282 = vld [vmem:[#allocation2 + $0x10] sm:$0xff]
      %v283 = vld [vmem:[#allocation2 + $0x18] sm:$0xff]
      %v284 = vld [vmem:[#allocation2 + $0x20] sm:$0xff]
      %v285 = vld [vmem:[#allocation2 + $0x28] sm:$0xff]
      %v286 = vld [vmem:[#allocation2 + $0x30] sm:$0xff]
      %v287 = vld [vmem:[#allocation2 + $0x38] sm:$0xff]
      %v288 = vld [vmem:[%s243] sm:$0xff]
      %v289 = vld [vmem:[%s243 + $0x8] sm:$0xff]
      %v290 = vld [vmem:[%s243 + $0x10] sm:$0xff]
      %v291 = vld [vmem:[%s243 + $0x18] sm:$0xff]
      %v292 = vld [vmem:[%s243 + $0x20] sm:$0xff]
      %v293 = vld [vmem:[%s243 + $0x28] sm:$0xff]
      %v294 = vld [vmem:[%s243 + $0x30] sm:$0xff]
      %v295 = vld [vmem:[%s243 + $0x38] sm:$0xff]
      %v296 = vld [vmem:[%s253] sm:$0xf]
      %v297 = vld [vmem:[%s253 + $0x4] sm:$0xf]
      %v298 = vld [vmem:[%s253 + $0x8] sm:$0xf]
      %v299 = vld [vmem:[%s253 + $0xc] sm:$0xf]
      %v300 = vld [vmem:[%s253 + $0x10] sm:$0xf]
      %v301 = vld [vmem:[%s253 + $0x14] sm:$0xf]
      %v302 = vld [vmem:[%s253 + $0x18] sm:$0xf]
      %v303 = vld [vmem:[%s253 + $0x1c] sm:$0xf]
      %v304 = vld [vmem:[%s253 + $0x20] sm:$0xf]
      %v305 = vld [vmem:[%s253 + $0x24] sm:$0xf]
      %v306 = vld [vmem:[%s253 + $0x28] sm:$0xf]
      %v307 = vld [vmem:[%s253 + $0x2c] sm:$0xf]
      %v308 = vld [vmem:[%s253 + $0x30] sm:$0xf]
      %v309 = vld [vmem:[%s253 + $0x34] sm:$0xf]
      %v310 = vld [vmem:[%s253 + $0x38] sm:$0xf]
      %v311 = vld [vmem:[%s253 + $0x3c] sm:$0xf]
      %v312 = vld [vmem:[%s253 + $0x40] sm:$0xf]
      %v313 = vld [vmem:[%s253 + $0x44] sm:$0xf]
      %v314 = vld [vmem:[%s253 + $0x48] sm:$0xf]
      %v315 = vld [vmem:[%s253 + $0x4c] sm:$0xf]
      %v316 = vld [vmem:[%s253 + $0x50] sm:$0xf]
      %v317 = vld [vmem:[%s253 + $0x54] sm:$0xf]
      %v318 = vld [vmem:[%s253 + $0x58] sm:$0xf]
      %v319 = vld [vmem:[%s253 + $0x5c] sm:$0xf]
      %v320 = vld [vmem:[%s253 + $0x60] sm:$0xf]
      %v321 = vld [vmem:[%s253 + $0x64] sm:$0xf]
      %v322 = vld [vmem:[%s253 + $0x68] sm:$0xf]
      %v323 = vld [vmem:[%s253 + $0x6c] sm:$0xf]
      %v324 = vld [vmem:[%s253 + $0x70] sm:$0xf]
      %v325 = vld [vmem:[%s253 + $0x74] sm:$0xf]
      %v326 = vld [vmem:[%s253 + $0x78] sm:$0xf]
      %v327 = vld [vmem:[%s253 + $0x7c] sm:$0xf]
      %v336 = vunpack.c.l.b16 %v288
      %v337 = vunpack.c.h.b16 %v288
      %v338 = vunpack.c.l.b16 %v289
      %v339 = vunpack.c.h.b16 %v289
      %v340 = vunpack.c.l.b16 %v290
      %v341 = vunpack.c.h.b16 %v290
      %v342 = vunpack.c.l.b16 %v291
      %v343 = vunpack.c.h.b16 %v291
      %v344 = vunpack.c.l.b16 %v292
      %v345 = vunpack.c.h.b16 %v292
      %v346 = vunpack.c.l.b16 %v293
      %v347 = vunpack.c.h.b16 %v293
      %v348 = vunpack.c.l.b16 %v294
      %v349 = vunpack.c.h.b16 %v294
      %v350 = vunpack.c.l.b16 %v295
      %v351 = vunpack.c.h.b16 %v295
      %v352 = vpack.c.b16 %v338, %v336
      %v353 = vpack.c.b16 %v339, %v337
      %v354 = vpack.c.b16 %v342, %v340
      %v355 = vpack.c.b16 %v343, %v341
      %v356 = vpack.c.b16 %v346, %v344
      %v357 = vpack.c.b16 %v347, %v345
      %v358 = vpack.c.b16 %v350, %v348
      %v359 = vpack.c.b16 %v351, %v349
      %v400 = vunpack.c.l.b16 %v296
      %v401 = vunpack.c.l.b16 %v297
      %v402 = vunpack.c.l.b16 %v298
      %v403 = vunpack.c.l.b16 %v299
      %v404 = vunpack.c.l.b16 %v300
      %v405 = vunpack.c.l.b16 %v301
      %v406 = vunpack.c.l.b16 %v302
      %v407 = vunpack.c.l.b16 %v303
      %v408 = vunpack.c.l.b16 %v304
      %v409 = vunpack.c.l.b16 %v305
      %v410 = vunpack.c.l.b16 %v306
      %v411 = vunpack.c.l.b16 %v307
      %v412 = vunpack.c.l.b16 %v308
      %v413 = vunpack.c.l.b16 %v309
      %v414 = vunpack.c.l.b16 %v310
      %v415 = vunpack.c.l.b16 %v311
      %v416 = vunpack.c.l.b16 %v312
      %v417 = vunpack.c.l.b16 %v313
      %v418 = vunpack.c.l.b16 %v314
      %v419 = vunpack.c.l.b16 %v315
      %v420 = vunpack.c.l.b16 %v316
      %v421 = vunpack.c.l.b16 %v317
      %v422 = vunpack.c.l.b16 %v318
      %v423 = vunpack.c.l.b16 %v319
      %v424 = vunpack.c.l.b16 %v320
      %v425 = vunpack.c.l.b16 %v321
      %v426 = vunpack.c.l.b16 %v322
      %v427 = vunpack.c.l.b16 %v323
      %v428 = vunpack.c.l.b16 %v324
      %v429 = vunpack.c.l.b16 %v325
      %v430 = vunpack.c.l.b16 %v326
      %v431 = vunpack.c.l.b16 %v327
      %v432 = vpack.c.b16 %v401, %v400
      %v433 = vpack.c.b16 %v403, %v402
      %v434 = vpack.c.b16 %v405, %v404
      %v435 = vpack.c.b16 %v407, %v406
      %v436 = vpack.c.b16 %v409, %v408
      %v437 = vpack.c.b16 %v411, %v410
      %v438 = vpack.c.b16 %v413, %v412
      %v439 = vpack.c.b16 %v415, %v414
      %v440 = vpack.c.b16 %v417, %v416
      %v441 = vpack.c.b16 %v419, %v418
      %v442 = vpack.c.b16 %v421, %v420
      %v443 = vpack.c.b16 %v423, %v422
      %v444 = vpack.c.b16 %v425, %v424
      %v445 = vpack.c.b16 %v427, %v426
      %v446 = vpack.c.b16 %v429, %v428
      %v447 = vpack.c.b16 %v431, %v430
      %464 = vmatprep.subr.bf16.mxu0 0
      %465 = vmatpush1.bf16.msra.mxu0 %v432
      %466 = vmatprep.subr.bf16.mxu0 0
      %467 = vmatpush1.bf16.msra.mxu0 %v433
      %468 = vmatprep.subr.bf16.mxu0 0
      %469 = vmatpush1.bf16.msra.mxu0 %v434
      %470 = vmatprep.subr.bf16.mxu0 0
      %471 = vmatpush1.bf16.msra.mxu0 %v435
      %472 = vmatprep.subr.bf16.mxu0 0
      %473 = vmatpush1.bf16.msra.mxu0 %v436
      %474 = vmatprep.subr.bf16.mxu0 0
      %475 = vmatpush1.bf16.msra.mxu0 %v437
      %476 = vmatprep.subr.bf16.mxu0 0
      %477 = vmatpush1.bf16.msra.mxu0 %v438
      %478 = vmatprep.subr.bf16.mxu0 0
      %479 = vmatpush1.bf16.msra.mxu0 %v439
      %480 = vmatprep.subr.bf16.mxu0 0
      %481 = vmatpush1.bf16.msra.mxu0 %v440
      %482 = vmatprep.subr.bf16.mxu0 0
      %483 = vmatpush1.bf16.msra.mxu0 %v441
      %484 = vmatprep.subr.bf16.mxu0 0
      %485 = vmatpush1.bf16.msra.mxu0 %v442
      %486 = vmatprep.subr.bf16.mxu0 0
      %487 = vmatpush1.bf16.msra.mxu0 %v443
      %488 = vmatprep.subr.bf16.mxu0 0
      %489 = vmatpush1.bf16.msra.mxu0 %v444
      %490 = vmatprep.subr.bf16.mxu0 0
      %491 = vmatpush1.bf16.msra.mxu0 %v445
      %492 = vmatprep.subr.bf16.mxu0 0
      %493 = vmatpush1.bf16.msra.mxu0 %v446
      %494 = vmatprep.subr.bf16.mxu0 0
      %495 = vmatpush1.bf16.msra.mxu0 %v447
      %496 = vmatprep.mubr.bf16.mxu0 %v353
      %497 = vmatmul.mubr.bf16.gmra.mrb[0].mxu0 %v352
      %v498 = vpop.f32.mrb[0].mxu0
      %v499 = vadd.f32 0.0, %v498
      %v500 = vpop.f32.mrb[0].mxu0
      %v501 = vpop.f32.mrb[0].mxu0
      %v502 = vadd.f32 0.0, %v501
      %v503 = vpop.f32.mrb[0].mxu0
      %504 = vmatprep.mubr.bf16.mxu0 %v355
      %505 = vmatmul.mubr.bf16.gmra.mrb[0].mxu0 %v354
      %v506 = vpop.f32.mrb[0].mxu0
      %v507 = vadd.f32 0.0, %v506
      %v508 = vpop.f32.mrb[0].mxu0
      %v509 = vpop.f32.mrb[0].mxu0
      %v510 = vadd.f32 0.0, %v509
      %v511 = vpop.f32.mrb[0].mxu0
      %512 = vmatprep.mubr.bf16.mxu0 %v357
      %513 = vmatmul.mubr.bf16.gmra.mrb[0].mxu0 %v356
      %v514 = vpop.f32.mrb[0].mxu0
      %v515 = vadd.f32 0.0, %v514
      %v516 = vpop.f32.mrb[0].mxu0
      %v517 = vpop.f32.mrb[0].mxu0
      %v518 = vadd.f32 0.0, %v517
      %v519 = vpop.f32.mrb[0].mxu0
      %520 = vmatprep.mubr.bf16.mxu0 %v359
      %521 = vmatmul.mubr.bf16.gmra.mrb[0].mxu0 %v358
      %v522 = vpop.f32.mrb[0].mxu0
      %v523 = vadd.f32 0.0, %v522
      %v524 = vpop.f32.mrb[0].mxu0
      %v525 = vpop.f32.mrb[0].mxu0
      %v526 = vadd.f32 0.0, %v525
      %v527 = vpop.f32.mrb[0].mxu0
      %528 = vdwg.mxu0
      %v529 = vadd.f32 %v280, %v499
      %v530 = vadd.f32 %v281, %v502
      %v531 = vadd.f32 %v282, %v507
      %v532 = vadd.f32 %v283, %v510
      %v533 = vadd.f32 %v284, %v515
      %v534 = vadd.f32 %v285, %v518
      %v535 = vadd.f32 %v286, %v523
      %v536 = vadd.f32 %v287, %v526
      %537 = vst [vmem:[#allocation2] sm:$0xff] %v529
      %538 = vst [vmem:[#allocation2 + $0x8] sm:$0xff] %v530
      %539 = vst [vmem:[#allocation2 + $0x10] sm:$0xff] %v531
      %540 = vst [vmem:[#allocation2 + $0x18] sm:$0xff] %v532
      %541 = vst [vmem:[#allocation2 + $0x20] sm:$0xff] %v533
      %542 = vst [vmem:[#allocation2 + $0x28] sm:$0xff] %v534
      %543 = vst [vmem:[#allocation2 + $0x30] sm:$0xff] %v535
      %544 = vst [vmem:[#allocation2 + $0x38] sm:$0xff] %v536
      // Predicated region
      $region37: #{discriminator_forward.11} parent=31 // pred_check
        %p545 = pneg %p268
      $region38: #{discriminator_forward.11} parent=31 // pred_check_branch
        %547 = sbr.rel (%p545) target = $region40
      $region39: #{discriminator_forward.11} parent=31 // pred_region
        %v548 = vld [vmem:[#allocation2] sm:$0xff]
        %v549 = vld [vmem:[#allocation2 + $0x8] sm:$0xff]
        %v550 = vld [vmem:[#allocation2 + $0x10] sm:$0xff]
        %v551 = vld [vmem:[#allocation2 + $0x18] sm:$0xff]
        %v552 = vld [vmem:[#allocation2 + $0x20] sm:$0xff]
        %v553 = vld [vmem:[#allocation2 + $0x28] sm:$0xff]
        %v554 = vld [vmem:[#allocation2 + $0x30] sm:$0xff]
        %v555 = vld [vmem:[#allocation2 + $0x38] sm:$0xff]
        %v556 = vld [vmem:[%s257] sm:$0x1]
        %v558 = vlaneseq
        %v559 = vshrl.u32 %v558, 7
        %v560 = vsub.s32 0, %v559
        %v561 = vrot.slane %v556, %v560
        %v563 = vadd.f32 %v548, %v561
        %v564 = vadd.f32 %v549, %v561
        %v565 = vadd.f32 %v550, %v561
        %v566 = vadd.f32 %v551, %v561
        %v567 = vadd.f32 %v552, %v561
        %v568 = vadd.f32 %v553, %v561
        %v569 = vadd.f32 %v554, %v561
        %v570 = vadd.f32 %v555, %v561
        %vm571 = vcmp.gt.f32.partialorder %v563, 0.0
        %vm572 = vcmp.gt.f32.partialorder %v564, 0.0
        %vm573 = vcmp.gt.f32.partialorder %v565, 0.0
        %vm574 = vcmp.gt.f32.partialorder %v566, 0.0
        %vm575 = vcmp.gt.f32.partialorder %v567, 0.0
        %vm576 = vcmp.gt.f32.partialorder %v568, 0.0
        %vm577 = vcmp.gt.f32.partialorder %v569, 0.0
        %vm578 = vcmp.gt.f32.partialorder %v570, 0.0
        %v579 = vmul.f32 %v563, 0.01
        %v580 = vmul.f32 %v564, 0.01
        %v581 = vmul.f32 %v565, 0.01
        %v582 = vmul.f32 %v566, 0.01
        %v583 = vmul.f32 %v567, 0.01
        %v584 = vmul.f32 %v568, 0.01
        %v585 = vmul.f32 %v569, 0.01
        %v586 = vmul.f32 %v570, 0.01
        %v587 = vsel %vm571, %v563, %v579
        %v588 = vsel %vm572, %v564, %v580
        %v589 = vsel %vm573, %v565, %v581
        %v590 = vsel %vm574, %v566, %v582
        %v591 = vsel %vm575, %v567, %v583
        %v592 = vsel %vm576, %v568, %v584
        %v593 = vsel %vm577, %v569, %v585
        %v594 = vsel %vm578, %v570, %v586
        %v595 = vpack.c.bf16 %v588, %v587
        %v596 = vpack.c.bf16 %v590, %v589
        %v597 = vpack.c.bf16 %v592, %v591
        %v598 = vpack.c.bf16 %v594, %v593
        %v603 = vunpack.c.l.b16 %v595
        %v604 = vunpack.c.h.b16 %v595
        %v605 = vunpack.c.l.b16 %v596
        %v606 = vunpack.c.h.b16 %v596
        %v607 = vunpack.c.l.b16 %v597
        %v608 = vunpack.c.h.b16 %v597
        %v609 = vunpack.c.l.b16 %v598
        %v610 = vunpack.c.h.b16 %v598
        %v611 = vpack.c.b16 %v603, %v603
        %v612 = vpack.c.b16 %v604, %v604
        %v613 = vpack.c.b16 %v605, %v605
        %v614 = vpack.c.b16 %v606, %v606
        %v615 = vpack.c.b16 %v607, %v607
        %v616 = vpack.c.b16 %v608, %v608
        %v617 = vpack.c.b16 %v609, %v609
        %v618 = vpack.c.b16 %v610, %v610
        %627 = vst [vmem:[%s265] sm:$0xf] %v611
        %628 = vst [vmem:[%s265 + $0x4] sm:$0xf] %v612
        %629 = vst [vmem:[%s265 + $0x8] sm:$0xf] %v613
        %630 = vst [vmem:[%s265 + $0xc] sm:$0xf] %v614
        %631 = vst [vmem:[%s265 + $0x10] sm:$0xf] %v615
        %632 = vst [vmem:[%s265 + $0x14] sm:$0xf] %v616
        %633 = vst [vmem:[%s265 + $0x18] sm:$0xf] %v617
        %634 = vst [vmem:[%s265 + $0x1c] sm:$0xf] %v618
      $region40: #{discriminator_forward.11} parent=31 // pred_fallthru
        _
      %s635 = smul.u32 8, %s19
      %p636 = scmp.lt.s32.totalorder %s635, 15
      %s637 = scalar_select %p636, %s635, 15
      %p638 = scmp.lt.s32.totalorder %s20, 0
      %s639 = scalar_select %p638, %s20, 0
      %s640 = sadd.s32 %s639, %s637
      %s641 = smul.addr %s640, 4
      %s642 = scalar_lea.vmem %s3, %s641
      // Predicated region
      $region41: #{discriminator_forward.11} parent=31 // pred_check
        %p643 = pneg %p135
      $region42: #{discriminator_forward.11} parent=31 // pred_check_branch
        %645 = sbr.rel (%p643) target = $region44
      $region43: #{discriminator_forward.11} parent=31 // pred_region
        %s646 = smul.u32 8, %s19
      $region44: #{discriminator_forward.11} parent=31 // pred_fallthru
        _
    $region32: #{discriminator_forward.11} parent=5 // pred_fallthru
      _
    %p647 = scmp.le.s32.totalorder 2, %s9
    // Predicated region
    $region45: #{discriminator_forward.11} parent=5 // pred_check
      %p648 = pneg %p647
    $region46: #{discriminator_forward.11} parent=5 // pred_check_branch
      %650 = sbr.rel (%p648) target = $region48
    $region47: #{discriminator_forward.11} parent=5 // pred_region
      %s651 = ssub.s32 %s9, 2
      // Predicated region
      $region49: #{discriminator_forward.11} parent=47 // pred_check
        %p652 = pneg %p141
      $region50: #{discriminator_forward.11} parent=47 // pred_check_branch
        %654 = sbr.rel (%p652) target = $region52
      $region51: #{discriminator_forward.11} parent=47 // pred_region
        %s655 = smul.u32 8, %s22
        %p656 = scmp.lt.s32.totalorder %s655, 15
        %s657 = scalar_select %p656, %s655, 15
        %p658 = scmp.lt.s32.totalorder %s23, 0
        %s659 = scalar_select %p658, %s23, 0
        %s660 = sadd.s32 %s659, %s657
        %s661 = smul.addr %s660, 4
        %s662 = scalar_lea.vmem %s3, %s661
      $region52: #{discriminator_forward.11} parent=47 // pred_fallthru
        _
    $region48: #{discriminator_forward.11} parent=5 // pred_fallthru
      _
  $region6: #{discriminator_forward.11} parent=0 // loop_footer
    %s13 = sadd.s32 1, %s9
  $region7: #{discriminator_forward.11} parent=0 // loop_footer_branch
    %8 = sbr.rel target = $region3
  $region8: #{discriminator_forward.11} parent=0 // loop_exit
    _

// kernel: discriminator_forward.12
$region0: #{discriminator_forward.12}
  #allocation0 [shape = 'u32[]', space=smem, size = 0x4, offset = 0x4, fixed_abs, tag = 'smem constant byte address 0x4 - core index']
  #allocation1 [shape = 'u32[144,128]{1,0:T(1,128)}', space=vmem, size = 0x12000, scoped, tag = 'internal scratch']
  %s0 = inlined_call_operand.vmem [shape: bf16[128,128], index: 0, kind: input, shape index: {}]
  %s1 = inlined_call_operand.vmem [shape: f32[1,128], index: 1, kind: output, shape index: {0}]
  %s2 = inlined_call_operand.vmem [shape: f32[1,128], index: 2, kind: output, shape index: {1}]
  %3 = xla_tuple %s1, %s2
  %s4 = sld [smem:[#allocation0]]
  $region26: #{discriminator_forward.12} parent=0
    _
  %s6 = ssub.s32 1, %s4
  %s7 = scalar_select 0, %s6, %s4
  // Predicated region
  $region2: #{discriminator_forward.12} parent=0 // pred_check
    _
  $region3: #{discriminator_forward.12} parent=0 // pred_check_branch
    %9 = sbr.rel (0) target = $region5
  $region4: #{discriminator_forward.12} parent=0 // pred_region
    _
  $region5: #{discriminator_forward.12} parent=0 // pred_fallthru
    _
  %p10 = scmp.eq.s32.totalorder 0, 0
  // Predicated region
  $region6: #{discriminator_forward.12} parent=0 // pred_check
    %p11 = pneg %p10
  $region7: #{discriminator_forward.12} parent=0 // pred_check_branch
    %13 = sbr.rel (%p11) target = $region9
  $region8: #{discriminator_forward.12} parent=0 // pred_region
    %14 = vst [vmem:[%s1] sm:$0x1] 0.0
    %15 = vst [vmem:[%s2] sm:$0x1] 0.0
  $region9: #{discriminator_forward.12} parent=0 // pred_fallthru
    _
  %v16 = vld [vmem:[%s0] sm:$0xf]
  %v17 = vld [vmem:[%s0 + $0x4] sm:$0xf]
  %v18 = vld [vmem:[%s0 + $0x8] sm:$0xf]
  %v19 = vld [vmem:[%s0 + $0xc] sm:$0xf]
  %v20 = vld [vmem:[%s0 + $0x10] sm:$0xf]
  %v21 = vld [vmem:[%s0 + $0x14] sm:$0xf]
  %v22 = vld [vmem:[%s0 + $0x18] sm:$0xf]
  %v23 = vld [vmem:[%s0 + $0x1c] sm:$0xf]
  %v24 = vld [vmem:[%s0 + $0x20] sm:$0xf]
  %v25 = vld [vmem:[%s0 + $0x24] sm:$0xf]
  %v26 = vld [vmem:[%s0 + $0x28] sm:$0xf]
  %v27 = vld [vmem:[%s0 + $0x2c] sm:$0xf]
  %v28 = vld [vmem:[%s0 + $0x30] sm:$0xf]
  %v29 = vld [vmem:[%s0 + $0x34] sm:$0xf]
  %v30 = vld [vmem:[%s0 + $0x38] sm:$0xf]
  %v31 = vld [vmem:[%s0 + $0x3c] sm:$0xf]
  %v32 = vunpack.c.l.bf16 %v16
  %v33 = vunpack.c.l.bf16 %v17
  %v34 = vunpack.c.l.bf16 %v18
  %v35 = vunpack.c.l.bf16 %v19
  %v36 = vunpack.c.l.bf16 %v20
  %v37 = vunpack.c.l.bf16 %v21
  %v38 = vunpack.c.l.bf16 %v22
  %v39 = vunpack.c.l.bf16 %v23
  %v40 = vunpack.c.l.bf16 %v24
  %v41 = vunpack.c.l.bf16 %v25
  %v42 = vunpack.c.l.bf16 %v26
  %v43 = vunpack.c.l.bf16 %v27
  %v44 = vunpack.c.l.bf16 %v28
  %v45 = vunpack.c.l.bf16 %v29
  %v46 = vunpack.c.l.bf16 %v30
  %v47 = vunpack.c.l.bf16 %v31
  %v48 = vld [vmem:[%s1] sm:$0x1]
  %v49 = vadd.f32 %v32, %v33
  %v50 = vadd.f32 %v49, %v34
  %v51 = vadd.f32 %v50, %v35
  %v52 = vadd.f32 %v51, %v36
  %v53 = vadd.f32 %v52, %v37
  %v54 = vadd.f32 %v53, %v38
  %v55 = vadd.f32 %v54, %v39
  %v56 = vadd.f32 %v55, %v40
  %v57 = vadd.f32 %v56, %v41
  %v58 = vadd.f32 %v57, %v42
  %v59 = vadd.f32 %v58, %v43
  %v60 = vadd.f32 %v59, %v44
  %v61 = vadd.f32 %v60, %v45
  %v62 = vadd.f32 %v61, %v46
  %v63 = vadd.f32 %v62, %v47
  %v64 = vrot.slane %v63, 4
  %v65 = vadd.f32 %v63, %v64
  %v66 = vrot.slane %v65, 2
  %v67 = vadd.f32 %v65, %v66
  %v68 = vrot.slane %v67, 1
  %v69 = vadd.f32 %v67, %v68
  %v70 = vadd.f32 %v48, %v69
  %71 = vst [vmem:[%s1] sm:$0x1] %v70
  %v72 = vld [vmem:[%s2] sm:$0x1]
  %v73 = vmul.f32 %v32, %v32
  %v74 = vmul.f32 %v33, %v33
  %v75 = vmul.f32 %v34, %v34
  %v76 = vmul.f32 %v35, %v35
  %v77 = vmul.f32 %v36, %v36
  %v78 = vmul.f32 %v37, %v37
  %v79 = vmul.f32 %v38, %v38
  %v80 = vmul.f32 %v39, %v39
  %v81 = vmul.f32 %v40, %v40
  %v82 = vmul.f32 %v41, %v41
  %v83 = vmul.f32 %v42, %v42
  %v84 = vmul.f32 %v43, %v43
  %v85 = vmul.f32 %v44, %v44
  %v86 = vmul.f32 %v45, %v45
  %v87 = vmul.f32 %v46, %v46
  %v88 = vmul.f32 %v47, %v47
  %v89 = vadd.f32 %v73, %v74
  %v90 = vadd.f32 %v89, %v75
  %v91 = vadd.f32 %v90, %v76
  %v92 = vadd.f32 %v91, %v77
  %v93 = vadd.f32 %v92, %v78
  %v94 = vadd.f32 %v93, %v79
  %v95 = vadd.f32 %v94, %v80
  %v96 = vadd.f32 %v95, %v81
  %v97 = vadd.f32 %v96, %v82
  %v98 = vadd.f32 %v97, %v83
  %v99 = vadd.f32 %v98, %v84
  %v100 = vadd.f32 %v99, %v85
  %v101 = vadd.f32 %v100, %v86
  %v102 = vadd.f32 %v101, %v87
  %v103 = vadd.f32 %v102, %v88
  %v104 = vrot.slane %v103, 4
  %v105 = vadd.f32 %v103, %v104
  %v106 = vrot.slane %v105, 2
  %v107 = vadd.f32 %v105, %v106
  %v108 = vrot.slane %v107, 1
  %v109 = vadd.f32 %v107, %v108
  %v110 = vadd.f32 %v72, %v109
  %111 = vst [vmem:[%s2] sm:$0x1] %v110
  // Predicated region
  $region10: #{discriminator_forward.12} parent=0 // pred_check
    _
  $region11: #{discriminator_forward.12} parent=0 // pred_check_branch
    %113 = sbr.rel (0) target = $region13
  $region12: #{discriminator_forward.12} parent=0 // pred_region
    _
  $region13: #{discriminator_forward.12} parent=0 // pred_fallthru
    _
  // Predicated region
  $region14: #{discriminator_forward.12} parent=0 // pred_check
    _
  $region15: #{discriminator_forward.12} parent=0 // pred_check_branch
    %115 = sbr.rel (0) target = $region17
  $region16: #{discriminator_forward.12} parent=0 // pred_region
    _
  $region17: #{discriminator_forward.12} parent=0 // pred_fallthru
    _
  // Predicated region
  $region18: #{discriminator_forward.12} parent=0 // pred_check
    _
  $region19: #{discriminator_forward.12} parent=0 // pred_check_branch
    %117 = sbr.rel (0) target = $region21
  $region20: #{discriminator_forward.12} parent=0 // pred_region
    _
  $region21: #{discriminator_forward.12} parent=0 // pred_fallthru
    _
  // Predicated region
  $region22: #{discriminator_forward.12} parent=0 // pred_check
    _
  $region23: #{discriminator_forward.12} parent=0 // pred_check_branch
    %119 = sbr.rel (0) target = $region25
  $region24: #{discriminator_forward.12} parent=0 // pred_region
    _
  $region25: #{discriminator_forward.12} parent=0 // pred_fallthru
    _

// kernel: discriminator_forward.14
$region0: #{discriminator_forward.14}
  #allocation0 [shape = 'u32[]', space=smem, size = 0x4, offset = 0x4, fixed_abs, tag = 'smem constant byte address 0x4 - core index']
  #allocation1 [shape = 'u32[144,128]{1,0:T(1,128)}', space=vmem, size = 0x12000, scoped, tag = 'internal scratch']
  %s0 = inlined_call_operand.vmem [shape: bf16[32,128], index: 0, kind: input, shape index: {}]
  %s1 = inlined_call_operand.vmem [shape: f32[1,128], index: 1, kind: output, shape index: {0}]
  %s2 = inlined_call_operand.vmem [shape: f32[1,128], index: 2, kind: output, shape index: {1}]
  %3 = xla_tuple %s1, %s2
  %s4 = sld [smem:[#allocation0]]
  $region26: #{discriminator_forward.14} parent=0
    _
  %s6 = ssub.s32 1, %s4
  %s7 = scalar_select 0, %s6, %s4
  // Predicated region
  $region2: #{discriminator_forward.14} parent=0 // pred_check
    _
  $region3: #{discriminator_forward.14} parent=0 // pred_check_branch
    %9 = sbr.rel (0) target = $region5
  $region4: #{discriminator_forward.14} parent=0 // pred_region
    _
  $region5: #{discriminator_forward.14} parent=0 // pred_fallthru
    _
  %p10 = scmp.eq.s32.totalorder 0, 0
  // Predicated region
  $region6: #{discriminator_forward.14} parent=0 // pred_check
    %p11 = pneg %p10
  $region7: #{discriminator_forward.14} parent=0 // pred_check_branch
    %13 = sbr.rel (%p11) target = $region9
  $region8: #{discriminator_forward.14} parent=0 // pred_region
    %14 = vst [vmem:[%s1] sm:$0x1] 0.0
    %15 = vst [vmem:[%s2] sm:$0x1] 0.0
  $region9: #{discriminator_forward.14} parent=0 // pred_fallthru
    _
  %v16 = vld [vmem:[%s0] sm:$0xf]
  %v17 = vld [vmem:[%s0 + $0x4] sm:$0xf]
  %v18 = vld [vmem:[%s0 + $0x8] sm:$0xf]
  %v19 = vld [vmem:[%s0 + $0xc] sm:$0xf]
  %v20 = vunpack.c.l.bf16 %v16
  %v21 = vunpack.c.l.bf16 %v17
  %v22 = vunpack.c.l.bf16 %v18
  %v23 = vunpack.c.l.bf16 %v19
  %v24 = vld [vmem:[%s1] sm:$0x1]
  %v25 = vadd.f32 %v20, %v21
  %v26 = vadd.f32 %v25, %v22
  %v27 = vadd.f32 %v26, %v23
  %v28 = vrot.slane %v27, 4
  %v29 = vadd.f32 %v27, %v28
  %v30 = vrot.slane %v29, 2
  %v31 = vadd.f32 %v29, %v30
  %v32 = vrot.slane %v31, 1
  %v33 = vadd.f32 %v31, %v32
  %v34 = vadd.f32 %v24, %v33
  %35 = vst [vmem:[%s1] sm:$0x1] %v34
  %v36 = vld [vmem:[%s2] sm:$0x1]
  %v37 = vmul.f32 %v20, %v20
  %v38 = vmul.f32 %v21, %v21
  %v39 = vmul.f32 %v22, %v22
  %v40 = vmul.f32 %v23, %v23
  %v41 = vadd.f32 %v37, %v38
  %v42 = vadd.f32 %v41, %v39
  %v43 = vadd.f32 %v42, %v40
  %v44 = vrot.slane %v43, 4
  %v45 = vadd.f32 %v43, %v44
  %v46 = vrot.slane %v45, 2
  %v47 = vadd.f32 %v45, %v46
  %v48 = vrot.slane %v47, 1
  %v49 = vadd.f32 %v47, %v48
  %v50 = vadd.f32 %v36, %v49
  %51 = vst [vmem:[%s2] sm:$0x1] %v50
  // Predicated region
  $region10: #{discriminator_forward.14} parent=0 // pred_check
    _
  $region11: #{discriminator_forward.14} parent=0 // pred_check_branch
    %53 = sbr.rel (0) target = $region13
  $region12: #{discriminator_forward.14} parent=0 // pred_region
    _
  $region13: #{discriminator_forward.14} parent=0 // pred_fallthru
    _
  // Predicated region
  $region14: #{discriminator_forward.14} parent=0 // pred_check
    _
  $region15: #{discriminator_forward.14} parent=0 // pred_check_branch
    %55 = sbr.rel (0) target = $region17
  $region16: #{discriminator_forward.14} parent=0 // pred_region
    _
  $region17: #{discriminator_forward.14} parent=0 // pred_fallthru
    _
  // Predicated region
  $region18: #{discriminator_forward.14} parent=0 // pred_check
    _
  $region19: #{discriminator_forward.14} parent=0 // pred_check_branch
    %57 = sbr.rel (0) target = $region21
  $region20: #{discriminator_forward.14} parent=0 // pred_region
    _
  $region21: #{discriminator_forward.14} parent=0 // pred_fallthru
    _
  // Predicated region
  $region22: #{discriminator_forward.14} parent=0 // pred_check
    _
  $region23: #{discriminator_forward.14} parent=0 // pred_check_branch
    %59 = sbr.rel (0) target = $region25
  $region24: #{discriminator_forward.14} parent=0 // pred_region
    _
  $region25: #{discriminator_forward.14} parent=0 // pred_fallthru
    _

// kernel: discriminator_forward.13
$region0: #{discriminator_forward.13}
  #allocation0 [shape = 'u32[]', space=smem, size = 0x4, offset = 0x4, fixed_abs, tag = 'smem constant byte address 0x4 - core index']
  #allocation1 [shape = 'u32[144,128]{1,0:T(1,128)}', space=vmem, size = 0x12000, scoped, tag = 'internal scratch']
  #allocation2 [shape = 'f32[16,128]{1,0:T(8,128)}', space=vmem, size = 0x2000, scoped, tag = 'scratch operand']
  %s0 = inlined_call_operand.vmem [shape: bf16[32,512], index: 0, kind: input, shape index: {}]
  %s1 = inlined_call_operand.vmem [shape: bf16[512,128], index: 1, kind: input, shape index: {}]
  %s2 = inlined_call_operand.vmem [shape: f32[1,128], index: 2, kind: input, shape index: {}]
  %s3 = inlined_call_operand.vmem [shape: bf16[32,128], index: 3, kind: output, shape index: {}]
  %s4 = sld [smem:[#allocation0]]
  $region53: #{discriminator_forward.13} parent=0
    _
  %s6 = ssub.s32 1, %s4
  %s7 = scalar_select 0, %s6, %s4
  loop: start=0, step=1, limit=4
  $region2: #{discriminator_forward.13} parent=0 // loop_pre_header
    _
  $region3: #{discriminator_forward.13} parent=0 // loop_header
    %s9 = sphi 0, %s13
    %p10 = scmp.ge.s32.totalorder %s9, 4
    %s16 = sphi 0, %s35
    %s17 = sphi 0, %s31
    %s18 = sphi 0, %s27
    %s19 = sphi 0, %s16
    %s20 = sphi 0, %s17
    %s21 = sphi 0, %s18
    %s22 = sphi 0, %s19
    %s23 = sphi 0, %s20
    %s24 = sphi 0, %s21
    %s40 = sphi 0, %s42
    %s43 = sphi 0, %s40
    %s44 = sphi 0, %s43
    %s60 = sphi 0, %s44
    %s68 = sphi 0, %s70
    %s71 = sphi 0, %s68
    %s72 = sphi 0, %s71
    %s88 = sphi 0, %s72
    %s94 = sphi 0, %s96
    %s97 = sphi 0, %s94
    %s98 = sphi 0, %s97
    %s114 = sphi 0, %s98
    %s122 = sphi 0, %s124
    %s125 = sphi 0, %s122
    %s126 = sphi 0, %s125
    %s142 = sphi 0, %s126
  $region4: #{discriminator_forward.13} parent=0 // loop_header_branch
    %12 = sbr.rel (%p10) target = $region8
  $region5: #{discriminator_forward.13} parent=0 // loop_body
    %s14 = ssub.s32 %s9, 1
    %s15 = ssub.s32 %s9, 2
    %s25 = sadd.s32 1, %s18
    %p26 = scmp.ge.s32.totalorder %s25, 1
    %s27 = scalar_select %p26, 0, %s25
    %s28 = sadd.s32 1, %s17
    %s29 = scalar_select %p26, %s28, %s17
    %p30 = scmp.ge.s32.totalorder %s29, 1
    %s31 = scalar_select %p30, 0, %s29
    %s32 = sadd.s32 1, %s16
    %s33 = scalar_select %p30, %s32, %s16
    %p34 = scmp.ge.s32.totalorder %s33, 2
    %s35 = scalar_select %p34, 0, %s33
    %s36 = ssub.s32 %s16, %s35
    %s37 = ssub.s32 %s18, %s27
    %s38 = sor.u32 %s36, %s37
    %p39 = scmp.eq.s32.totalorder %s38, 0
    %s41 = sadd.s32 %s40, 1
    %s42 = scalar_select %p39, %s40, %s41
    %p45 = pneg %p39
    %p46 = scmp.eq.s32.totalorder %s9, 1
    %p47 = por %p45, %p46
    %p48 = scmp.ne.s32.totalorder %s40, %s43
    %p49 = scmp.eq.s32.totalorder %s9, 0
    %p50 = por %p48, %p49
    %p51 = scmp.ne.s32.totalorder %s40, %s43
    %p52 = scmp.eq.s32.totalorder %s14, 1
    %p53 = por %p51, %p52
    %p54 = scmp.ne.s32.totalorder %s43, %s44
    %p55 = scmp.eq.s32.totalorder %s14, 0
    %p56 = por %p54, %p55
    %p57 = scmp.ne.s32.totalorder %s43, %s44
    %p58 = scmp.eq.s32.totalorder %s15, 1
    %p59 = por %p57, %p58
    %p61 = scmp.ne.s32.totalorder %s44, %s60
    %p62 = scmp.eq.s32.totalorder %s15, 0
    %p63 = por %p61, %p62
    %s64 = ssub.s32 %s18, %s27
    %s65 = ssub.s32 %s17, %s31
    %s66 = sor.u32 %s64, %s65
    %p67 = scmp.eq.s32.totalorder %s66, 0
    %s69 = sadd.s32 %s68, 1
    %s70 = scalar_select %p67, %s68, %s69
    %p73 = pneg %p67
    %p74 = scmp.eq.s32.totalorder %s9, 1
    %p75 = por %p73, %p74
    %p76 = scmp.ne.s32.totalorder %s68, %s71
    %p77 = scmp.eq.s32.totalorder %s9, 0
    %p78 = por %p76, %p77
    %p79 = scmp.ne.s32.totalorder %s68, %s71
    %p80 = scmp.eq.s32.totalorder %s14, 1
    %p81 = por %p79, %p80
    %p82 = scmp.ne.s32.totalorder %s71, %s72
    %p83 = scmp.eq.s32.totalorder %s14, 0
    %p84 = por %p82, %p83
    %p85 = scmp.ne.s32.totalorder %s71, %s72
    %p86 = scmp.eq.s32.totalorder %s15, 1
    %p87 = por %p85, %p86
    %p89 = scmp.ne.s32.totalorder %s72, %s88
    %p90 = scmp.eq.s32.totalorder %s15, 0
    %p91 = por %p89, %p90
    %s92 = ssub.s32 %s17, %s31
    %p93 = scmp.eq.s32.totalorder %s92, 0
    %s95 = sadd.s32 %s94, 1
    %s96 = scalar_select %p93, %s94, %s95
    %p99 = pneg %p93
    %p100 = scmp.eq.s32.totalorder %s9, 1
    %p101 = por %p99, %p100
    %p102 = scmp.ne.s32.totalorder %s94, %s97
    %p103 = scmp.eq.s32.totalorder %s9, 0
    %p104 = por %p102, %p103
    %p105 = scmp.ne.s32.totalorder %s94, %s97
    %p106 = scmp.eq.s32.totalorder %s14, 1
    %p107 = por %p105, %p106
    %p108 = scmp.ne.s32.totalorder %s97, %s98
    %p109 = scmp.eq.s32.totalorder %s14, 0
    %p110 = por %p108, %p109
    %p111 = scmp.ne.s32.totalorder %s97, %s98
    %p112 = scmp.eq.s32.totalorder %s15, 1
    %p113 = por %p111, %p112
    %p115 = scmp.ne.s32.totalorder %s98, %s114
    %p116 = scmp.eq.s32.totalorder %s15, 0
    %p117 = por %p115, %p116
    %s118 = ssub.s32 %s16, %s35
    %s119 = ssub.s32 %s17, %s31
    %s120 = sor.u32 %s118, %s119
    %p121 = scmp.eq.s32.totalorder %s120, 0
    %s123 = sadd.s32 %s122, 1
    %s124 = scalar_select %p121, %s122, %s123
    %p127 = pneg %p121
    %p128 = scmp.eq.s32.totalorder %s9, 1
    %p129 = por %p127, %p128
    %p130 = scmp.ne.s32.totalorder %s122, %s125
    %p131 = scmp.eq.s32.totalorder %s9, 0
    %p132 = por %p130, %p131
    %p133 = scmp.ne.s32.totalorder %s122, %s125
    %p134 = scmp.eq.s32.totalorder %s14, 1
    %p135 = por %p133, %p134
    %p136 = scmp.ne.s32.totalorder %s125, %s126
    %p137 = scmp.eq.s32.totalorder %s14, 0
    %p138 = por %p136, %p137
    %p139 = scmp.ne.s32.totalorder %s125, %s126
    %p140 = scmp.eq.s32.totalorder %s15, 1
    %p141 = por %p139, %p140
    %p143 = scmp.ne.s32.totalorder %s126, %s142
    %p144 = scmp.eq.s32.totalorder %s15, 0
    %p145 = por %p143, %p144
    %p146 = scmp.le.s32.totalorder 1, %s9
    %p147 = scmp.lt.s32.totalorder %s9, 3
    %p148 = pnand %p146, %p147
    %p149 = pneg %p148
    // Predicated region
    $region9: #{discriminator_forward.13} parent=5 // pred_check
      _
    $region10: #{discriminator_forward.13} parent=5 // pred_check_branch
      %151 = sbr.rel (%p148) target = $region12
    $region11: #{discriminator_forward.13} parent=5 // pred_region
      %s152 = ssub.s32 %s9, 1
      // Predicated region
      $region13: #{discriminator_forward.13} parent=11 // pred_check
        %p153 = pneg %p84
      $region14: #{discriminator_forward.13} parent=11 // pred_check_branch
        %155 = sbr.rel (%p153) target = $region16
      $region15: #{discriminator_forward.13} parent=11 // pred_region
        %s156 = smul.u32 64, %s21
        %p157 = scmp.lt.s32.totalorder %s156, 63
        %s158 = scalar_select %p157, %s156, 63
        %p159 = scmp.lt.s32.totalorder %s20, 0
        %s160 = scalar_select %p159, %s20, 0
        %s161 = sadd.s32 %s160, %s158
        %s162 = smul.addr %s161, 4
        %s163 = scalar_lea.vmem %s1, %s162
        %s164 = smul.u32 64, %s21
      $region16: #{discriminator_forward.13} parent=11 // pred_fallthru
        _
      // Predicated region
      $region17: #{discriminator_forward.13} parent=11 // pred_check
        %p165 = pneg %p110
      $region18: #{discriminator_forward.13} parent=11 // pred_check_branch
        %167 = sbr.rel (%p165) target = $region20
      $region19: #{discriminator_forward.13} parent=11 // pred_region
        %p168 = scmp.lt.s32.totalorder %s20, 0
        %s169 = scalar_select %p168, %s20, 0
        %s170 = scalar_lea.vmem %s2, %s169
      $region20: #{discriminator_forward.13} parent=11 // pred_fallthru
        _
    $region12: #{discriminator_forward.13} parent=5 // pred_fallthru
      _
    %p171 = scmp.lt.s32.totalorder %s9, 2
    // Predicated region
    $region21: #{discriminator_forward.13} parent=5 // pred_check
      %p172 = pneg %p171
    $region22: #{discriminator_forward.13} parent=5 // pred_check_branch
      %174 = sbr.rel (%p172) target = $region24
    $region23: #{discriminator_forward.13} parent=5 // pred_region
      // Predicated region
      $region25: #{discriminator_forward.13} parent=23 // pred_check
        %p175 = pneg %p50
      $region26: #{discriminator_forward.13} parent=23 // pred_check_branch
        %177 = sbr.rel (%p175) target = $region28
      $region27: #{discriminator_forward.13} parent=23 // pred_region
        %s178 = smul.u32 2, %s16
        %s179 = smul.u32 4, %s18
        %p180 = scmp.lt.s32.totalorder %s178, 3
        %s181 = scalar_select %p180, %s178, 3
        %p182 = scmp.lt.s32.totalorder %s179, 3
        %s183 = scalar_select %p182, %s179, 3
        %s184 = smul.addr %s181, 4
        %s185 = sadd.s32 %s183, %s184
        %s186 = smul.addr %s185, 4
        %s187 = scalar_lea.vmem %s0, %s186
        %s188 = smul.u32 2, %s16
        %s189 = smul.u32 4, %s18
      $region28: #{discriminator_forward.13} parent=23 // pred_fallthru
        _
    $region24: #{discriminator_forward.13} parent=5 // pred_fallthru
      _
    %p190 = scmp.le.s32.totalorder 1, %s9
    %p191 = scmp.lt.s32.totalorder %s9, 3
    %p192 = pnand %p190, %p191
    %p193 = pneg %p192
    // Predicated region
    $region29: #{discriminator_forward.13} parent=5 // pred_check
      _
    $region30: #{discriminator_forward.13} parent=5 // pred_check_branch
      %195 = sbr.rel (%p192) target = $region32
    $region31: #{discriminator_forward.13} parent=5 // pred_region
      %s196 = ssub.s32 %s9, 1
      %s197 = smul.u32 2, %s19
      %s198 = smul.u32 4, %s21
      %p199 = scmp.lt.s32.totalorder %s197, 3
      %s200 = scalar_select %p199, %s197, 3
      %p201 = scmp.lt.s32.totalorder %s198, 3
      %s202 = scalar_select %p201, %s198, 3
      %s203 = smul.addr %s200, 4
      %s204 = sadd.s32 %s202, %s203
      %s205 = smul.addr %s204, 4
      %s206 = scalar_lea.vmem %s0, %s205
      %p207 = pneg %p56
      %p208 = pneg %p53
      %s209 = smul.u32 64, %s21
      %p210 = scmp.lt.s32.totalorder %s209, 63
      %s211 = scalar_select %p210, %s209, 63
      %p212 = scmp.lt.s32.totalorder %s20, 0
      %s213 = scalar_select %p212, %s20, 0
      %s214 = sadd.s32 %s213, %s211
      %s215 = smul.addr %s214, 4
      %s216 = scalar_lea.vmem %s1, %s215
      %p217 = pneg %p84
      %p218 = pneg %p81
      %p219 = scmp.lt.s32.totalorder %s20, 0
      %s220 = scalar_select %p219, %s20, 0
      %s221 = scalar_lea.vmem %s2, %s220
      %p222 = pneg %p110
      %p223 = pneg %p107
      %p224 = pneg %p138
      %p225 = pneg %p135
      %s226 = smul.u32 2, %s19
      %p227 = scmp.lt.s32.totalorder %s226, 3
      %s228 = scalar_select %p227, %s226, 3
      %p229 = scmp.lt.s32.totalorder %s20, 0
      %s230 = scalar_select %p229, %s20, 0
      %s231 = sadd.s32 %s230, %s228
      %s232 = smul.addr %s231, 4
      %s233 = scalar_lea.vmem %s3, %s232
      %s234 = smul.u32 2, %s19
      %s235 = smul.u32 4, %s21
      %p236 = scmp.lt.s32.totalorder %s234, 3
      %s237 = scalar_select %p236, %s234, 3
      %p238 = scmp.lt.s32.totalorder %s235, 3
      %s239 = scalar_select %p238, %s235, 3
      %s240 = smul.addr %s237, 4
      %s241 = sadd.s32 %s239, %s240
      %s242 = smul.addr %s241, 4
      %s243 = scalar_lea.vmem %s0, %s242
      %s244 = smul.u32 2, %s19
      %s245 = smul.u32 4, %s21
      %s246 = smul.u32 64, %s21
      %p247 = scmp.lt.s32.totalorder %s246, 63
      %s248 = scalar_select %p247, %s246, 63
      %p249 = scmp.lt.s32.totalorder %s20, 0
      %s250 = scalar_select %p249, %s20, 0
      %s251 = sadd.s32 %s250, %s248
      %s252 = smul.addr %s251, 4
      %s253 = scalar_lea.vmem %s1, %s252
      %s254 = smul.u32 64, %s21
      %p255 = scmp.lt.s32.totalorder %s20, 0
      %s256 = scalar_select %p255, %s20, 0
      %s257 = scalar_lea.vmem %s2, %s256
      %s258 = smul.u32 2, %s19
      %p259 = scmp.lt.s32.totalorder %s258, 3
      %s260 = scalar_select %p259, %s258, 3
      %p261 = scmp.lt.s32.totalorder %s20, 0
      %s262 = scalar_select %p261, %s20, 0
      %s263 = sadd.s32 %s262, %s260
      %s264 = smul.addr %s263, 4
      %s265 = scalar_lea.vmem %s3, %s264
      %s266 = smul.u32 2, %s19
      %p268 = scmp.eq.s32.totalorder %s21, 0
      // Predicated region
      $region33: #{discriminator_forward.13} parent=31 // pred_check
        %p269 = pneg %p268
      $region34: #{discriminator_forward.13} parent=31 // pred_check_branch
        %271 = sbr.rel (%p269) target = $region36
      $region35: #{discriminator_forward.13} parent=31 // pred_region
        %272 = vst [vmem:[#allocation2] sm:$0xff] 0.0
        %273 = vst [vmem:[#allocation2 + $0x8] sm:$0xff] 0.0
      $region36: #{discriminator_forward.13} parent=31 // pred_fallthru
        _
      %v274 = vld [vmem:[#allocation2] sm:$0xff]
      %v275 = vld [vmem:[#allocation2 + $0x8] sm:$0xff]
      %v276 = vld [vmem:[%s243] sm:$0xff]
      %v277 = vld [vmem:[%s243 + $0x8] sm:$0xff]
      %v278 = vld [vmem:[%s243 + $0x10] sm:$0xff]
      %v279 = vld [vmem:[%s243 + $0x18] sm:$0xff]
      %v280 = vld [vmem:[%s253] sm:$0xf]
      %v281 = vld [vmem:[%s253 + $0x4] sm:$0xf]
      %v282 = vld [vmem:[%s253 + $0x8] sm:$0xf]
      %v283 = vld [vmem:[%s253 + $0xc] sm:$0xf]
      %v284 = vld [vmem:[%s253 + $0x10] sm:$0xf]
      %v285 = vld [vmem:[%s253 + $0x14] sm:$0xf]
      %v286 = vld [vmem:[%s253 + $0x18] sm:$0xf]
      %v287 = vld [vmem:[%s253 + $0x1c] sm:$0xf]
      %v288 = vld [vmem:[%s253 + $0x20] sm:$0xf]
      %v289 = vld [vmem:[%s253 + $0x24] sm:$0xf]
      %v290 = vld [vmem:[%s253 + $0x28] sm:$0xf]
      %v291 = vld [vmem:[%s253 + $0x2c] sm:$0xf]
      %v292 = vld [vmem:[%s253 + $0x30] sm:$0xf]
      %v293 = vld [vmem:[%s253 + $0x34] sm:$0xf]
      %v294 = vld [vmem:[%s253 + $0x38] sm:$0xf]
      %v295 = vld [vmem:[%s253 + $0x3c] sm:$0xf]
      %v296 = vld [vmem:[%s253 + $0x40] sm:$0xf]
      %v297 = vld [vmem:[%s253 + $0x44] sm:$0xf]
      %v298 = vld [vmem:[%s253 + $0x48] sm:$0xf]
      %v299 = vld [vmem:[%s253 + $0x4c] sm:$0xf]
      %v300 = vld [vmem:[%s253 + $0x50] sm:$0xf]
      %v301 = vld [vmem:[%s253 + $0x54] sm:$0xf]
      %v302 = vld [vmem:[%s253 + $0x58] sm:$0xf]
      %v303 = vld [vmem:[%s253 + $0x5c] sm:$0xf]
      %v304 = vld [vmem:[%s253 + $0x60] sm:$0xf]
      %v305 = vld [vmem:[%s253 + $0x64] sm:$0xf]
      %v306 = vld [vmem:[%s253 + $0x68] sm:$0xf]
      %v307 = vld [vmem:[%s253 + $0x6c] sm:$0xf]
      %v308 = vld [vmem:[%s253 + $0x70] sm:$0xf]
      %v309 = vld [vmem:[%s253 + $0x74] sm:$0xf]
      %v310 = vld [vmem:[%s253 + $0x78] sm:$0xf]
      %v311 = vld [vmem:[%s253 + $0x7c] sm:$0xf]
      %v312 = vld [vmem:[%s253 + $0x80] sm:$0xf]
      %v313 = vld [vmem:[%s253 + $0x84] sm:$0xf]
      %v314 = vld [vmem:[%s253 + $0x88] sm:$0xf]
      %v315 = vld [vmem:[%s253 + $0x8c] sm:$0xf]
      %v316 = vld [vmem:[%s253 + $0x90] sm:$0xf]
      %v317 = vld [vmem:[%s253 + $0x94] sm:$0xf]
      %v318 = vld [vmem:[%s253 + $0x98] sm:$0xf]
      %v319 = vld [vmem:[%s253 + $0x9c] sm:$0xf]
      %v320 = vld [vmem:[%s253 + $0xa0] sm:$0xf]
      %v321 = vld [vmem:[%s253 + $0xa4] sm:$0xf]
      %v322 = vld [vmem:[%s253 + $0xa8] sm:$0xf]
      %v323 = vld [vmem:[%s253 + $0xac] sm:$0xf]
      %v324 = vld [vmem:[%s253 + $0xb0] sm:$0xf]
      %v325 = vld [vmem:[%s253 + $0xb4] sm:$0xf]
      %v326 = vld [vmem:[%s253 + $0xb8] sm:$0xf]
      %v327 = vld [vmem:[%s253 + $0xbc] sm:$0xf]
      %v328 = vld [vmem:[%s253 + $0xc0] sm:$0xf]
      %v329 = vld [vmem:[%s253 + $0xc4] sm:$0xf]
      %v330 = vld [vmem:[%s253 + $0xc8] sm:$0xf]
      %v331 = vld [vmem:[%s253 + $0xcc] sm:$0xf]
      %v332 = vld [vmem:[%s253 + $0xd0] sm:$0xf]
      %v333 = vld [vmem:[%s253 + $0xd4] sm:$0xf]
      %v334 = vld [vmem:[%s253 + $0xd8] sm:$0xf]
      %v335 = vld [vmem:[%s253 + $0xdc] sm:$0xf]
      %v336 = vld [vmem:[%s253 + $0xe0] sm:$0xf]
      %v337 = vld [vmem:[%s253 + $0xe4] sm:$0xf]
      %v338 = vld [vmem:[%s253 + $0xe8] sm:$0xf]
      %v339 = vld [vmem:[%s253 + $0xec] sm:$0xf]
      %v340 = vld [vmem:[%s253 + $0xf0] sm:$0xf]
      %v341 = vld [vmem:[%s253 + $0xf4] sm:$0xf]
      %v342 = vld [vmem:[%s253 + $0xf8] sm:$0xf]
      %v343 = vld [vmem:[%s253 + $0xfc] sm:$0xf]
      %v348 = vunpack.c.l.b16 %v276
      %v349 = vunpack.c.h.b16 %v276
      %v350 = vunpack.c.l.b16 %v277
      %v351 = vunpack.c.h.b16 %v277
      %v352 = vunpack.c.l.b16 %v278
      %v353 = vunpack.c.h.b16 %v278
      %v354 = vunpack.c.l.b16 %v279
      %v355 = vunpack.c.h.b16 %v279
      %v356 = vpack.c.b16 %v352, %v348
      %v357 = vpack.c.b16 %v353, %v349
      %v358 = vpack.c.b16 %v354, %v350
      %v359 = vpack.c.b16 %v355, %v351
      %v428 = vunpack.c.l.b16 %v280
      %v429 = vunpack.c.l.b16 %v281
      %v430 = vunpack.c.l.b16 %v282
      %v431 = vunpack.c.l.b16 %v283
      %v432 = vunpack.c.l.b16 %v284
      %v433 = vunpack.c.l.b16 %v285
      %v434 = vunpack.c.l.b16 %v286
      %v435 = vunpack.c.l.b16 %v287
      %v436 = vunpack.c.l.b16 %v288
      %v437 = vunpack.c.l.b16 %v289
      %v438 = vunpack.c.l.b16 %v290
      %v439 = vunpack.c.l.b16 %v291
      %v440 = vunpack.c.l.b16 %v292
      %v441 = vunpack.c.l.b16 %v293
      %v442 = vunpack.c.l.b16 %v294
      %v443 = vunpack.c.l.b16 %v295
      %v444 = vunpack.c.l.b16 %v296
      %v445 = vunpack.c.l.b16 %v297
      %v446 = vunpack.c.l.b16 %v298
      %v447 = vunpack.c.l.b16 %v299
      %v448 = vunpack.c.l.b16 %v300
      %v449 = vunpack.c.l.b16 %v301
      %v450 = vunpack.c.l.b16 %v302
      %v451 = vunpack.c.l.b16 %v303
      %v452 = vunpack.c.l.b16 %v304
      %v453 = vunpack.c.l.b16 %v305
      %v454 = vunpack.c.l.b16 %v306
      %v455 = vunpack.c.l.b16 %v307
      %v456 = vunpack.c.l.b16 %v308
      %v457 = vunpack.c.l.b16 %v309
      %v458 = vunpack.c.l.b16 %v310
      %v459 = vunpack.c.l.b16 %v311
      %v460 = vunpack.c.l.b16 %v312
      %v461 = vunpack.c.l.b16 %v313
      %v462 = vunpack.c.l.b16 %v314
      %v463 = vunpack.c.l.b16 %v315
      %v464 = vunpack.c.l.b16 %v316
      %v465 = vunpack.c.l.b16 %v317
      %v466 = vunpack.c.l.b16 %v318
      %v467 = vunpack.c.l.b16 %v319
      %v468 = vunpack.c.l.b16 %v320
      %v469 = vunpack.c.l.b16 %v321
      %v470 = vunpack.c.l.b16 %v322
      %v471 = vunpack.c.l.b16 %v323
      %v472 = vunpack.c.l.b16 %v324
      %v473 = vunpack.c.l.b16 %v325
      %v474 = vunpack.c.l.b16 %v326
      %v475 = vunpack.c.l.b16 %v327
      %v476 = vunpack.c.l.b16 %v328
      %v477 = vunpack.c.l.b16 %v329
      %v478 = vunpack.c.l.b16 %v330
      %v479 = vunpack.c.l.b16 %v331
      %v480 = vunpack.c.l.b16 %v332
      %v481 = vunpack.c.l.b16 %v333
      %v482 = vunpack.c.l.b16 %v334
      %v483 = vunpack.c.l.b16 %v335
      %v484 = vunpack.c.l.b16 %v336
      %v485 = vunpack.c.l.b16 %v337
      %v486 = vunpack.c.l.b16 %v338
      %v487 = vunpack.c.l.b16 %v339
      %v488 = vunpack.c.l.b16 %v340
      %v489 = vunpack.c.l.b16 %v341
      %v490 = vunpack.c.l.b16 %v342
      %v491 = vunpack.c.l.b16 %v343
      %v492 = vpack.c.b16 %v429, %v428
      %v493 = vpack.c.b16 %v431, %v430
      %v494 = vpack.c.b16 %v433, %v432
      %v495 = vpack.c.b16 %v435, %v434
      %v496 = vpack.c.b16 %v437, %v436
      %v497 = vpack.c.b16 %v439, %v438
      %v498 = vpack.c.b16 %v441, %v440
      %v499 = vpack.c.b16 %v443, %v442
      %v500 = vpack.c.b16 %v445, %v444
      %v501 = vpack.c.b16 %v447, %v446
      %v502 = vpack.c.b16 %v449, %v448
      %v503 = vpack.c.b16 %v451, %v450
      %v504 = vpack.c.b16 %v453, %v452
      %v505 = vpack.c.b16 %v455, %v454
      %v506 = vpack.c.b16 %v457, %v456
      %v507 = vpack.c.b16 %v459, %v458
      %v508 = vpack.c.b16 %v461, %v460
      %v509 = vpack.c.b16 %v463, %v462
      %v510 = vpack.c.b16 %v465, %v464
      %v511 = vpack.c.b16 %v467, %v466
      %v512 = vpack.c.b16 %v469, %v468
      %v513 = vpack.c.b16 %v471, %v470
      %v514 = vpack.c.b16 %v473, %v472
      %v515 = vpack.c.b16 %v475, %v474
      %v516 = vpack.c.b16 %v477, %v476
      %v517 = vpack.c.b16 %v479, %v478
      %v518 = vpack.c.b16 %v481, %v480
      %v519 = vpack.c.b16 %v483, %v482
      %v520 = vpack.c.b16 %v485, %v484
      %v521 = vpack.c.b16 %v487, %v486
      %v522 = vpack.c.b16 %v489, %v488
      %v523 = vpack.c.b16 %v491, %v490
      %556 = vmatprep.subr.bf16.mxu0 0
      %557 = vmatpush1.bf16.msra.mxu0 %v492
      %558 = vmatprep.subr.bf16.mxu0 0
      %559 = vmatpush1.bf16.msra.mxu0 %v493
      %560 = vmatprep.subr.bf16.mxu0 0
      %561 = vmatpush1.bf16.msra.mxu0 %v494
      %562 = vmatprep.subr.bf16.mxu0 0
      %563 = vmatpush1.bf16.msra.mxu0 %v495
      %564 = vmatprep.subr.bf16.mxu0 0
      %565 = vmatpush1.bf16.msra.mxu0 %v496
      %566 = vmatprep.subr.bf16.mxu0 0
      %567 = vmatpush1.bf16.msra.mxu0 %v497
      %568 = vmatprep.subr.bf16.mxu0 0
      %569 = vmatpush1.bf16.msra.mxu0 %v498
      %570 = vmatprep.subr.bf16.mxu0 0
      %571 = vmatpush1.bf16.msra.mxu0 %v499
      %572 = vmatprep.subr.bf16.mxu0 0
      %573 = vmatpush1.bf16.msra.mxu0 %v500
      %574 = vmatprep.subr.bf16.mxu0 0
      %575 = vmatpush1.bf16.msra.mxu0 %v501
      %576 = vmatprep.subr.bf16.mxu0 0
      %577 = vmatpush1.bf16.msra.mxu0 %v502
      %578 = vmatprep.subr.bf16.mxu0 0
      %579 = vmatpush1.bf16.msra.mxu0 %v503
      %580 = vmatprep.subr.bf16.mxu0 0
      %581 = vmatpush1.bf16.msra.mxu0 %v504
      %582 = vmatprep.subr.bf16.mxu0 0
      %583 = vmatpush1.bf16.msra.mxu0 %v505
      %584 = vmatprep.subr.bf16.mxu0 0
      %585 = vmatpush1.bf16.msra.mxu0 %v506
      %586 = vmatprep.subr.bf16.mxu0 0
      %587 = vmatpush1.bf16.msra.mxu0 %v507
      %588 = vmatprep.mubr.bf16.mxu0 %v357
      %589 = vmatmul.mubr.bf16.gmra.mrb[0].mxu0 %v356
      %v590 = vpop.f32.mrb[0].mxu0
      %v591 = vadd.f32 0.0, %v590
      %v592 = vpop.f32.mrb[0].mxu0
      %v593 = vpop.f32.mrb[0].mxu0
      %v594 = vadd.f32 0.0, %v593
      %v595 = vpop.f32.mrb[0].mxu0
      %596 = vdwg.mxu0
      %597 = vmatprep.subr.bf16.mxu0 0
      %598 = vmatpush1.bf16.msra.mxu0 %v508
      %599 = vmatprep.subr.bf16.mxu0 0
      %600 = vmatpush1.bf16.msra.mxu0 %v509
      %601 = vmatprep.subr.bf16.mxu0 0
      %602 = vmatpush1.bf16.msra.mxu0 %v510
      %603 = vmatprep.subr.bf16.mxu0 0
      %604 = vmatpush1.bf16.msra.mxu0 %v511
      %605 = vmatprep.subr.bf16.mxu0 0
      %606 = vmatpush1.bf16.msra.mxu0 %v512
      %607 = vmatprep.subr.bf16.mxu0 0
      %608 = vmatpush1.bf16.msra.mxu0 %v513
      %609 = vmatprep.subr.bf16.mxu0 0
      %610 = vmatpush1.bf16.msra.mxu0 %v514
      %611 = vmatprep.subr.bf16.mxu0 0
      %612 = vmatpush1.bf16.msra.mxu0 %v515
      %613 = vmatprep.subr.bf16.mxu0 0
      %614 = vmatpush1.bf16.msra.mxu0 %v516
      %615 = vmatprep.subr.bf16.mxu0 0
      %616 = vmatpush1.bf16.msra.mxu0 %v517
      %617 = vmatprep.subr.bf16.mxu0 0
      %618 = vmatpush1.bf16.msra.mxu0 %v518
      %619 = vmatprep.subr.bf16.mxu0 0
      %620 = vmatpush1.bf16.msra.mxu0 %v519
      %621 = vmatprep.subr.bf16.mxu0 0
      %622 = vmatpush1.bf16.msra.mxu0 %v520
      %623 = vmatprep.subr.bf16.mxu0 0
      %624 = vmatpush1.bf16.msra.mxu0 %v521
      %625 = vmatprep.subr.bf16.mxu0 0
      %626 = vmatpush1.bf16.msra.mxu0 %v522
      %627 = vmatprep.subr.bf16.mxu0 0
      %628 = vmatpush1.bf16.msra.mxu0 %v523
      %629 = vmatprep.mubr.bf16.mxu0 %v359
      %630 = vmatmul.mubr.bf16.gmra.mrb[0].mxu0 %v358
      %v631 = vpop.f32.mrb[0].mxu0
      %v632 = vadd.f32 %v591, %v631
      %v633 = vpop.f32.mrb[0].mxu0
      %v634 = vpop.f32.mrb[0].mxu0
      %v635 = vadd.f32 %v594, %v634
      %v636 = vpop.f32.mrb[0].mxu0
      %637 = vdwg.mxu0
      %v638 = vadd.f32 %v274, %v632
      %v639 = vadd.f32 %v275, %v635
      %640 = vst [vmem:[#allocation2] sm:$0xff] %v638
      %641 = vst [vmem:[#allocation2 + $0x8] sm:$0xff] %v639
      // Predicated region
      $region37: #{discriminator_forward.13} parent=31 // pred_check
        %p642 = pneg %p268
      $region38: #{discriminator_forward.13} parent=31 // pred_check_branch
        %644 = sbr.rel (%p642) target = $region40
      $region39: #{discriminator_forward.13} parent=31 // pred_region
        %v645 = vld [vmem:[#allocation2] sm:$0xff]
        %v646 = vld [vmem:[#allocation2 + $0x8] sm:$0xff]
        %v647 = vld [vmem:[%s257] sm:$0x1]
        %v649 = vlaneseq
        %v650 = vshrl.u32 %v649, 7
        %v651 = vsub.s32 0, %v650
        %v652 = vrot.slane %v647, %v651
        %v654 = vadd.f32 %v645, %v652
        %v655 = vadd.f32 %v646, %v652
        %vm656 = vcmp.gt.f32.partialorder %v654, 0.0
        %vm657 = vcmp.gt.f32.partialorder %v655, 0.0
        %v658 = vmul.f32 %v654, 0.01
        %v659 = vmul.f32 %v655, 0.01
        %v660 = vsel %vm656, %v654, %v658
        %v661 = vsel %vm657, %v655, %v659
        %v662 = vpack.c.bf16 %v661, %v660
        %v664 = vunpack.c.l.b16 %v662
        %v665 = vunpack.c.h.b16 %v662
        %v666 = vpack.c.b16 %v664, %v664
        %v667 = vpack.c.b16 %v665, %v665
        %670 = vst [vmem:[%s265] sm:$0xf] %v666
        %671 = vst [vmem:[%s265 + $0x4] sm:$0xf] %v667
      $region40: #{discriminator_forward.13} parent=31 // pred_fallthru
        _
      %s672 = smul.u32 2, %s19
      %p673 = scmp.lt.s32.totalorder %s672, 3
      %s674 = scalar_select %p673, %s672, 3
      %p675 = scmp.lt.s32.totalorder %s20, 0
      %s676 = scalar_select %p675, %s20, 0
      %s677 = sadd.s32 %s676, %s674
      %s678 = smul.addr %s677, 4
      %s679 = scalar_lea.vmem %s3, %s678
      // Predicated region
      $region41: #{discriminator_forward.13} parent=31 // pred_check
        %p680 = pneg %p135
      $region42: #{discriminator_forward.13} parent=31 // pred_check_branch
        %682 = sbr.rel (%p680) target = $region44
      $region43: #{discriminator_forward.13} parent=31 // pred_region
        %s683 = smul.u32 2, %s19
      $region44: #{discriminator_forward.13} parent=31 // pred_fallthru
        _
    $region32: #{discriminator_forward.13} parent=5 // pred_fallthru
      _
    %p684 = scmp.le.s32.totalorder 2, %s9
    // Predicated region
    $region45: #{discriminator_forward.13} parent=5 // pred_check
      %p685 = pneg %p684
    $region46: #{discriminator_forward.13} parent=5 // pred_check_branch
      %687 = sbr.rel (%p685) target = $region48
    $region47: #{discriminator_forward.13} parent=5 // pred_region
      %s688 = ssub.s32 %s9, 2
      // Predicated region
      $region49: #{discriminator_forward.13} parent=47 // pred_check
        %p689 = pneg %p141
      $region50: #{discriminator_forward.13} parent=47 // pred_check_branch
        %691 = sbr.rel (%p689) target = $region52
      $region51: #{discriminator_forward.13} parent=47 // pred_region
        %s692 = smul.u32 2, %s22
        %p693 = scmp.lt.s32.totalorder %s692, 3
        %s694 = scalar_select %p693, %s692, 3
        %p695 = scmp.lt.s32.totalorder %s23, 0
        %s696 = scalar_select %p695, %s23, 0
        %s697 = sadd.s32 %s696, %s694
        %s698 = smul.addr %s697, 4
        %s699 = scalar_lea.vmem %s3, %s698
      $region52: #{discriminator_forward.13} parent=47 // pred_fallthru
        _
    $region48: #{discriminator_forward.13} parent=5 // pred_fallthru
      _
  $region6: #{discriminator_forward.13} parent=0 // loop_footer
    %s13 = sadd.s32 1, %s9
  $region7: #{discriminator_forward.13} parent=0 // loop_footer_branch
    %8 = sbr.rel target = $region3
  $region8: #{discriminator_forward.13} parent=0 // loop_exit
    _

// kernel: discriminator_forward.15
$region0: #{discriminator_forward.15}
  #allocation0 [shape = 'u32[]', space=smem, size = 0x4, offset = 0x4, fixed_abs, tag = 'smem constant byte address 0x4 - core index']
  #allocation1 [shape = 'u32[144,128]{1,0:T(1,128)}', space=vmem, size = 0x12000, scoped, tag = 'internal scratch']
  #allocation2 [shape = 'f32[16,128]{1,0:T(8,128)}', space=vmem, size = 0x2000, scoped, tag = 'scratch operand']
  %s0 = inlined_call_operand.vmem [shape: bf16[32,1024], index: 0, kind: input, shape index: {}]
  %s1 = inlined_call_operand.vmem [shape: bf16[1024,128], index: 1, kind: input, shape index: {}]
  %s2 = inlined_call_operand.vmem [shape: f32[1,128], index: 2, kind: input, shape index: {}]
  %s3 = inlined_call_operand.vmem [shape: bf16[32,128], index: 3, kind: output, shape index: {}]
  %s4 = sld [smem:[#allocation0]]
  $region53: #{discriminator_forward.15} parent=0
    _
  %s6 = ssub.s32 1, %s4
  %s7 = scalar_select 0, %s6, %s4
  loop: start=0, step=1, limit=4
  $region2: #{discriminator_forward.15} parent=0 // loop_pre_header
    _
  $region3: #{discriminator_forward.15} parent=0 // loop_header
    %s9 = sphi 0, %s13
    %p10 = scmp.ge.s32.totalorder %s9, 4
    %s16 = sphi 0, %s35
    %s17 = sphi 0, %s31
    %s18 = sphi 0, %s27
    %s19 = sphi 0, %s16
    %s20 = sphi 0, %s17
    %s21 = sphi 0, %s18
    %s22 = sphi 0, %s19
    %s23 = sphi 0, %s20
    %s24 = sphi 0, %s21
    %s40 = sphi 0, %s42
    %s43 = sphi 0, %s40
    %s44 = sphi 0, %s43
    %s60 = sphi 0, %s44
    %s68 = sphi 0, %s70
    %s71 = sphi 0, %s68
    %s72 = sphi 0, %s71
    %s88 = sphi 0, %s72
    %s94 = sphi 0, %s96
    %s97 = sphi 0, %s94
    %s98 = sphi 0, %s97
    %s114 = sphi 0, %s98
    %s122 = sphi 0, %s124
    %s125 = sphi 0, %s122
    %s126 = sphi 0, %s125
    %s142 = sphi 0, %s126
  $region4: #{discriminator_forward.15} parent=0 // loop_header_branch
    %12 = sbr.rel (%p10) target = $region8
  $region5: #{discriminator_forward.15} parent=0 // loop_body
    %s14 = ssub.s32 %s9, 1
    %s15 = ssub.s32 %s9, 2
    %s25 = sadd.s32 1, %s18
    %p26 = scmp.ge.s32.totalorder %s25, 1
    %s27 = scalar_select %p26, 0, %s25
    %s28 = sadd.s32 1, %s17
    %s29 = scalar_select %p26, %s28, %s17
    %p30 = scmp.ge.s32.totalorder %s29, 1
    %s31 = scalar_select %p30, 0, %s29
    %s32 = sadd.s32 1, %s16
    %s33 = scalar_select %p30, %s32, %s16
    %p34 = scmp.ge.s32.totalorder %s33, 2
    %s35 = scalar_select %p34, 0, %s33
    %s36 = ssub.s32 %s16, %s35
    %s37 = ssub.s32 %s18, %s27
    %s38 = sor.u32 %s36, %s37
    %p39 = scmp.eq.s32.totalorder %s38, 0
    %s41 = sadd.s32 %s40, 1
    %s42 = scalar_select %p39, %s40, %s41
    %p45 = pneg %p39
    %p46 = scmp.eq.s32.totalorder %s9, 1
    %p47 = por %p45, %p46
    %p48 = scmp.ne.s32.totalorder %s40, %s43
    %p49 = scmp.eq.s32.totalorder %s9, 0
    %p50 = por %p48, %p49
    %p51 = scmp.ne.s32.totalorder %s40, %s43
    %p52 = scmp.eq.s32.totalorder %s14, 1
    %p53 = por %p51, %p52
    %p54 = scmp.ne.s32.totalorder %s43, %s44
    %p55 = scmp.eq.s32.totalorder %s14, 0
    %p56 = por %p54, %p55
    %p57 = scmp.ne.s32.totalorder %s43, %s44
    %p58 = scmp.eq.s32.totalorder %s15, 1
    %p59 = por %p57, %p58
    %p61 = scmp.ne.s32.totalorder %s44, %s60
    %p62 = scmp.eq.s32.totalorder %s15, 0
    %p63 = por %p61, %p62
    %s64 = ssub.s32 %s18, %s27
    %s65 = ssub.s32 %s17, %s31
    %s66 = sor.u32 %s64, %s65
    %p67 = scmp.eq.s32.totalorder %s66, 0
    %s69 = sadd.s32 %s68, 1
    %s70 = scalar_select %p67, %s68, %s69
    %p73 = pneg %p67
    %p74 = scmp.eq.s32.totalorder %s9, 1
    %p75 = por %p73, %p74
    %p76 = scmp.ne.s32.totalorder %s68, %s71
    %p77 = scmp.eq.s32.totalorder %s9, 0
    %p78 = por %p76, %p77
    %p79 = scmp.ne.s32.totalorder %s68, %s71
    %p80 = scmp.eq.s32.totalorder %s14, 1
    %p81 = por %p79, %p80
    %p82 = scmp.ne.s32.totalorder %s71, %s72
    %p83 = scmp.eq.s32.totalorder %s14, 0
    %p84 = por %p82, %p83
    %p85 = scmp.ne.s32.totalorder %s71, %s72
    %p86 = scmp.eq.s32.totalorder %s15, 1
    %p87 = por %p85, %p86
    %p89 = scmp.ne.s32.totalorder %s72, %s88
    %p90 = scmp.eq.s32.totalorder %s15, 0
    %p91 = por %p89, %p90
    %s92 = ssub.s32 %s17, %s31
    %p93 = scmp.eq.s32.totalorder %s92, 0
    %s95 = sadd.s32 %s94, 1
    %s96 = scalar_select %p93, %s94, %s95
    %p99 = pneg %p93
    %p100 = scmp.eq.s32.totalorder %s9, 1
    %p101 = por %p99, %p100
    %p102 = scmp.ne.s32.totalorder %s94, %s97
    %p103 = scmp.eq.s32.totalorder %s9, 0
    %p104 = por %p102, %p103
    %p105 = scmp.ne.s32.totalorder %s94, %s97
    %p106 = scmp.eq.s32.totalorder %s14, 1
    %p107 = por %p105, %p106
    %p108 = scmp.ne.s32.totalorder %s97, %s98
    %p109 = scmp.eq.s32.totalorder %s14, 0
    %p110 = por %p108, %p109
    %p111 = scmp.ne.s32.totalorder %s97, %s98
    %p112 = scmp.eq.s32.totalorder %s15, 1
    %p113 = por %p111, %p112
    %p115 = scmp.ne.s32.totalorder %s98, %s114
    %p116 = scmp.eq.s32.totalorder %s15, 0
    %p117 = por %p115, %p116
    %s118 = ssub.s32 %s16, %s35
    %s119 = ssub.s32 %s17, %s31
    %s120 = sor.u32 %s118, %s119
    %p121 = scmp.eq.s32.totalorder %s120, 0
    %s123 = sadd.s32 %s122, 1
    %s124 = scalar_select %p121, %s122, %s123
    %p127 = pneg %p121
    %p128 = scmp.eq.s32.totalorder %s9, 1
    %p129 = por %p127, %p128
    %p130 = scmp.ne.s32.totalorder %s122, %s125
    %p131 = scmp.eq.s32.totalorder %s9, 0
    %p132 = por %p130, %p131
    %p133 = scmp.ne.s32.totalorder %s122, %s125
    %p134 = scmp.eq.s32.totalorder %s14, 1
    %p135 = por %p133, %p134
    %p136 = scmp.ne.s32.totalorder %s125, %s126
    %p137 = scmp.eq.s32.totalorder %s14, 0
    %p138 = por %p136, %p137
    %p139 = scmp.ne.s32.totalorder %s125, %s126
    %p140 = scmp.eq.s32.totalorder %s15, 1
    %p141 = por %p139, %p140
    %p143 = scmp.ne.s32.totalorder %s126, %s142
    %p144 = scmp.eq.s32.totalorder %s15, 0
    %p145 = por %p143, %p144
    %p146 = scmp.le.s32.totalorder 1, %s9
    %p147 = scmp.lt.s32.totalorder %s9, 3
    %p148 = pnand %p146, %p147
    %p149 = pneg %p148
    // Predicated region
    $region9: #{discriminator_forward.15} parent=5 // pred_check
      _
    $region10: #{discriminator_forward.15} parent=5 // pred_check_branch
      %151 = sbr.rel (%p148) target = $region12
    $region11: #{discriminator_forward.15} parent=5 // pred_region
      %s152 = ssub.s32 %s9, 1
      // Predicated region
      $region13: #{discriminator_forward.15} parent=11 // pred_check
        %p153 = pneg %p84
      $region14: #{discriminator_forward.15} parent=11 // pred_check_branch
        %155 = sbr.rel (%p153) target = $region16
      $region15: #{discriminator_forward.15} parent=11 // pred_region
        %s156 = smul.u32 128, %s21
        %p157 = scmp.lt.s32.totalorder %s156, 127
        %s158 = scalar_select %p157, %s156, 127
        %p159 = scmp.lt.s32.totalorder %s20, 0
        %s160 = scalar_select %p159, %s20, 0
        %s161 = sadd.s32 %s160, %s158
        %s162 = smul.addr %s161, 4
        %s163 = scalar_lea.vmem %s1, %s162
        %s164 = smul.u32 128, %s21
      $region16: #{discriminator_forward.15} parent=11 // pred_fallthru
        _
      // Predicated region
      $region17: #{discriminator_forward.15} parent=11 // pred_check
        %p165 = pneg %p110
      $region18: #{discriminator_forward.15} parent=11 // pred_check_branch
        %167 = sbr.rel (%p165) target = $region20
      $region19: #{discriminator_forward.15} parent=11 // pred_region
        %p168 = scmp.lt.s32.totalorder %s20, 0
        %s169 = scalar_select %p168, %s20, 0
        %s170 = scalar_lea.vmem %s2, %s169
      $region20: #{discriminator_forward.15} parent=11 // pred_fallthru
        _
    $region12: #{discriminator_forward.15} parent=5 // pred_fallthru
      _
    %p171 = scmp.lt.s32.totalorder %s9, 2
    // Predicated region
    $region21: #{discriminator_forward.15} parent=5 // pred_check
      %p172 = pneg %p171
    $region22: #{discriminator_forward.15} parent=5 // pred_check_branch
      %174 = sbr.rel (%p172) target = $region24
    $region23: #{discriminator_forward.15} parent=5 // pred_region
      // Predicated region
      $region25: #{discriminator_forward.15} parent=23 // pred_check
        %p175 = pneg %p50
      $region26: #{discriminator_forward.15} parent=23 // pred_check_branch
        %177 = sbr.rel (%p175) target = $region28
      $region27: #{discriminator_forward.15} parent=23 // pred_region
        %s178 = smul.u32 2, %s16
        %s179 = smul.u32 8, %s18
        %p180 = scmp.lt.s32.totalorder %s178, 3
        %s181 = scalar_select %p180, %s178, 3
        %p182 = scmp.lt.s32.totalorder %s179, 7
        %s183 = scalar_select %p182, %s179, 7
        %s184 = smul.addr %s181, 8
        %s185 = sadd.s32 %s183, %s184
        %s186 = smul.addr %s185, 4
        %s187 = scalar_lea.vmem %s0, %s186
        %s188 = smul.u32 2, %s16
        %s189 = smul.u32 8, %s18
      $region28: #{discriminator_forward.15} parent=23 // pred_fallthru
        _
    $region24: #{discriminator_forward.15} parent=5 // pred_fallthru
      _
    %p190 = scmp.le.s32.totalorder 1, %s9
    %p191 = scmp.lt.s32.totalorder %s9, 3
    %p192 = pnand %p190, %p191
    %p193 = pneg %p192
    // Predicated region
    $region29: #{discriminator_forward.15} parent=5 // pred_check
      _
    $region30: #{discriminator_forward.15} parent=5 // pred_check_branch
      %195 = sbr.rel (%p192) target = $region32
    $region31: #{discriminator_forward.15} parent=5 // pred_region
      %s196 = ssub.s32 %s9, 1
      %s197 = smul.u32 2, %s19
      %s198 = smul.u32 8, %s21
      %p199 = scmp.lt.s32.totalorder %s197, 3
      %s200 = scalar_select %p199, %s197, 3
      %p201 = scmp.lt.s32.totalorder %s198, 7
      %s202 = scalar_select %p201, %s198, 7
      %s203 = smul.addr %s200, 8
      %s204 = sadd.s32 %s202, %s203
      %s205 = smul.addr %s204, 4
      %s206 = scalar_lea.vmem %s0, %s205
      %p207 = pneg %p56
      %p208 = pneg %p53
      %s209 = smul.u32 128, %s21
      %p210 = scmp.lt.s32.totalorder %s209, 127
      %s211 = scalar_select %p210, %s209, 127
      %p212 = scmp.lt.s32.totalorder %s20, 0
      %s213 = scalar_select %p212, %s20, 0
      %s214 = sadd.s32 %s213, %s211
      %s215 = smul.addr %s214, 4
      %s216 = scalar_lea.vmem %s1, %s215
      %p217 = pneg %p84
      %p218 = pneg %p81
      %p219 = scmp.lt.s32.totalorder %s20, 0
      %s220 = scalar_select %p219, %s20, 0
      %s221 = scalar_lea.vmem %s2, %s220
      %p222 = pneg %p110
      %p223 = pneg %p107
      %p224 = pneg %p138
      %p225 = pneg %p135
      %s226 = smul.u32 2, %s19
      %p227 = scmp.lt.s32.totalorder %s226, 3
      %s228 = scalar_select %p227, %s226, 3
      %p229 = scmp.lt.s32.totalorder %s20, 0
      %s230 = scalar_select %p229, %s20, 0
      %s231 = sadd.s32 %s230, %s228
      %s232 = smul.addr %s231, 4
      %s233 = scalar_lea.vmem %s3, %s232
      %s234 = smul.u32 2, %s19
      %s235 = smul.u32 8, %s21
      %p236 = scmp.lt.s32.totalorder %s234, 3
      %s237 = scalar_select %p236, %s234, 3
      %p238 = scmp.lt.s32.totalorder %s235, 7
      %s239 = scalar_select %p238, %s235, 7
      %s240 = smul.addr %s237, 8
      %s241 = sadd.s32 %s239, %s240
      %s242 = smul.addr %s241, 4
      %s243 = scalar_lea.vmem %s0, %s242
      %s244 = smul.u32 2, %s19
      %s245 = smul.u32 8, %s21
      %s246 = smul.u32 128, %s21
      %p247 = scmp.lt.s32.totalorder %s246, 127
      %s248 = scalar_select %p247, %s246, 127
      %p249 = scmp.lt.s32.totalorder %s20, 0
      %s250 = scalar_select %p249, %s20, 0
      %s251 = sadd.s32 %s250, %s248
      %s252 = smul.addr %s251, 4
      %s253 = scalar_lea.vmem %s1, %s252
      %s254 = smul.u32 128, %s21
      %p255 = scmp.lt.s32.totalorder %s20, 0
      %s256 = scalar_select %p255, %s20, 0
      %s257 = scalar_lea.vmem %s2, %s256
      %s258 = smul.u32 2, %s19
      %p259 = scmp.lt.s32.totalorder %s258, 3
      %s260 = scalar_select %p259, %s258, 3
      %p261 = scmp.lt.s32.totalorder %s20, 0
      %s262 = scalar_select %p261, %s20, 0
      %s263 = sadd.s32 %s262, %s260
      %s264 = smul.addr %s263, 4
      %s265 = scalar_lea.vmem %s3, %s264
      %s266 = smul.u32 2, %s19
      %p268 = scmp.eq.s32.totalorder %s21, 0
      // Predicated region
      $region33: #{discriminator_forward.15} parent=31 // pred_check
        %p269 = pneg %p268
      $region34: #{discriminator_forward.15} parent=31 // pred_check_branch
        %271 = sbr.rel (%p269) target = $region36
      $region35: #{discriminator_forward.15} parent=31 // pred_region
        %272 = vst [vmem:[#allocation2] sm:$0xff] 0.0
        %273 = vst [vmem:[#allocation2 + $0x8] sm:$0xff] 0.0
      $region36: #{discriminator_forward.15} parent=31 // pred_fallthru
        _
      %v274 = vld [vmem:[#allocation2] sm:$0xff]
      %v275 = vld [vmem:[#allocation2 + $0x8] sm:$0xff]
      %v276 = vld [vmem:[%s243] sm:$0xff]
      %v277 = vld [vmem:[%s243 + $0x8] sm:$0xff]
      %v278 = vld [vmem:[%s243 + $0x10] sm:$0xff]
      %v279 = vld [vmem:[%s243 + $0x18] sm:$0xff]
      %v280 = vld [vmem:[%s243 + $0x20] sm:$0xff]
      %v281 = vld [vmem:[%s243 + $0x28] sm:$0xff]
      %v282 = vld [vmem:[%s243 + $0x30] sm:$0xff]
      %v283 = vld [vmem:[%s243 + $0x38] sm:$0xff]
      %v284 = vld [vmem:[%s253] sm:$0xf]
      %v285 = vld [vmem:[%s253 + $0x4] sm:$0xf]
      %v286 = vld [vmem:[%s253 + $0x8] sm:$0xf]
      %v287 = vld [vmem:[%s253 + $0xc] sm:$0xf]
      %v288 = vld [vmem:[%s253 + $0x10] sm:$0xf]
      %v289 = vld [vmem:[%s253 + $0x14] sm:$0xf]
      %v290 = vld [vmem:[%s253 + $0x18] sm:$0xf]
      %v291 = vld [vmem:[%s253 + $0x1c] sm:$0xf]
      %v292 = vld [vmem:[%s253 + $0x20] sm:$0xf]
      %v293 = vld [vmem:[%s253 + $0x24] sm:$0xf]
      %v294 = vld [vmem:[%s253 + $0x28] sm:$0xf]
      %v295 = vld [vmem:[%s253 + $0x2c] sm:$0xf]
      %v296 = vld [vmem:[%s253 + $0x30] sm:$0xf]
      %v297 = vld [vmem:[%s253 + $0x34] sm:$0xf]
      %v298 = vld [vmem:[%s253 + $0x38] sm:$0xf]
      %v299 = vld [vmem:[%s253 + $0x3c] sm:$0xf]
      %v300 = vld [vmem:[%s253 + $0x40] sm:$0xf]
      %v301 = vld [vmem:[%s253 + $0x44] sm:$0xf]
      %v302 = vld [vmem:[%s253 + $0x48] sm:$0xf]
      %v303 = vld [vmem:[%s253 + $0x4c] sm:$0xf]
      %v304 = vld [vmem:[%s253 + $0x50] sm:$0xf]
      %v305 = vld [vmem:[%s253 + $0x54] sm:$0xf]
      %v306 = vld [vmem:[%s253 + $0x58] sm:$0xf]
      %v307 = vld [vmem:[%s253 + $0x5c] sm:$0xf]
      %v308 = vld [vmem:[%s253 + $0x60] sm:$0xf]
      %v309 = vld [vmem:[%s253 + $0x64] sm:$0xf]
      %v310 = vld [vmem:[%s253 + $0x68] sm:$0xf]
      %v311 = vld [vmem:[%s253 + $0x6c] sm:$0xf]
      %v312 = vld [vmem:[%s253 + $0x70] sm:$0xf]
      %v313 = vld [vmem:[%s253 + $0x74] sm:$0xf]
      %v314 = vld [vmem:[%s253 + $0x78] sm:$0xf]
      %v315 = vld [vmem:[%s253 + $0x7c] sm:$0xf]
      %v316 = vld [vmem:[%s253 + $0x80] sm:$0xf]
      %v317 = vld [vmem:[%s253 + $0x84] sm:$0xf]
      %v318 = vld [vmem:[%s253 + $0x88] sm:$0xf]
      %v319 = vld [vmem:[%s253 + $0x8c] sm:$0xf]
      %v320 = vld [vmem:[%s253 + $0x90] sm:$0xf]
      %v321 = vld [vmem:[%s253 + $0x94] sm:$0xf]
      %v322 = vld [vmem:[%s253 + $0x98] sm:$0xf]
      %v323 = vld [vmem:[%s253 + $0x9c] sm:$0xf]
      %v324 = vld [vmem:[%s253 + $0xa0] sm:$0xf]
      %v325 = vld [vmem:[%s253 + $0xa4] sm:$0xf]
      %v326 = vld [vmem:[%s253 + $0xa8] sm:$0xf]
      %v327 = vld [vmem:[%s253 + $0xac] sm:$0xf]
      %v328 = vld [vmem:[%s253 + $0xb0] sm:$0xf]
      %v329 = vld [vmem:[%s253 + $0xb4] sm:$0xf]
      %v330 = vld [vmem:[%s253 + $0xb8] sm:$0xf]
      %v331 = vld [vmem:[%s253 + $0xbc] sm:$0xf]
      %v332 = vld [vmem:[%s253 + $0xc0] sm:$0xf]
      %v333 = vld [vmem:[%s253 + $0xc4] sm:$0xf]
      %v334 = vld [vmem:[%s253 + $0xc8] sm:$0xf]
      %v335 = vld [vmem:[%s253 + $0xcc] sm:$0xf]
      %v336 = vld [vmem:[%s253 + $0xd0] sm:$0xf]
      %v337 = vld [vmem:[%s253 + $0xd4] sm:$0xf]
      %v338 = vld [vmem:[%s253 + $0xd8] sm:$0xf]
      %v339 = vld [vmem:[%s253 + $0xdc] sm:$0xf]
      %v340 = vld [vmem:[%s253 + $0xe0] sm:$0xf]
      %v341 = vld [vmem:[%s253 + $0xe4] sm:$0xf]
      %v342 = vld [vmem:[%s253 + $0xe8] sm:$0xf]
      %v343 = vld [vmem:[%s253 + $0xec] sm:$0xf]
      %v344 = vld [vmem:[%s253 + $0xf0] sm:$0xf]
      %v345 = vld [vmem:[%s253 + $0xf4] sm:$0xf]
      %v346 = vld [vmem:[%s253 + $0xf8] sm:$0xf]
      %v347 = vld [vmem:[%s253 + $0xfc] sm:$0xf]
      %v348 = vld [vmem:[%s253 + $0x100] sm:$0xf]
      %v349 = vld [vmem:[%s253 + $0x104] sm:$0xf]
      %v350 = vld [vmem:[%s253 + $0x108] sm:$0xf]
      %v351 = vld [vmem:[%s253 + $0x10c] sm:$0xf]
      %v352 = vld [vmem:[%s253 + $0x110] sm:$0xf]
      %v353 = vld [vmem:[%s253 + $0x114] sm:$0xf]
      %v354 = vld [vmem:[%s253 + $0x118] sm:$0xf]
      %v355 = vld [vmem:[%s253 + $0x11c] sm:$0xf]
      %v356 = vld [vmem:[%s253 + $0x120] sm:$0xf]
      %v357 = vld [vmem:[%s253 + $0x124] sm:$0xf]
      %v358 = vld [vmem:[%s253 + $0x128] sm:$0xf]
      %v359 = vld [vmem:[%s253 + $0x12c] sm:$0xf]
      %v360 = vld [vmem:[%s253 + $0x130] sm:$0xf]
      %v361 = vld [vmem:[%s253 + $0x134] sm:$0xf]
      %v362 = vld [vmem:[%s253 + $0x138] sm:$0xf]
      %v363 = vld [vmem:[%s253 + $0x13c] sm:$0xf]
      %v364 = vld [vmem:[%s253 + $0x140] sm:$0xf]
      %v365 = vld [vmem:[%s253 + $0x144] sm:$0xf]
      %v366 = vld [vmem:[%s253 + $0x148] sm:$0xf]
      %v367 = vld [vmem:[%s253 + $0x14c] sm:$0xf]
      %v368 = vld [vmem:[%s253 + $0x150] sm:$0xf]
      %v369 = vld [vmem:[%s253 + $0x154] sm:$0xf]
      %v370 = vld [vmem:[%s253 + $0x158] sm:$0xf]
      %v371 = vld [vmem:[%s253 + $0x15c] sm:$0xf]
      %v372 = vld [vmem:[%s253 + $0x160] sm:$0xf]
      %v373 = vld [vmem:[%s253 + $0x164] sm:$0xf]
      %v374 = vld [vmem:[%s253 + $0x168] sm:$0xf]
      %v375 = vld [vmem:[%s253 + $0x16c] sm:$0xf]
      %v376 = vld [vmem:[%s253 + $0x170] sm:$0xf]
      %v377 = vld [vmem:[%s253 + $0x174] sm:$0xf]
      %v378 = vld [vmem:[%s253 + $0x178] sm:$0xf]
      %v379 = vld [vmem:[%s253 + $0x17c] sm:$0xf]
      %v380 = vld [vmem:[%s253 + $0x180] sm:$0xf]
      %v381 = vld [vmem:[%s253 + $0x184] sm:$0xf]
      %v382 = vld [vmem:[%s253 + $0x188] sm:$0xf]
      %v383 = vld [vmem:[%s253 + $0x18c] sm:$0xf]
      %v384 = vld [vmem:[%s253 + $0x190] sm:$0xf]
      %v385 = vld [vmem:[%s253 + $0x194] sm:$0xf]
      %v386 = vld [vmem:[%s253 + $0x198] sm:$0xf]
      %v387 = vld [vmem:[%s253 + $0x19c] sm:$0xf]
      %v388 = vld [vmem:[%s253 + $0x1a0] sm:$0xf]
      %v389 = vld [vmem:[%s253 + $0x1a4] sm:$0xf]
      %v390 = vld [vmem:[%s253 + $0x1a8] sm:$0xf]
      %v391 = vld [vmem:[%s253 + $0x1ac] sm:$0xf]
      %v392 = vld [vmem:[%s253 + $0x1b0] sm:$0xf]
      %v393 = vld [vmem:[%s253 + $0x1b4] sm:$0xf]
      %v394 = vld [vmem:[%s253 + $0x1b8] sm:$0xf]
      %v395 = vld [vmem:[%s253 + $0x1bc] sm:$0xf]
      %v396 = vld [vmem:[%s253 + $0x1c0] sm:$0xf]
      %v397 = vld [vmem:[%s253 + $0x1c4] sm:$0xf]
      %v398 = vld [vmem:[%s253 + $0x1c8] sm:$0xf]
      %v399 = vld [vmem:[%s253 + $0x1cc] sm:$0xf]
      %v400 = vld [vmem:[%s253 + $0x1d0] sm:$0xf]
      %v401 = vld [vmem:[%s253 + $0x1d4] sm:$0xf]
      %v402 = vld [vmem:[%s253 + $0x1d8] sm:$0xf]
      %v403 = vld [vmem:[%s253 + $0x1dc] sm:$0xf]
      %v404 = vld [vmem:[%s253 + $0x1e0] sm:$0xf]
      %v405 = vld [vmem:[%s253 + $0x1e4] sm:$0xf]
      %v406 = vld [vmem:[%s253 + $0x1e8] sm:$0xf]
      %v407 = vld [vmem:[%s253 + $0x1ec] sm:$0xf]
      %v408 = vld [vmem:[%s253 + $0x1f0] sm:$0xf]
      %v409 = vld [vmem:[%s253 + $0x1f4] sm:$0xf]
      %v410 = vld [vmem:[%s253 + $0x1f8] sm:$0xf]
      %v411 = vld [vmem:[%s253 + $0x1fc] sm:$0xf]
      %v420 = vunpack.c.l.b16 %v276
      %v421 = vunpack.c.h.b16 %v276
      %v422 = vunpack.c.l.b16 %v277
      %v423 = vunpack.c.h.b16 %v277
      %v424 = vunpack.c.l.b16 %v278
      %v425 = vunpack.c.h.b16 %v278
      %v426 = vunpack.c.l.b16 %v279
      %v427 = vunpack.c.h.b16 %v279
      %v428 = vunpack.c.l.b16 %v280
      %v429 = vunpack.c.h.b16 %v280
      %v430 = vunpack.c.l.b16 %v281
      %v431 = vunpack.c.h.b16 %v281
      %v432 = vunpack.c.l.b16 %v282
      %v433 = vunpack.c.h.b16 %v282
      %v434 = vunpack.c.l.b16 %v283
      %v435 = vunpack.c.h.b16 %v283
      %v436 = vpack.c.b16 %v428, %v420
      %v437 = vpack.c.b16 %v429, %v421
      %v438 = vpack.c.b16 %v430, %v422
      %v439 = vpack.c.b16 %v431, %v423
      %v440 = vpack.c.b16 %v432, %v424
      %v441 = vpack.c.b16 %v433, %v425
      %v442 = vpack.c.b16 %v434, %v426
      %v443 = vpack.c.b16 %v435, %v427
      %v580 = vunpack.c.l.b16 %v284
      %v581 = vunpack.c.l.b16 %v285
      %v582 = vunpack.c.l.b16 %v286
      %v583 = vunpack.c.l.b16 %v287
      %v584 = vunpack.c.l.b16 %v288
      %v585 = vunpack.c.l.b16 %v289
      %v586 = vunpack.c.l.b16 %v290
      %v587 = vunpack.c.l.b16 %v291
      %v588 = vunpack.c.l.b16 %v292
      %v589 = vunpack.c.l.b16 %v293
      %v590 = vunpack.c.l.b16 %v294
      %v591 = vunpack.c.l.b16 %v295
      %v592 = vunpack.c.l.b16 %v296
      %v593 = vunpack.c.l.b16 %v297
      %v594 = vunpack.c.l.b16 %v298
      %v595 = vunpack.c.l.b16 %v299
      %v596 = vunpack.c.l.b16 %v300
      %v597 = vunpack.c.l.b16 %v301
      %v598 = vunpack.c.l.b16 %v302
      %v599 = vunpack.c.l.b16 %v303
      %v600 = vunpack.c.l.b16 %v304
      %v601 = vunpack.c.l.b16 %v305
      %v602 = vunpack.c.l.b16 %v306
      %v603 = vunpack.c.l.b16 %v307
      %v604 = vunpack.c.l.b16 %v308
      %v605 = vunpack.c.l.b16 %v309
      %v606 = vunpack.c.l.b16 %v310
      %v607 = vunpack.c.l.b16 %v311
      %v608 = vunpack.c.l.b16 %v312
      %v609 = vunpack.c.l.b16 %v313
      %v610 = vunpack.c.l.b16 %v314
      %v611 = vunpack.c.l.b16 %v315
      %v612 = vunpack.c.l.b16 %v316
      %v613 = vunpack.c.l.b16 %v317
      %v614 = vunpack.c.l.b16 %v318
      %v615 = vunpack.c.l.b16 %v319
      %v616 = vunpack.c.l.b16 %v320
      %v617 = vunpack.c.l.b16 %v321
      %v618 = vunpack.c.l.b16 %v322
      %v619 = vunpack.c.l.b16 %v323
      %v620 = vunpack.c.l.b16 %v324
      %v621 = vunpack.c.l.b16 %v325
      %v622 = vunpack.c.l.b16 %v326
      %v623 = vunpack.c.l.b16 %v327
      %v624 = vunpack.c.l.b16 %v328
      %v625 = vunpack.c.l.b16 %v329
      %v626 = vunpack.c.l.b16 %v330
      %v627 = vunpack.c.l.b16 %v331
      %v628 = vunpack.c.l.b16 %v332
      %v629 = vunpack.c.l.b16 %v333
      %v630 = vunpack.c.l.b16 %v334
      %v631 = vunpack.c.l.b16 %v335
      %v632 = vunpack.c.l.b16 %v336
      %v633 = vunpack.c.l.b16 %v337
      %v634 = vunpack.c.l.b16 %v338
      %v635 = vunpack.c.l.b16 %v339
      %v636 = vunpack.c.l.b16 %v340
      %v637 = vunpack.c.l.b16 %v341
      %v638 = vunpack.c.l.b16 %v342
      %v639 = vunpack.c.l.b16 %v343
      %v640 = vunpack.c.l.b16 %v344
      %v641 = vunpack.c.l.b16 %v345
      %v642 = vunpack.c.l.b16 %v346
      %v643 = vunpack.c.l.b16 %v347
      %v644 = vunpack.c.l.b16 %v348
      %v645 = vunpack.c.l.b16 %v349
      %v646 = vunpack.c.l.b16 %v350
      %v647 = vunpack.c.l.b16 %v351
      %v648 = vunpack.c.l.b16 %v352
      %v649 = vunpack.c.l.b16 %v353
      %v650 = vunpack.c.l.b16 %v354
      %v651 = vunpack.c.l.b16 %v355
      %v652 = vunpack.c.l.b16 %v356
      %v653 = vunpack.c.l.b16 %v357
      %v654 = vunpack.c.l.b16 %v358
      %v655 = vunpack.c.l.b16 %v359
      %v656 = vunpack.c.l.b16 %v360
      %v657 = vunpack.c.l.b16 %v361
      %v658 = vunpack.c.l.b16 %v362
      %v659 = vunpack.c.l.b16 %v363
      %v660 = vunpack.c.l.b16 %v364
      %v661 = vunpack.c.l.b16 %v365
      %v662 = vunpack.c.l.b16 %v366
      %v663 = vunpack.c.l.b16 %v367
      %v664 = vunpack.c.l.b16 %v368
      %v665 = vunpack.c.l.b16 %v369
      %v666 = vunpack.c.l.b16 %v370
      %v667 = vunpack.c.l.b16 %v371
      %v668 = vunpack.c.l.b16 %v372
      %v669 = vunpack.c.l.b16 %v373
      %v670 = vunpack.c.l.b16 %v374
      %v671 = vunpack.c.l.b16 %v375
      %v672 = vunpack.c.l.b16 %v376
      %v673 = vunpack.c.l.b16 %v377
      %v674 = vunpack.c.l.b16 %v378
      %v675 = vunpack.c.l.b16 %v379
      %v676 = vunpack.c.l.b16 %v380
      %v677 = vunpack.c.l.b16 %v381
      %v678 = vunpack.c.l.b16 %v382
      %v679 = vunpack.c.l.b16 %v383
      %v680 = vunpack.c.l.b16 %v384
      %v681 = vunpack.c.l.b16 %v385
      %v682 = vunpack.c.l.b16 %v386
      %v683 = vunpack.c.l.b16 %v387
      %v684 = vunpack.c.l.b16 %v388
      %v685 = vunpack.c.l.b16 %v389
      %v686 = vunpack.c.l.b16 %v390
      %v687 = vunpack.c.l.b16 %v391
      %v688 = vunpack.c.l.b16 %v392
      %v689 = vunpack.c.l.b16 %v393
      %v690 = vunpack.c.l.b16 %v394
      %v691 = vunpack.c.l.b16 %v395
      %v692 = vunpack.c.l.b16 %v396
      %v693 = vunpack.c.l.b16 %v397
      %v694 = vunpack.c.l.b16 %v398
      %v695 = vunpack.c.l.b16 %v399
      %v696 = vunpack.c.l.b16 %v400
      %v697 = vunpack.c.l.b16 %v401
      %v698 = vunpack.c.l.b16 %v402
      %v699 = vunpack.c.l.b16 %v403
      %v700 = vunpack.c.l.b16 %v404
      %v701 = vunpack.c.l.b16 %v405
      %v702 = vunpack.c.l.b16 %v406
      %v703 = vunpack.c.l.b16 %v407
      %v704 = vunpack.c.l.b16 %v408
      %v705 = vunpack.c.l.b16 %v409
      %v706 = vunpack.c.l.b16 %v410
      %v707 = vunpack.c.l.b16 %v411
      %v708 = vpack.c.b16 %v581, %v580
      %v709 = vpack.c.b16 %v583, %v582
      %v710 = vpack.c.b16 %v585, %v584
      %v711 = vpack.c.b16 %v587, %v586
      %v712 = vpack.c.b16 %v589, %v588
      %v713 = vpack.c.b16 %v591, %v590
      %v714 = vpack.c.b16 %v593, %v592
      %v715 = vpack.c.b16 %v595, %v594
      %v716 = vpack.c.b16 %v597, %v596
      %v717 = vpack.c.b16 %v599, %v598
      %v718 = vpack.c.b16 %v601, %v600
      %v719 = vpack.c.b16 %v603, %v602
      %v720 = vpack.c.b16 %v605, %v604
      %v721 = vpack.c.b16 %v607, %v606
      %v722 = vpack.c.b16 %v609, %v608
      %v723 = vpack.c.b16 %v611, %v610
      %v724 = vpack.c.b16 %v613, %v612
      %v725 = vpack.c.b16 %v615, %v614
      %v726 = vpack.c.b16 %v617, %v616
      %v727 = vpack.c.b16 %v619, %v618
      %v728 = vpack.c.b16 %v621, %v620
      %v729 = vpack.c.b16 %v623, %v622
      %v730 = vpack.c.b16 %v625, %v624
      %v731 = vpack.c.b16 %v627, %v626
      %v732 = vpack.c.b16 %v629, %v628
      %v733 = vpack.c.b16 %v631, %v630
      %v734 = vpack.c.b16 %v633, %v632
      %v735 = vpack.c.b16 %v635, %v634
      %v736 = vpack.c.b16 %v637, %v636
      %v737 = vpack.c.b16 %v639, %v638
      %v738 = vpack.c.b16 %v641, %v640
      %v739 = vpack.c.b16 %v643, %v642
      %v740 = vpack.c.b16 %v645, %v644
      %v741 = vpack.c.b16 %v647, %v646
      %v742 = vpack.c.b16 %v649, %v648
      %v743 = vpack.c.b16 %v651, %v650
      %v744 = vpack.c.b16 %v653, %v652
      %v745 = vpack.c.b16 %v655, %v654
      %v746 = vpack.c.b16 %v657, %v656
      %v747 = vpack.c.b16 %v659, %v658
      %v748 = vpack.c.b16 %v661, %v660
      %v749 = vpack.c.b16 %v663, %v662
      %v750 = vpack.c.b16 %v665, %v664
      %v751 = vpack.c.b16 %v667, %v666
      %v752 = vpack.c.b16 %v669, %v668
      %v753 = vpack.c.b16 %v671, %v670
      %v754 = vpack.c.b16 %v673, %v672
      %v755 = vpack.c.b16 %v675, %v674
      %v756 = vpack.c.b16 %v677, %v676
      %v757 = vpack.c.b16 %v679, %v678
      %v758 = vpack.c.b16 %v681, %v680
      %v759 = vpack.c.b16 %v683, %v682
      %v760 = vpack.c.b16 %v685, %v684
      %v761 = vpack.c.b16 %v687, %v686
      %v762 = vpack.c.b16 %v689, %v688
      %v763 = vpack.c.b16 %v691, %v690
      %v764 = vpack.c.b16 %v693, %v692
      %v765 = vpack.c.b16 %v695, %v694
      %v766 = vpack.c.b16 %v697, %v696
      %v767 = vpack.c.b16 %v699, %v698
      %v768 = vpack.c.b16 %v701, %v700
      %v769 = vpack.c.b16 %v703, %v702
      %v770 = vpack.c.b16 %v705, %v704
      %v771 = vpack.c.b16 %v707, %v706
      %836 = vmatprep.subr.bf16.mxu0 0
      %837 = vmatpush1.bf16.msra.mxu0 %v708
      %838 = vmatprep.subr.bf16.mxu0 0
      %839 = vmatpush1.bf16.msra.mxu0 %v709
      %840 = vmatprep.subr.bf16.mxu0 0
      %841 = vmatpush1.bf16.msra.mxu0 %v710
      %842 = vmatprep.subr.bf16.mxu0 0
      %843 = vmatpush1.bf16.msra.mxu0 %v711
      %844 = vmatprep.subr.bf16.mxu0 0
      %845 = vmatpush1.bf16.msra.mxu0 %v712
      %846 = vmatprep.subr.bf16.mxu0 0
      %847 = vmatpush1.bf16.msra.mxu0 %v713
      %848 = vmatprep.subr.bf16.mxu0 0
      %849 = vmatpush1.bf16.msra.mxu0 %v714
      %850 = vmatprep.subr.bf16.mxu0 0
      %851 = vmatpush1.bf16.msra.mxu0 %v715
      %852 = vmatprep.subr.bf16.mxu0 0
      %853 = vmatpush1.bf16.msra.mxu0 %v716
      %854 = vmatprep.subr.bf16.mxu0 0
      %855 = vmatpush1.bf16.msra.mxu0 %v717
      %856 = vmatprep.subr.bf16.mxu0 0
      %857 = vmatpush1.bf16.msra.mxu0 %v718
      %858 = vmatprep.subr.bf16.mxu0 0
      %859 = vmatpush1.bf16.msra.mxu0 %v719
      %860 = vmatprep.subr.bf16.mxu0 0
      %861 = vmatpush1.bf16.msra.mxu0 %v720
      %862 = vmatprep.subr.bf16.mxu0 0
      %863 = vmatpush1.bf16.msra.mxu0 %v721
      %864 = vmatprep.subr.bf16.mxu0 0
      %865 = vmatpush1.bf16.msra.mxu0 %v722
      %866 = vmatprep.subr.bf16.mxu0 0
      %867 = vmatpush1.bf16.msra.mxu0 %v723
      %868 = vmatprep.mubr.bf16.mxu0 %v437
      %869 = vmatmul.mubr.bf16.gmra.mrb[0].mxu0 %v436
      %v870 = vpop.f32.mrb[0].mxu0
      %v871 = vadd.f32 0.0, %v870
      %v872 = vpop.f32.mrb[0].mxu0
      %v873 = vpop.f32.mrb[0].mxu0
      %v874 = vadd.f32 0.0, %v873
      %v875 = vpop.f32.mrb[0].mxu0
      %876 = vdwg.mxu0
      %877 = vmatprep.subr.bf16.mxu0 0
      %878 = vmatpush1.bf16.msra.mxu0 %v724
      %879 = vmatprep.subr.bf16.mxu0 0
      %880 = vmatpush1.bf16.msra.mxu0 %v725
      %881 = vmatprep.subr.bf16.mxu0 0
      %882 = vmatpush1.bf16.msra.mxu0 %v726
      %883 = vmatprep.subr.bf16.mxu0 0
      %884 = vmatpush1.bf16.msra.mxu0 %v727
      %885 = vmatprep.subr.bf16.mxu0 0
      %886 = vmatpush1.bf16.msra.mxu0 %v728
      %887 = vmatprep.subr.bf16.mxu0 0
      %888 = vmatpush1.bf16.msra.mxu0 %v729
      %889 = vmatprep.subr.bf16.mxu0 0
      %890 = vmatpush1.bf16.msra.mxu0 %v730
      %891 = vmatprep.subr.bf16.mxu0 0
      %892 = vmatpush1.bf16.msra.mxu0 %v731
      %893 = vmatprep.subr.bf16.mxu0 0
      %894 = vmatpush1.bf16.msra.mxu0 %v732
      %895 = vmatprep.subr.bf16.mxu0 0
      %896 = vmatpush1.bf16.msra.mxu0 %v733
      %897 = vmatprep.subr.bf16.mxu0 0
      %898 = vmatpush1.bf16.msra.mxu0 %v734
      %899 = vmatprep.subr.bf16.mxu0 0
      %900 = vmatpush1.bf16.msra.mxu0 %v735
      %901 = vmatprep.subr.bf16.mxu0 0
      %902 = vmatpush1.bf16.msra.mxu0 %v736
      %903 = vmatprep.subr.bf16.mxu0 0
      %904 = vmatpush1.bf16.msra.mxu0 %v737
      %905 = vmatprep.subr.bf16.mxu0 0
      %906 = vmatpush1.bf16.msra.mxu0 %v738
      %907 = vmatprep.subr.bf16.mxu0 0
      %908 = vmatpush1.bf16.msra.mxu0 %v739
      %909 = vmatprep.mubr.bf16.mxu0 %v439
      %910 = vmatmul.mubr.bf16.gmra.mrb[0].mxu0 %v438
      %v911 = vpop.f32.mrb[0].mxu0
      %v912 = vadd.f32 %v871, %v911
      %v913 = vpop.f32.mrb[0].mxu0
      %v914 = vpop.f32.mrb[0].mxu0
      %v915 = vadd.f32 %v874, %v914
      %v916 = vpop.f32.mrb[0].mxu0
      %917 = vdwg.mxu0
      %918 = vmatprep.subr.bf16.mxu0 0
      %919 = vmatpush1.bf16.msra.mxu0 %v740
      %920 = vmatprep.subr.bf16.mxu0 0
      %921 = vmatpush1.bf16.msra.mxu0 %v741
      %922 = vmatprep.subr.bf16.mxu0 0
      %923 = vmatpush1.bf16.msra.mxu0 %v742
      %924 = vmatprep.subr.bf16.mxu0 0
      %925 = vmatpush1.bf16.msra.mxu0 %v743
      %926 = vmatprep.subr.bf16.mxu0 0
      %927 = vmatpush1.bf16.msra.mxu0 %v744
      %928 = vmatprep.subr.bf16.mxu0 0
      %929 = vmatpush1.bf16.msra.mxu0 %v745
      %930 = vmatprep.subr.bf16.mxu0 0
      %931 = vmatpush1.bf16.msra.mxu0 %v746
      %932 = vmatprep.subr.bf16.mxu0 0
      %933 = vmatpush1.bf16.msra.mxu0 %v747
      %934 = vmatprep.subr.bf16.mxu0 0
      %935 = vmatpush1.bf16.msra.mxu0 %v748
      %936 = vmatprep.subr.bf16.mxu0 0
      %937 = vmatpush1.bf16.msra.mxu0 %v749
      %938 = vmatprep.subr.bf16.mxu0 0
      %939 = vmatpush1.bf16.msra.mxu0 %v750
      %940 = vmatprep.subr.bf16.mxu0 0
      %941 = vmatpush1.bf16.msra.mxu0 %v751
      %942 = vmatprep.subr.bf16.mxu0 0
      %943 = vmatpush1.bf16.msra.mxu0 %v752
      %944 = vmatprep.subr.bf16.mxu0 0
      %945 = vmatpush1.bf16.msra.mxu0 %v753
      %946 = vmatprep.subr.bf16.mxu0 0
      %947 = vmatpush1.bf16.msra.mxu0 %v754
      %948 = vmatprep.subr.bf16.mxu0 0
      %949 = vmatpush1.bf16.msra.mxu0 %v755
      %950 = vmatprep.mubr.bf16.mxu0 %v441
      %951 = vmatmul.mubr.bf16.gmra.mrb[0].mxu0 %v440
      %v952 = vpop.f32.mrb[0].mxu0
      %v953 = vadd.f32 %v912, %v952
      %v954 = vpop.f32.mrb[0].mxu0
      %v955 = vpop.f32.mrb[0].mxu0
      %v956 = vadd.f32 %v915, %v955
      %v957 = vpop.f32.mrb[0].mxu0
      %958 = vdwg.mxu0
      %959 = vmatprep.subr.bf16.mxu0 0
      %960 = vmatpush1.bf16.msra.mxu0 %v756
      %961 = vmatprep.subr.bf16.mxu0 0
      %962 = vmatpush1.bf16.msra.mxu0 %v757
      %963 = vmatprep.subr.bf16.mxu0 0
      %964 = vmatpush1.bf16.msra.mxu0 %v758
      %965 = vmatprep.subr.bf16.mxu0 0
      %966 = vmatpush1.bf16.msra.mxu0 %v759
      %967 = vmatprep.subr.bf16.mxu0 0
      %968 = vmatpush1.bf16.msra.mxu0 %v760
      %969 = vmatprep.subr.bf16.mxu0 0
      %970 = vmatpush1.bf16.msra.mxu0 %v761
      %971 = vmatprep.subr.bf16.mxu0 0
      %972 = vmatpush1.bf16.msra.mxu0 %v762
      %973 = vmatprep.subr.bf16.mxu0 0
      %974 = vmatpush1.bf16.msra.mxu0 %v763
      %975 = vmatprep.subr.bf16.mxu0 0
      %976 = vmatpush1.bf16.msra.mxu0 %v764
      %977 = vmatprep.subr.bf16.mxu0 0
      %978 = vmatpush1.bf16.msra.mxu0 %v765
      %979 = vmatprep.subr.bf16.mxu0 0
      %980 = vmatpush1.bf16.msra.mxu0 %v766
      %981 = vmatprep.subr.bf16.mxu0 0
      %982 = vmatpush1.bf16.msra.mxu0 %v767
      %983 = vmatprep.subr.bf16.mxu0 0
      %984 = vmatpush1.bf16.msra.mxu0 %v768
      %985 = vmatprep.subr.bf16.mxu0 0
      %986 = vmatpush1.bf16.msra.mxu0 %v769
      %987 = vmatprep.subr.bf16.mxu0 0
      %988 = vmatpush1.bf16.msra.mxu0 %v770
      %989 = vmatprep.subr.bf16.mxu0 0
      %990 = vmatpush1.bf16.msra.mxu0 %v771
      %991 = vmatprep.mubr.bf16.mxu0 %v443
      %992 = vmatmul.mubr.bf16.gmra.mrb[0].mxu0 %v442
      %v993 = vpop.f32.mrb[0].mxu0
      %v994 = vadd.f32 %v953, %v993
      %v995 = vpop.f32.mrb[0].mxu0
      %v996 = vpop.f32.mrb[0].mxu0
      %v997 = vadd.f32 %v956, %v996
      %v998 = vpop.f32.mrb[0].mxu0
      %999 = vdwg.mxu0
      %v1000 = vadd.f32 %v274, %v994
      %v1001 = vadd.f32 %v275, %v997
      %1002 = vst [vmem:[#allocation2] sm:$0xff] %v1000
      %1003 = vst [vmem:[#allocation2 + $0x8] sm:$0xff] %v1001
      // Predicated region
      $region37: #{discriminator_forward.15} parent=31 // pred_check
        %p1004 = pneg %p268
      $region38: #{discriminator_forward.15} parent=31 // pred_check_branch
        %1006 = sbr.rel (%p1004) target = $region40
      $region39: #{discriminator_forward.15} parent=31 // pred_region
        %v1007 = vld [vmem:[#allocation2] sm:$0xff]
        %v1008 = vld [vmem:[#allocation2 + $0x8] sm:$0xff]
        %v1009 = vld [vmem:[%s257] sm:$0x1]
        %v1011 = vlaneseq
        %v1012 = vshrl.u32 %v1011, 7
        %v1013 = vsub.s32 0, %v1012
        %v1014 = vrot.slane %v1009, %v1013
        %v1016 = vadd.f32 %v1007, %v1014
        %v1017 = vadd.f32 %v1008, %v1014
        %vm1018 = vcmp.gt.f32.partialorder %v1016, 0.0
        %vm1019 = vcmp.gt.f32.partialorder %v1017, 0.0
        %v1020 = vmul.f32 %v1016, 0.01
        %v1021 = vmul.f32 %v1017, 0.01
        %v1022 = vsel %vm1018, %v1016, %v1020
        %v1023 = vsel %vm1019, %v1017, %v1021
        %v1024 = vpack.c.bf16 %v1023, %v1022
        %v1026 = vunpack.c.l.b16 %v1024
        %v1027 = vunpack.c.h.b16 %v1024
        %v1028 = vpack.c.b16 %v1026, %v1026
        %v1029 = vpack.c.b16 %v1027, %v1027
        %1032 = vst [vmem:[%s265] sm:$0xf] %v1028
        %1033 = vst [vmem:[%s265 + $0x4] sm:$0xf] %v1029
      $region40: #{discriminator_forward.15} parent=31 // pred_fallthru
        _
      %s1034 = smul.u32 2, %s19
      %p1035 = scmp.lt.s32.totalorder %s1034, 3
      %s1036 = scalar_select %p1035, %s1034, 3
      %p1037 = scmp.lt.s32.totalorder %s20, 0
      %s1038 = scalar_select %p1037, %s20, 0
      %s1039 = sadd.s32 %s1038, %s1036
      %s1040 = smul.addr %s1039, 4
      %s1041 = scalar_lea.vmem %s3, %s1040
      // Predicated region
      $region41: #{discriminator_forward.15} parent=31 // pred_check
        %p1042 = pneg %p135
      $region42: #{discriminator_forward.15} parent=31 // pred_check_branch
        %1044 = sbr.rel (%p1042) target = $region44
      $region43: #{discriminator_forward.15} parent=31 // pred_region
        %s1045 = smul.u32 2, %s19
      $region44: #{discriminator_forward.15} parent=31 // pred_fallthru
        _
    $region32: #{discriminator_forward.15} parent=5 // pred_fallthru
      _
    %p1046 = scmp.le.s32.totalorder 2, %s9
    // Predicated region
    $region45: #{discriminator_forward.15} parent=5 // pred_check
      %p1047 = pneg %p1046
    $region46: #{discriminator_forward.15} parent=5 // pred_check_branch
      %1049 = sbr.rel (%p1047) target = $region48
    $region47: #{discriminator_forward.15} parent=5 // pred_region
      %s1050 = ssub.s32 %s9, 2
      // Predicated region
      $region49: #{discriminator_forward.15} parent=47 // pred_check
        %p1051 = pneg %p141
      $region50: #{discriminator_forward.15} parent=47 // pred_check_branch
        %1053 = sbr.rel (%p1051) target = $region52
      $region51: #{discriminator_forward.15} parent=47 // pred_region
        %s1054 = smul.u32 2, %s22
        %p1055 = scmp.lt.s32.totalorder %s1054, 3
        %s1056 = scalar_select %p1055, %s1054, 3
        %p1057 = scmp.lt.s32.totalorder %s23, 0
        %s1058 = scalar_select %p1057, %s23, 0
        %s1059 = sadd.s32 %s1058, %s1056
        %s1060 = smul.addr %s1059, 4
        %s1061 = scalar_lea.vmem %s3, %s1060
      $region52: #{discriminator_forward.15} parent=47 // pred_fallthru
        _
    $region48: #{discriminator_forward.15} parent=5 // pred_fallthru
      _
  $region6: #{discriminator_forward.15} parent=0 // loop_footer
    %s13 = sadd.s32 1, %s9
  $region7: #{discriminator_forward.15} parent=0 // loop_footer_branch
    %8 = sbr.rel target = $region3
  $region8: #{discriminator_forward.15} parent=0 // loop_exit
    _

</llo_original>
